<compile_context>
chip_gen: v6e
topology: v6e:2x2x1
jax: 0.10.0
libtpu: 0.0.40
codegen_flags: <defaults>
</compile_context>

<pallas_src>
import functools
import math

import jax
import jax.numpy as jnp
from jax.experimental import pallas as pl
from jax.experimental.pallas import tpu as pltpu


def _round_up(x, m):
    return ((x + m - 1) // m) * m


# ---------------------------------------------------------------------------
# Fused dense-layer kernel: relu -> 1x1 conv -> relu -> 3x3 conv (pad=1)
# ---------------------------------------------------------------------------
def _dense_layer_kernel(feat_ref, w1_ref, w2_ref, mask_ref, out_ref, midp_ref,
                        *, H, W):
    # feat_ref : (1, H*Wp, Cread) bf16  channels-last features, width-padded
    #            (the 2 pad columns per row hold zeros).
    # w1_ref   : (Cread, Cmid)    bf16  1x1 weight, zero rows beyond Cin.
    # w2_ref   : (9, Cmid, G)     bf16  3x3 tap weights, tap t = kh*3 + kw.
    # mask_ref : (H*Wp, 1)        f32   1.0 on real columns, 0.0 on pad columns.
    # out_ref  : (1, H*Wp, G)     bf16  new features (pad columns written as 0).
    # midp_ref : (LP, Cmid)       bf16  VMEM scratch holding the zero-padded mid.
    Wp = W + 2
    HWp = H * Wp

    # fused relu1 + conv1x1 (pad columns are all-zero -> mid stays zero there).
    x = jnp.maximum(feat_ref[0], 0)                                   # bf16 relu
    mid = jnp.dot(x, w1_ref[...], preferred_element_type=jnp.float32)  # (HWp, Cmid)
    mid = jnp.maximum(mid, 0.0).astype(jnp.bfloat16)                   # fused relu2

    # Build the fully zero-padded bottleneck image in VMEM: the scratch's flat
    # layout is (Hp, Wp) row-major; one contiguous copy at offset Wp+1 places
    # real pixel (h, w) at padded position (h+1, w+1), and the zero pad columns
    # of `mid` land exactly on the horizontal border positions.
    midp_ref[...] = jnp.zeros_like(midp_ref)
    midp_ref[pl.ds(Wp + 1, HWp), :] = mid

    # conv2 (3x3, stride 1, padding 1): 9 statically shifted windows of the
    # flat padded buffer, accumulated in f32 on the MXU.
    acc = jnp.zeros((HWp, out_ref.shape[-1]), jnp.float32)
    for kh in range(3):
        for kw in range(3):
            off = kh * Wp + kw
            acc = acc + jnp.dot(midp_ref[pl.ds(off, HWp), :],
                                w2_ref[kh * 3 + kw],
                                preferred_element_type=jnp.float32)

    # Zero the 2 pad columns per row so they keep acting as zero padding for
    # the layers that consume this output.
    out_ref[0] = (acc * mask_ref[...]).astype(out_ref.dtype)


def _fused_dense_layer(buf, w1p, w2f, mask, *, H, W):
    """buf: (B, H*Wp, C_alloc) bf16; w1p: (Cread, Cmid); w2f: (9, Cmid, G);
    mask: (H*Wp, 1) f32.  Returns (B, H*Wp, G) bf16 new features."""
    B, HWp, _ = buf.shape
    cread, cmid = w1p.shape
    g = w2f.shape[-1]
    Wp = W + 2
    lp = _round_up((H + 2) * Wp + 2, 8)   # padded-image rows + tap overhang

    return pl.pallas_call(
        functools.partial(_dense_layer_kernel, H=H, W=W),
        out_shape=jax.ShapeDtypeStruct((B, HWp, g), jnp.bfloat16),
        grid_spec=pltpu.PrefetchScalarGridSpec(
            num_scalar_prefetch=0,
            grid=(B,),
            in_specs=[
                pl.BlockSpec((1, HWp, cread), lambda b: (b, 0, 0)),  # features
                pl.BlockSpec((cread, cmid), lambda b: (0, 0)),       # w1 (resident)
                pl.BlockSpec((9, cmid, g), lambda b: (0, 0, 0)),     # w2 (resident)
                pl.BlockSpec((HWp, 1), lambda b: (0, 0)),            # column mask
            ],
            out_specs=pl.BlockSpec((1, HWp, g), lambda b: (b, 0, 0)),
            scratch_shapes=[pltpu.VMEM((lp, cmid), jnp.bfloat16)],
        ),
        compiler_params=pltpu.CompilerParams(
            dimension_semantics=("parallel",)),
    )(buf, w1p, w2f, mask)


# ---------------------------------------------------------------------------
# Weight preparation (torch OIHW -> kernel layouts), bf16 MXU operands
# ---------------------------------------------------------------------------
def _prep_w1(w1, cread):
    """w1: (Cmid, Cin, 1, 1) -> (cread, Cmid) bf16, zero rows for channels >= Cin."""
    cin = w1.shape[1]
    wt = jnp.transpose(w1[:, :, 0, 0], (1, 0))          # (Cin, Cmid)
    wt = jnp.pad(wt, ((0, cread - cin), (0, 0)))
    return wt.astype(jnp.bfloat16)


def _prep_w2(w2):
    """w2: (G, Cmid, 3, 3) -> (9, Cmid, G) bf16, tap-major (t = kh*3 + kw)."""
    g, cmid = w2.shape[0], w2.shape[1]
    return jnp.transpose(w2, (2, 3, 1, 0)).reshape(9, cmid, g).astype(jnp.bfloat16)


# ---------------------------------------------------------------------------
# _DenseBlock forward
# ---------------------------------------------------------------------------
def dense_block_forward(x_nchw, layer_weights, *, drop_rate=0.0):
    """x_nchw: (B, C0, H, W).  layer_weights: list of (w1 (Cmid,Cin,1,1),
    w2 (G,Cmid,3,3)) in torch OIHW layout.  Returns (B, C0 + L*G, H, W)."""
    B, C0, H, W = x_nchw.shape
    Wp = W + 2
    HWp = H * Wp
    L = len(layer_weights)
    G = layer_weights[0][1].shape[0]
    c_alloc = C0 + L * G

    # Pre-allocated channels-last, width-padded bf16 feature buffer.  Channel
    # order matches torch.cat: [init (C0), new_1 (G), ..., new_L (G)].
    x_cl = jnp.transpose(x_nchw, (0, 2, 3, 1))                       # (B, H, W, C0)
    x_cl = jnp.pad(x_cl, ((0, 0), (0, 0), (0, 2), (0, 0)))           # zero pad cols
    buf = jnp.zeros((B, HWp, c_alloc), jnp.bfloat16)
    buf = jax.lax.dynamic_update_slice(
        buf, x_cl.reshape(B, HWp, C0).astype(jnp.bfloat16), (0, 0, 0))

    # 1.0 on the W real columns of each row, 0.0 on the 2 pad columns.
    col_mask = jnp.tile((jnp.arange(Wp) < W).astype(jnp.float32), H).reshape(HWp, 1)

    for i, (w1, w2) in enumerate(layer_weights):
        cin = C0 + i * G
        # Read the full (small) channel extent, or a 128-aligned prefix of it.
        cread = c_alloc if c_alloc <= 128 else min(c_alloc, _round_up(cin, 128))
        w1p = _prep_w1(w1, cread)
        w2f = _prep_w2(w2)
        new = _fused_dense_layer(buf, w1p, w2f, col_mask, H=H, W=W)  # (B, HWp, G)
        # TODO(synk): drop_rate > 0 training dropout not implemented (eval semantics).
        buf = jax.lax.dynamic_update_slice(buf, new, (0, 0, cin))

    # Final assembly: keep the init features exactly (f32 passthrough), strip
    # the pad columns from the new features once, and return NCHW.
    new_all = buf[:, :, C0:].astype(jnp.float32).reshape(B, H, Wp, L * G)[:, :, :W, :]
    new_all = jnp.transpose(new_all, (0, 3, 1, 2))                   # (B, L*G, H, W)
    return jnp.concatenate([x_nchw, new_all], axis=1)


# ---------------------------------------------------------------------------
# Pure-JAX reference mirroring the torch module exactly
# ---------------------------------------------------------------------------
def _reference_dense_block(x, layer_weights):
    feats = [x]
    for (w1, w2) in layer_weights:
        cat = jnp.concatenate(feats, axis=1)
        b = jax.lax.conv_general_dilated(
            jax.nn.relu(cat), w1, (1, 1), 'VALID',
            dimension_numbers=('NCHW', 'OIHW', 'NCHW'))
        nf = jax.lax.conv_general_dilated(
            jax.nn.relu(b), w2, (1, 1), ((1, 1), (1, 1)),
            dimension_numbers=('NCHW', 'OIHW', 'NCHW'))
        feats.append(nf)
    return jnp.concatenate(feats, axis=1)


if __name__ == "__main__":
    B, C0, H, W = 2, 4, 16, 16
    NUM_LAYERS, GROWTH, BN_SIZE = 3, 8, 4

    key = jax.random.PRNGKey(0)
    key, kx = jax.random.split(key)
    x = jax.random.normal(kx, (B, C0, H, W), dtype=jnp.float32)

    layer_weights = []
    cin = C0
    cmid = BN_SIZE * GROWTH
    for _ in range(NUM_LAYERS):
        key, k1, k2 = jax.random.split(key, 3)
        w1 = jax.random.normal(k1, (cmid, cin, 1, 1), jnp.float32) / math.sqrt(cin)
        w2 = jax.random.normal(k2, (GROWTH, cmid, 3, 3), jnp.float32) / math.sqrt(9 * cmid)
        layer_weights.append((w1, w2))
        cin += GROWTH

    fwd = jax.jit(dense_block_forward)
    out = jax.block_until_ready(fwd(x, layer_weights))

    ref = _reference_dense_block(x, layer_weights)

    assert out.shape == (B, C0 + NUM_LAYERS * GROWTH, H, W), out.shape
    max_err = float(jnp.max(jnp.abs(out - ref)))
    # bf16 MXU operands + bf16 feature storage => slightly looser tolerance than f32.
    assert jnp.allclose(out, ref, rtol=4e-2, atol=4e-2), f"max abs err = {max_err}"

    print("KERNEL_OK")
</pallas_src>

<mosaic_0001>
module attributes {stable_mosaic.version = 11 : i64} {
  func.func @_dense_layer_kernel(%arg0: i32, %arg1: memref<1x288x28xbf16, #tpu.memory_space<vmem>>, %arg2: memref<28x32xbf16, #tpu.memory_space<vmem>>, %arg3: memref<9x32x8xbf16, #tpu.memory_space<vmem>>, %arg4: memref<288x1xf32, #tpu.memory_space<vmem>>, %arg5: memref<1x288x8xbf16, #tpu.memory_space<vmem>>, %arg6: memref<328x32xbf16, #tpu.memory_space<vmem>>) attributes {dimension_semantics = [#tpu.dimension_semantics<parallel>], iteration_bounds = array<i64: 2>, scalar_prefetch = 0 : i64, scratch_operands = 1 : i64, tpu.core_type = #tpu.core_type<tc>, window_params = [{transform_indices = @transform_0, window_bounds = array<i64: 1, 288, 28>}, {pipeline_mode = #tpu.pipeline_mode<synchronous>, transform_indices = @transform_1, window_bounds = array<i64: 28, 32>}, {pipeline_mode = #tpu.pipeline_mode<synchronous>, transform_indices = @transform_2, window_bounds = array<i64: 9, 32, 8>}, {pipeline_mode = #tpu.pipeline_mode<synchronous>, transform_indices = @transform_3, window_bounds = array<i64: 288, 1>}, {transform_indices = @transform_4, window_bounds = array<i64: 1, 288, 8>}]} {
    %c0 = arith.constant 0 : index
    %c0_0 = arith.constant 0 : index
    %c0_1 = arith.constant 0 : index
    %0 = vector.load %arg1[%c0, %c0_0, %c0_1] : memref<1x288x28xbf16, #tpu.memory_space<vmem>>, vector<1x288x28xbf16>
    %1 = vector.shape_cast %0 : vector<1x288x28xbf16> to vector<288x28xbf16>
    %cst = arith.constant 0.000000e+00 : bf16
    %2 = vector.broadcast %cst : bf16 to vector<288x28xbf16>
    %3 = arith.maximumf %1, %2 : vector<288x28xbf16>
    %c0_2 = arith.constant 0 : index
    %c0_3 = arith.constant 0 : index
    %4 = vector.load %arg2[%c0_2, %c0_3] : memref<28x32xbf16, #tpu.memory_space<vmem>>, vector<28x32xbf16>
    %cst_4 = arith.constant dense<0.000000e+00> : vector<288x32xf32>
    %5 = tpu.matmul %3, %4, %cst_4 {dimension_numbers = #tpu.dot_dimension_numbers<[1], [0], [0], [1], [0, 0, 1, 1], [], []>} : vector<288x28xbf16>, vector<28x32xbf16>, vector<288x32xf32> -> vector<288x32xf32>
    %cst_5 = arith.constant 0.000000e+00 : f32
    %6 = vector.broadcast %cst_5 : f32 to vector<288x32xf32>
    %7 = arith.maximumf %5, %6 : vector<288x32xf32>
    %8 = arith.truncf %7 : vector<288x32xf32> to vector<288x32xbf16>
    %cst_6 = arith.constant 0.000000e+00 : bf16
    %9 = vector.broadcast %cst_6 : bf16 to vector<328x32xbf16>
    %c0_7 = arith.constant 0 : index
    %c0_8 = arith.constant 0 : index
    %10 = vector.load %arg6[%c0_7, %c0_8] : memref<328x32xbf16, #tpu.memory_space<vmem>>, vector<328x32xbf16>
    tpu.vector_store %arg6[%c0_7, %c0_8], %9 {strides = array<i32>} : memref<328x32xbf16, #tpu.memory_space<vmem>>, vector<328x32xbf16>,
    %c19 = arith.constant 19 : index
    %c0_9 = arith.constant 0 : index
    %11 = vector.load %arg6[%c19, %c0_9] : memref<328x32xbf16, #tpu.memory_space<vmem>>, vector<288x32xbf16>
    tpu.vector_store %arg6[%c19, %c0_9], %8 {strides = array<i32>} : memref<328x32xbf16, #tpu.memory_space<vmem>>, vector<288x32xbf16>,
    %cst_10 = arith.constant 0.000000e+00 : f32
    %12 = vector.broadcast %cst_10 : f32 to vector<288x8xf32>
    %c0_11 = arith.constant 0 : index
    %c0_12 = arith.constant 0 : index
    %13 = vector.load %arg6[%c0_11, %c0_12] : memref<328x32xbf16, #tpu.memory_space<vmem>>, vector<288x32xbf16>
    %c0_13 = arith.constant 0 : index
    %c0_14 = arith.constant 0 : index
    %c0_15 = arith.constant 0 : index
    %14 = vector.load %arg3[%c0_13, %c0_14, %c0_15] : memref<9x32x8xbf16, #tpu.memory_space<vmem>>, vector<1x32x8xbf16>
    %15 = vector.shape_cast %14 : vector<1x32x8xbf16> to vector<32x8xbf16>
    %cst_16 = arith.constant dense<0.000000e+00> : vector<288x8xf32>
    %16 = tpu.matmul %13, %15, %cst_16 {dimension_numbers = #tpu.dot_dimension_numbers<[1], [0], [0], [1], [0, 0, 1, 1], [], []>} : vector<288x32xbf16>, vector<32x8xbf16>, vector<288x8xf32> -> vector<288x8xf32>
    %17 = arith.addf %12, %16 : vector<288x8xf32>
    %c1 = arith.constant 1 : index
    %c0_17 = arith.constant 0 : index
    %18 = vector.load %arg6[%c1, %c0_17] : memref<328x32xbf16, #tpu.memory_space<vmem>>, vector<288x32xbf16>
    %c1_18 = arith.constant 1 : index
    %c0_19 = arith.constant 0 : index
    %c0_20 = arith.constant 0 : index
    %19 = vector.load %arg3[%c1_18, %c0_19, %c0_20] : memref<9x32x8xbf16, #tpu.memory_space<vmem>>, vector<1x32x8xbf16>
    %20 = vector.shape_cast %19 : vector<1x32x8xbf16> to vector<32x8xbf16>
    %cst_21 = arith.constant dense<0.000000e+00> : vector<288x8xf32>
    %21 = tpu.matmul %18, %20, %cst_21 {dimension_numbers = #tpu.dot_dimension_numbers<[1], [0], [0], [1], [0, 0, 1, 1], [], []>} : vector<288x32xbf16>, vector<32x8xbf16>, vector<288x8xf32> -> vector<288x8xf32>
    %22 = arith.addf %17, %21 : vector<288x8xf32>
    %c2 = arith.constant 2 : index
    %c0_22 = arith.constant 0 : index
    %23 = vector.load %arg6[%c2, %c0_22] : memref<328x32xbf16, #tpu.memory_space<vmem>>, vector<288x32xbf16>
    %c2_23 = arith.constant 2 : index
    %c0_24 = arith.constant 0 : index
    %c0_25 = arith.constant 0 : index
    %24 = vector.load %arg3[%c2_23, %c0_24, %c0_25] : memref<9x32x8xbf16, #tpu.memory_space<vmem>>, vector<1x32x8xbf16>
    %25 = vector.shape_cast %24 : vector<1x32x8xbf16> to vector<32x8xbf16>
    %cst_26 = arith.constant dense<0.000000e+00> : vector<288x8xf32>
    %26 = tpu.matmul %23, %25, %cst_26 {dimension_numbers = #tpu.dot_dimension_numbers<[1], [0], [0], [1], [0, 0, 1, 1], [], []>} : vector<288x32xbf16>, vector<32x8xbf16>, vector<288x8xf32> -> vector<288x8xf32>
    %27 = arith.addf %22, %26 : vector<288x8xf32>
    %c18 = arith.constant 18 : index
    %c0_27 = arith.constant 0 : index
    %28 = vector.load %arg6[%c18, %c0_27] : memref<328x32xbf16, #tpu.memory_space<vmem>>, vector<288x32xbf16>
    %c3 = arith.constant 3 : index
    %c0_28 = arith.constant 0 : index
    %c0_29 = arith.constant 0 : index
    %29 = vector.load %arg3[%c3, %c0_28, %c0_29] : memref<9x32x8xbf16, #tpu.memory_space<vmem>>, vector<1x32x8xbf16>
    %30 = vector.shape_cast %29 : vector<1x32x8xbf16> to vector<32x8xbf16>
    %cst_30 = arith.constant dense<0.000000e+00> : vector<288x8xf32>
    %31 = tpu.matmul %28, %30, %cst_30 {dimension_numbers = #tpu.dot_dimension_numbers<[1], [0], [0], [1], [0, 0, 1, 1], [], []>} : vector<288x32xbf16>, vector<32x8xbf16>, vector<288x8xf32> -> vector<288x8xf32>
    %32 = arith.addf %27, %31 : vector<288x8xf32>
    %c19_31 = arith.constant 19 : index
    %c0_32 = arith.constant 0 : index
    %33 = vector.load %arg6[%c19_31, %c0_32] : memref<328x32xbf16, #tpu.memory_space<vmem>>, vector<288x32xbf16>
    %c4 = arith.constant 4 : index
    %c0_33 = arith.constant 0 : index
    %c0_34 = arith.constant 0 : index
    %34 = vector.load %arg3[%c4, %c0_33, %c0_34] : memref<9x32x8xbf16, #tpu.memory_space<vmem>>, vector<1x32x8xbf16>
    %35 = vector.shape_cast %34 : vector<1x32x8xbf16> to vector<32x8xbf16>
    %cst_35 = arith.constant dense<0.000000e+00> : vector<288x8xf32>
    %36 = tpu.matmul %33, %35, %cst_35 {dimension_numbers = #tpu.dot_dimension_numbers<[1], [0], [0], [1], [0, 0, 1, 1], [], []>} : vector<288x32xbf16>, vector<32x8xbf16>, vector<288x8xf32> -> vector<288x8xf32>
    %37 = arith.addf %32, %36 : vector<288x8xf32>
    %c20 = arith.constant 20 : index
    %c0_36 = arith.constant 0 : index
    %38 = vector.load %arg6[%c20, %c0_36] : memref<328x32xbf16, #tpu.memory_space<vmem>>, vector<288x32xbf16>
    %c5 = arith.constant 5 : index
    %c0_37 = arith.constant 0 : index
    %c0_38 = arith.constant 0 : index
    %39 = vector.load %arg3[%c5, %c0_37, %c0_38] : memref<9x32x8xbf16, #tpu.memory_space<vmem>>, vector<1x32x8xbf16>
    %40 = vector.shape_cast %39 : vector<1x32x8xbf16> to vector<32x8xbf16>
    %cst_39 = arith.constant dense<0.000000e+00> : vector<288x8xf32>
    %41 = tpu.matmul %38, %40, %cst_39 {dimension_numbers = #tpu.dot_dimension_numbers<[1], [0], [0], [1], [0, 0, 1, 1], [], []>} : vector<288x32xbf16>, vector<32x8xbf16>, vector<288x8xf32> -> vector<288x8xf32>
    %42 = arith.addf %37, %41 : vector<288x8xf32>
    %c36 = arith.constant 36 : index
    %c0_40 = arith.constant 0 : index
    %43 = vector.load %arg6[%c36, %c0_40] : memref<328x32xbf16, #tpu.memory_space<vmem>>, vector<288x32xbf16>
    %c6 = arith.constant 6 : index
    %c0_41 = arith.constant 0 : index
    %c0_42 = arith.constant 0 : index
    %44 = vector.load %arg3[%c6, %c0_41, %c0_42] : memref<9x32x8xbf16, #tpu.memory_space<vmem>>, vector<1x32x8xbf16>
    %45 = vector.shape_cast %44 : vector<1x32x8xbf16> to vector<32x8xbf16>
    %cst_43 = arith.constant dense<0.000000e+00> : vector<288x8xf32>
    %46 = tpu.matmul %43, %45, %cst_43 {dimension_numbers = #tpu.dot_dimension_numbers<[1], [0], [0], [1], [0, 0, 1, 1], [], []>} : vector<288x32xbf16>, vector<32x8xbf16>, vector<288x8xf32> -> vector<288x8xf32>
    %47 = arith.addf %42, %46 : vector<288x8xf32>
    %c37 = arith.constant 37 : index
    %c0_44 = arith.constant 0 : index
    %48 = vector.load %arg6[%c37, %c0_44] : memref<328x32xbf16, #tpu.memory_space<vmem>>, vector<288x32xbf16>
    %c7 = arith.constant 7 : index
    %c0_45 = arith.constant 0 : index
    %c0_46 = arith.constant 0 : index
    %49 = vector.load %arg3[%c7, %c0_45, %c0_46] : memref<9x32x8xbf16, #tpu.memory_space<vmem>>, vector<1x32x8xbf16>
    %50 = vector.shape_cast %49 : vector<1x32x8xbf16> to vector<32x8xbf16>
    %cst_47 = arith.constant dense<0.000000e+00> : vector<288x8xf32>
    %51 = tpu.matmul %48, %50, %cst_47 {dimension_numbers = #tpu.dot_dimension_numbers<[1], [0], [0], [1], [0, 0, 1, 1], [], []>} : vector<288x32xbf16>, vector<32x8xbf16>, vector<288x8xf32> -> vector<288x8xf32>
    %52 = arith.addf %47, %51 : vector<288x8xf32>
    %c38 = arith.constant 38 : index
    %c0_48 = arith.constant 0 : index
    %53 = vector.load %arg6[%c38, %c0_48] : memref<328x32xbf16, #tpu.memory_space<vmem>>, vector<288x32xbf16>
    %c8 = arith.constant 8 : index
    %c0_49 = arith.constant 0 : index
    %c0_50 = arith.constant 0 : index
    %54 = vector.load %arg3[%c8, %c0_49, %c0_50] : memref<9x32x8xbf16, #tpu.memory_space<vmem>>, vector<1x32x8xbf16>
    %55 = vector.shape_cast %54 : vector<1x32x8xbf16> to vector<32x8xbf16>
    %cst_51 = arith.constant dense<0.000000e+00> : vector<288x8xf32>
    %56 = tpu.matmul %53, %55, %cst_51 {dimension_numbers = #tpu.dot_dimension_numbers<[1], [0], [0], [1], [0, 0, 1, 1], [], []>} : vector<288x32xbf16>, vector<32x8xbf16>, vector<288x8xf32> -> vector<288x8xf32>
    %57 = arith.addf %52, %56 : vector<288x8xf32>
    %c0_52 = arith.constant 0 : index
    %c0_53 = arith.constant 0 : index
    %58 = vector.load %arg4[%c0_52, %c0_53] : memref<288x1xf32, #tpu.memory_space<vmem>>, vector<288x1xf32>
    %59 = vector.broadcast %58 : vector<288x1xf32> to vector<288x8xf32>
    %60 = arith.mulf %57, %59 : vector<288x8xf32>
    %61 = arith.truncf %60 : vector<288x8xf32> to vector<288x8xbf16>
    %c0_54 = arith.constant 0 : index
    %c0_55 = arith.constant 0 : index
    %c0_56 = arith.constant 0 : index
    %62 = vector.load %arg5[%c0_54, %c0_55, %c0_56] : memref<1x288x8xbf16, #tpu.memory_space<vmem>>, vector<1x288x8xbf16>
    %63 = vector.shape_cast %62 : vector<1x288x8xbf16> to vector<288x8xbf16>
    %64 = vector.shape_cast %61 : vector<288x8xbf16> to vector<1x288x8xbf16>
    tpu.vector_store %arg5[%c0_54, %c0_55, %c0_56], %64 {strides = array<i32>} : memref<1x288x8xbf16, #tpu.memory_space<vmem>>, vector<1x288x8xbf16>,
    return
  }
  func.func @transform_0(%arg0: i32) -> (i32, i32, i32) {
    %c0_i32 = arith.constant 0 : i32
    %c0_i32_0 = arith.constant 0 : i32
    %c0_i32_1 = arith.constant 0 : i32
    return %arg0, %c0_i32, %c0_i32_0 : i32, i32, i32
  }
  func.func @transform_1(%arg0: i32) -> (i32, i32) {
    %c0_i32 = arith.constant 0 : i32
    %c0_i32_0 = arith.constant 0 : i32
    %c0_i32_1 = arith.constant 0 : i32
    return %c0_i32, %c0_i32_0 : i32, i32
  }
  func.func @transform_2(%arg0: i32) -> (i32, i32, i32) {
    %c0_i32 = arith.constant 0 : i32
    %c0_i32_0 = arith.constant 0 : i32
    %c0_i32_1 = arith.constant 0 : i32
    %c0_i32_2 = arith.constant 0 : i32
    return %c0_i32, %c0_i32_0, %c0_i32_1 : i32, i32, i32
  }
  func.func @transform_3(%arg0: i32) -> (i32, i32) {
    %c0_i32 = arith.constant 0 : i32
    %c0_i32_0 = arith.constant 0 : i32
    %c0_i32_1 = arith.constant 0 : i32
    return %c0_i32, %c0_i32_0 : i32, i32
  }
  func.func @transform_4(%arg0: i32) -> (i32, i32, i32) {
    %c0_i32 = arith.constant 0 : i32
    %c0_i32_0 = arith.constant 0 : i32
    %c0_i32_1 = arith.constant 0 : i32
    return %arg0, %c0_i32, %c0_i32_0 : i32, i32, i32
  }
}

</mosaic_0001>

<llo_original>
// kernel: tile.8
$region0: #{tile.8}
  #allocation0 [shape = 's32[1]{0}', space=sflag, size = 0x4, scoped, tag = 'scoped memory for tile.8']
  %s0 = inlined_call_operand.vmem [shape: f32[18], index: 0, kind: input, shape index: {}]
  %s1 = inlined_call_operand.vmem [shape: f32[16,18], index: 1, kind: output, shape index: {}]
  // Predicated region
  $region2: #{tile.8} parent=0 // pred_check
    _
  $region3: #{tile.8} parent=0 // pred_check_branch
    %3 = sbr.rel (0) target = $region5
  $region4: #{tile.8} parent=0 // pred_region
    _
  $region5: #{tile.8} parent=0 // pred_fallthru
    _
  %v4 = vld [vmem:[%s0] ss:$0 sm:$0xff]
  %5 = vst [vmem:[%s1] sm:$0xff] %v4
  %s6 = scalar_lea.vmem %s1, 8
  %7 = vst [vmem:[%s6] sm:$0xff] %v4

// kernel: tile.0
$region0: #{tile.0}
  %s0 = inlined_call_operand.vmem [shape: f32[16,18], index: 0, kind: input, shape index: {}]
  %s1 = inlined_call_operand.vmem [shape: f32[288,1], index: 1, kind: output, shape index: {}]
  %v2 = vld [vmem:[%s0] sm:$0xff]
  %vm3 = vcmask 7168
  %4 = vst.msk [vmem:[%s1] ss:$18 sm:$0xff] %vm3, %v2
  %s5 = scalar_lea.vmem %s0, 8
  %v6 = vld [vmem:[%s5] sm:$0xff]
  %vm7 = vcmask 7168
  %s8 = scalar_lea.vmem %s1, 144
  %9 = vst.msk [vmem:[%s8] ss:$18 sm:$0xff] %vm7, %v6
  %v10 = vld.sshfl [vmem:[%s0] sm:$0xff pattern:$0xf6d4b290]
  %11 = vrot.lane.b32.xlu0 %v10, 127
  %v12 = vpop.permute.xlu0 %11
  %vm13 = vcmask 7168
  %s14 = scalar_lea.vmem %s1, 1
  %15 = vst.msk [vmem:[%s14] ss:$162 sm:$0x3] %vm13, %v12
  %s16 = scalar_lea.vmem %s1, 4294967009
  %17 = vst.msk [vmem:[%s16] ss:$162 sm:$0xc] %vm13, %v12
  %s18 = scalar_lea.vmem %s1, 4294966721
  %19 = vst.msk [vmem:[%s18] ss:$162 sm:$0x30] %vm13, %v12
  %s20 = scalar_lea.vmem %s1, 4294966433
  %21 = vst.msk [vmem:[%s20] ss:$162 sm:$0xc0] %vm13, %v12
  %s22 = scalar_lea.vmem %s0, 1
  %v23 = vld.sshfl [vmem:[%s22] sm:$0xff pattern:$0x6d4b2907]
  %24 = vrot.lane.b32.xlu0 %v23, 127
  %v25 = vpop.permute.xlu0 %24
  %vm26 = vcmask 7168
  %s27 = scalar_lea.vmem %s1, 145
  %28 = vst.msk [vmem:[%s27] ss:$-126 sm:$0x3] %vm26, %v25
  %s29 = scalar_lea.vmem %s1, 433
  %30 = vst.msk [vmem:[%s29] ss:$-126 sm:$0xc] %vm26, %v25
  %s31 = scalar_lea.vmem %s1, 721
  %32 = vst.msk [vmem:[%s31] ss:$-126 sm:$0x30] %vm26, %v25
  %s33 = scalar_lea.vmem %s1, 1009
  %34 = vst.msk [vmem:[%s33] ss:$-126 sm:$0xc0] %vm26, %v25
  %v35 = vld.sshfl [vmem:[%s0] sm:$0xff pattern:$0x6d4b2907]
  %36 = vrot.lane.b32.xlu0 %v35, 126
  %v37 = vpop.permute.xlu0 %36
  %vm38 = vcmask 7168
  %s39 = scalar_lea.vmem %s1, 128
  %40 = vst.msk [vmem:[%s39] ss:$-126 sm:$0x3] %vm38, %v37
  %s41 = scalar_lea.vmem %s1, 416
  %42 = vst.msk [vmem:[%s41] ss:$-126 sm:$0xc] %vm38, %v37
  %s43 = scalar_lea.vmem %s1, 704
  %44 = vst.msk [vmem:[%s43] ss:$-126 sm:$0x30] %vm38, %v37
  %s45 = scalar_lea.vmem %s1, 992
  %46 = vst.msk [vmem:[%s45] ss:$-126 sm:$0xc0] %vm38, %v37
  %s47 = scalar_lea.vmem %s0, 1
  %v48 = vld.sshfl [vmem:[%s47] sm:$0xff pattern:$0xd4b2907e]
  %49 = vrot.lane.b32.xlu0 %v48, 126
  %v50 = vpop.permute.xlu0 %49
  %vm51 = vcmask 7168
  %s52 = scalar_lea.vmem %s1, 272
  %53 = vst.msk [vmem:[%s52] ss:$-126 sm:$0x7] %vm51, %v50
  %s54 = scalar_lea.vmem %s1, 560
  %55 = vst.msk [vmem:[%s54] ss:$-126 sm:$0x18] %vm51, %v50
  %s56 = scalar_lea.vmem %s1, 848
  %57 = vst.msk [vmem:[%s56] ss:$-126 sm:$0x60] %vm51, %v50
  %s58 = scalar_lea.vmem %s1, 247
  %59 = vst.msk [vmem:[%s58] sm:$0x80] %vm51, %v50
  %v60 = vld.sshfl [vmem:[%s0] sm:$0xff pattern:$0x6d4b2907]
  %61 = vrot.lane.b32.xlu0 %v60, 125
  %v62 = vpop.permute.xlu0 %61
  %vm63 = vcmask 7168
  %s64 = scalar_lea.vmem %s1, 129
  %65 = vst.msk [vmem:[%s64] ss:$-126 sm:$0x3] %vm63, %v62
  %s66 = scalar_lea.vmem %s1, 417
  %67 = vst.msk [vmem:[%s66] ss:$-126 sm:$0xc] %vm63, %v62
  %s68 = scalar_lea.vmem %s1, 705
  %69 = vst.msk [vmem:[%s68] ss:$-126 sm:$0x30] %vm63, %v62
  %s70 = scalar_lea.vmem %s1, 993
  %71 = vst.msk [vmem:[%s70] ss:$-126 sm:$0xc0] %vm63, %v62
  %s72 = scalar_lea.vmem %s0, 1
  %v73 = vld.sshfl [vmem:[%s72] sm:$0xff pattern:$0xd4b2907e]
  %74 = vrot.lane.b32.xlu0 %v73, 125
  %v75 = vpop.permute.xlu0 %74
  %vm76 = vcmask 7168
  %s77 = scalar_lea.vmem %s1, 273
  %78 = vst.msk [vmem:[%s77] ss:$-126 sm:$0x7] %vm76, %v75
  %s79 = scalar_lea.vmem %s1, 561
  %80 = vst.msk [vmem:[%s79] ss:$-126 sm:$0x18] %vm76, %v75
  %s81 = scalar_lea.vmem %s1, 849
  %82 = vst.msk [vmem:[%s81] ss:$-126 sm:$0x60] %vm76, %v75
  %s83 = scalar_lea.vmem %s1, 248
  %84 = vst.msk [vmem:[%s83] sm:$0x80] %vm76, %v75
  %v85 = vld.sshfl [vmem:[%s0] sm:$0xff pattern:$0xd4b2907e]
  %86 = vrot.lane.b32.xlu0 %v85, 124
  %v87 = vpop.permute.xlu0 %86
  %vm88 = vcmask 7168
  %s89 = scalar_lea.vmem %s1, 256
  %90 = vst.msk [vmem:[%s89] ss:$-126 sm:$0x7] %vm88, %v87
  %s91 = scalar_lea.vmem %s1, 544
  %92 = vst.msk [vmem:[%s91] ss:$-126 sm:$0x18] %vm88, %v87
  %s93 = scalar_lea.vmem %s1, 832
  %94 = vst.msk [vmem:[%s93] ss:$-126 sm:$0x60] %vm88, %v87
  %s95 = scalar_lea.vmem %s1, 231
  %96 = vst.msk [vmem:[%s95] sm:$0x80] %vm88, %v87
  %s97 = scalar_lea.vmem %s0, 1
  %v98 = vld.sshfl [vmem:[%s97] sm:$0xff pattern:$0x4b2907e5]
  %99 = vrot.lane.b32.xlu0 %v98, 124
  %v100 = vpop.permute.xlu0 %99
  %vm101 = vcmask 7168
  %s102 = scalar_lea.vmem %s1, 112
  %103 = vst.msk [vmem:[%s102] ss:$162 sm:$0x3] %vm101, %v100
  %s104 = scalar_lea.vmem %s1, 400
  %105 = vst.msk [vmem:[%s104] ss:$-126 sm:$0xc] %vm101, %v100
  %s106 = scalar_lea.vmem %s1, 688
  %107 = vst.msk [vmem:[%s106] ss:$-126 sm:$0x30] %vm101, %v100
  %s108 = scalar_lea.vmem %s1, 976
  %109 = vst.msk [vmem:[%s108] ss:$-126 sm:$0xc0] %vm101, %v100
  %v110 = vld.sshfl [vmem:[%s0] sm:$0xff pattern:$0xd4b2907e]
  %111 = vrot.lane.b32.xlu0 %v110, 123
  %v112 = vpop.permute.xlu0 %111
  %vm113 = vcmask 7168
  %s114 = scalar_lea.vmem %s1, 257
  %115 = vst.msk [vmem:[%s114] ss:$-126 sm:$0x7] %vm113, %v112
  %s116 = scalar_lea.vmem %s1, 545
  %117 = vst.msk [vmem:[%s116] ss:$-126 sm:$0x18] %vm113, %v112
  %s118 = scalar_lea.vmem %s1, 833
  %119 = vst.msk [vmem:[%s118] ss:$-126 sm:$0x60] %vm113, %v112
  %s120 = scalar_lea.vmem %s1, 232
  %121 = vst.msk [vmem:[%s120] sm:$0x80] %vm113, %v112
  %s122 = scalar_lea.vmem %s0, 1
  %v123 = vld.sshfl [vmem:[%s122] sm:$0xff pattern:$0x4b2907e5]
  %124 = vrot.lane.b32.xlu0 %v123, 123
  %v125 = vpop.permute.xlu0 %124
  %vm126 = vcmask 7168
  %s127 = scalar_lea.vmem %s1, 113
  %128 = vst.msk [vmem:[%s127] ss:$162 sm:$0x3] %vm126, %v125
  %s129 = scalar_lea.vmem %s1, 401
  %130 = vst.msk [vmem:[%s129] ss:$-126 sm:$0xc] %vm126, %v125
  %s131 = scalar_lea.vmem %s1, 689
  %132 = vst.msk [vmem:[%s131] ss:$-126 sm:$0x30] %vm126, %v125
  %s133 = scalar_lea.vmem %s1, 977
  %134 = vst.msk [vmem:[%s133] ss:$-126 sm:$0xc0] %vm126, %v125
  %v135 = vld.sshfl [vmem:[%s0] sm:$0xff pattern:$0x4b2907e5]
  %136 = vrot.lane.b32.xlu0 %v135, 122
  %v137 = vpop.permute.xlu0 %136
  %vm138 = vcmask 7168
  %s139 = scalar_lea.vmem %s1, 96
  %140 = vst.msk [vmem:[%s139] ss:$162 sm:$0x3] %vm138, %v137
  %s141 = scalar_lea.vmem %s1, 384
  %142 = vst.msk [vmem:[%s141] ss:$-126 sm:$0xc] %vm138, %v137
  %s143 = scalar_lea.vmem %s1, 672
  %144 = vst.msk [vmem:[%s143] ss:$-126 sm:$0x30] %vm138, %v137
  %s145 = scalar_lea.vmem %s1, 960
  %146 = vst.msk [vmem:[%s145] ss:$-126 sm:$0xc0] %vm138, %v137
  %s147 = scalar_lea.vmem %s0, 1
  %v148 = vld.sshfl [vmem:[%s147] sm:$0xff pattern:$0xb2907e5c]
  %149 = vrot.lane.b32.xlu0 %v148, 122
  %v150 = vpop.permute.xlu0 %149
  %vm151 = vcmask 7168
  %s152 = scalar_lea.vmem %s1, 240
  %153 = vst.msk [vmem:[%s152] ss:$-126 sm:$0x3] %vm151, %v150
  %s154 = scalar_lea.vmem %s1, 528
  %155 = vst.msk [vmem:[%s154] ss:$-126 sm:$0x1c] %vm151, %v150
  %s156 = scalar_lea.vmem %s1, 816
  %157 = vst.msk [vmem:[%s156] ss:$-126 sm:$0x60] %vm151, %v150
  %s158 = scalar_lea.vmem %s1, 215
  %159 = vst.msk [vmem:[%s158] sm:$0x80] %vm151, %v150
  %v160 = vld.sshfl [vmem:[%s0] sm:$0xff pattern:$0x4b2907e5]
  %161 = vrot.lane.b32.xlu0 %v160, 121
  %v162 = vpop.permute.xlu0 %161
  %vm163 = vcmask 7168
  %s164 = scalar_lea.vmem %s1, 97
  %165 = vst.msk [vmem:[%s164] ss:$162 sm:$0x3] %vm163, %v162
  %s166 = scalar_lea.vmem %s1, 385
  %167 = vst.msk [vmem:[%s166] ss:$-126 sm:$0xc] %vm163, %v162
  %s168 = scalar_lea.vmem %s1, 673
  %169 = vst.msk [vmem:[%s168] ss:$-126 sm:$0x30] %vm163, %v162
  %s170 = scalar_lea.vmem %s1, 961
  %171 = vst.msk [vmem:[%s170] ss:$-126 sm:$0xc0] %vm163, %v162
  %s172 = scalar_lea.vmem %s0, 1
  %v173 = vld.sshfl [vmem:[%s172] sm:$0xff pattern:$0xb2907e5c]
  %174 = vrot.lane.b32.xlu0 %v173, 121
  %v175 = vpop.permute.xlu0 %174
  %vm176 = vcmask 7168
  %s177 = scalar_lea.vmem %s1, 241
  %178 = vst.msk [vmem:[%s177] ss:$-126 sm:$0x3] %vm176, %v175
  %s179 = scalar_lea.vmem %s1, 529
  %180 = vst.msk [vmem:[%s179] ss:$-126 sm:$0x1c] %vm176, %v175
  %s181 = scalar_lea.vmem %s1, 817
  %182 = vst.msk [vmem:[%s181] ss:$-126 sm:$0x60] %vm176, %v175
  %s183 = scalar_lea.vmem %s1, 216
  %184 = vst.msk [vmem:[%s183] sm:$0x80] %vm176, %v175
  %v185 = vld.sshfl [vmem:[%s0] sm:$0xff pattern:$0xb2907e5c]
  %186 = vrot.lane.b32.xlu0 %v185, 120
  %v187 = vpop.permute.xlu0 %186
  %vm188 = vcmask 7168
  %s189 = scalar_lea.vmem %s1, 224
  %190 = vst.msk [vmem:[%s189] ss:$-126 sm:$0x3] %vm188, %v187
  %s191 = scalar_lea.vmem %s1, 512
  %192 = vst.msk [vmem:[%s191] ss:$-126 sm:$0x1c] %vm188, %v187
  %s193 = scalar_lea.vmem %s1, 800
  %194 = vst.msk [vmem:[%s193] ss:$-126 sm:$0x60] %vm188, %v187
  %s195 = scalar_lea.vmem %s1, 199
  %196 = vst.msk [vmem:[%s195] sm:$0x80] %vm188, %v187
  %s197 = scalar_lea.vmem %s0, 1
  %v198 = vld.sshfl [vmem:[%s197] sm:$0xff pattern:$0x2907e5c3]
  %199 = vrot.lane.b32.xlu0 %v198, 120
  %v200 = vpop.permute.xlu0 %199
  %vm201 = vcmask 7168
  %s202 = scalar_lea.vmem %s1, 80
  %203 = vst.msk [vmem:[%s202] ss:$162 sm:$0x3] %vm201, %v200
  %s204 = scalar_lea.vmem %s1, 4294967088
  %205 = vst.msk [vmem:[%s204] ss:$162 sm:$0xc] %vm201, %v200
  %s206 = scalar_lea.vmem %s1, 656
  %207 = vst.msk [vmem:[%s206] ss:$-126 sm:$0x30] %vm201, %v200
  %s208 = scalar_lea.vmem %s1, 944
  %209 = vst.msk [vmem:[%s208] ss:$-126 sm:$0xc0] %vm201, %v200
  %v210 = vld.sshfl [vmem:[%s0] sm:$0xff pattern:$0xb2907e5c]
  %211 = vrot.lane.b32.xlu0 %v210, 119
  %v212 = vpop.permute.xlu0 %211
  %vm213 = vcmask 7168
  %s214 = scalar_lea.vmem %s1, 225
  %215 = vst.msk [vmem:[%s214] ss:$-126 sm:$0x3] %vm213, %v212
  %s216 = scalar_lea.vmem %s1, 513
  %217 = vst.msk [vmem:[%s216] ss:$-126 sm:$0x1c] %vm213, %v212
  %s218 = scalar_lea.vmem %s1, 801
  %219 = vst.msk [vmem:[%s218] ss:$-126 sm:$0x60] %vm213, %v212
  %s220 = scalar_lea.vmem %s1, 200
  %221 = vst.msk [vmem:[%s220] sm:$0x80] %vm213, %v212
  %s222 = scalar_lea.vmem %s0, 1
  %v223 = vld.sshfl [vmem:[%s222] sm:$0xff pattern:$0x2907e5c3]
  %224 = vrot.lane.b32.xlu0 %v223, 119
  %v225 = vpop.permute.xlu0 %224
  %vm226 = vcmask 7168
  %s227 = scalar_lea.vmem %s1, 81
  %228 = vst.msk [vmem:[%s227] ss:$162 sm:$0x3] %vm226, %v225
  %s229 = scalar_lea.vmem %s1, 4294967089
  %230 = vst.msk [vmem:[%s229] ss:$162 sm:$0xc] %vm226, %v225
  %s231 = scalar_lea.vmem %s1, 657
  %232 = vst.msk [vmem:[%s231] ss:$-126 sm:$0x30] %vm226, %v225
  %s233 = scalar_lea.vmem %s1, 945
  %234 = vst.msk [vmem:[%s233] ss:$-126 sm:$0xc0] %vm226, %v225
  %v235 = vld.sshfl [vmem:[%s0] sm:$0xff pattern:$0x2907e5c3]
  %236 = vrot.lane.b32.xlu0 %v235, 118
  %v237 = vpop.permute.xlu0 %236
  %vm238 = vcmask 7168
  %s239 = scalar_lea.vmem %s1, 64
  %240 = vst.msk [vmem:[%s239] ss:$162 sm:$0x3] %vm238, %v237
  %s241 = scalar_lea.vmem %s1, 4294967072
  %242 = vst.msk [vmem:[%s241] ss:$162 sm:$0xc] %vm238, %v237
  %s243 = scalar_lea.vmem %s1, 640
  %244 = vst.msk [vmem:[%s243] ss:$-126 sm:$0x30] %vm238, %v237
  %s245 = scalar_lea.vmem %s1, 928
  %246 = vst.msk [vmem:[%s245] ss:$-126 sm:$0xc0] %vm238, %v237
  %s247 = scalar_lea.vmem %s0, 1
  %v248 = vld.sshfl [vmem:[%s247] sm:$0xff pattern:$0x907e5c3a]
  %249 = vrot.lane.b32.xlu0 %v248, 118
  %v250 = vpop.permute.xlu0 %249
  %vm251 = vcmask 7168
  %s252 = scalar_lea.vmem %s1, 208
  %253 = vst.msk [vmem:[%s252] ss:$-126 sm:$0x3] %vm251, %v250
  %s254 = scalar_lea.vmem %s1, 496
  %255 = vst.msk [vmem:[%s254] ss:$-126 sm:$0xc] %vm251, %v250
  %s256 = scalar_lea.vmem %s1, 784
  %257 = vst.msk [vmem:[%s256] ss:$-126 sm:$0x70] %vm251, %v250
  %s258 = scalar_lea.vmem %s1, 183
  %259 = vst.msk [vmem:[%s258] sm:$0x80] %vm251, %v250
  %v260 = vld.sshfl [vmem:[%s0] sm:$0xff pattern:$0x2907e5c3]
  %261 = vrot.lane.b32.xlu0 %v260, 117
  %v262 = vpop.permute.xlu0 %261
  %vm263 = vcmask 7168
  %s264 = scalar_lea.vmem %s1, 65
  %265 = vst.msk [vmem:[%s264] ss:$162 sm:$0x3] %vm263, %v262
  %s266 = scalar_lea.vmem %s1, 4294967073
  %267 = vst.msk [vmem:[%s266] ss:$162 sm:$0xc] %vm263, %v262
  %s268 = scalar_lea.vmem %s1, 641
  %269 = vst.msk [vmem:[%s268] ss:$-126 sm:$0x30] %vm263, %v262
  %s270 = scalar_lea.vmem %s1, 929
  %271 = vst.msk [vmem:[%s270] ss:$-126 sm:$0xc0] %vm263, %v262
  %s272 = scalar_lea.vmem %s0, 1
  %v273 = vld.sshfl [vmem:[%s272] sm:$0xff pattern:$0x907e5c3a]
  %274 = vrot.lane.b32.xlu0 %v273, 117
  %v275 = vpop.permute.xlu0 %274
  %vm276 = vcmask 7168
  %s277 = scalar_lea.vmem %s1, 209
  %278 = vst.msk [vmem:[%s277] ss:$-126 sm:$0x3] %vm276, %v275
  %s279 = scalar_lea.vmem %s1, 497
  %280 = vst.msk [vmem:[%s279] ss:$-126 sm:$0xc] %vm276, %v275
  %s281 = scalar_lea.vmem %s1, 785
  %282 = vst.msk [vmem:[%s281] ss:$-126 sm:$0x70] %vm276, %v275
  %s283 = scalar_lea.vmem %s1, 184
  %284 = vst.msk [vmem:[%s283] sm:$0x80] %vm276, %v275
  %v285 = vld.sshfl [vmem:[%s0] sm:$0xff pattern:$0x907e5c3a]
  %286 = vrot.lane.b32.xlu0 %v285, 116
  %v287 = vpop.permute.xlu0 %286
  %vm288 = vcmask 7168
  %s289 = scalar_lea.vmem %s1, 192
  %290 = vst.msk [vmem:[%s289] ss:$-126 sm:$0x3] %vm288, %v287
  %s291 = scalar_lea.vmem %s1, 480
  %292 = vst.msk [vmem:[%s291] ss:$-126 sm:$0xc] %vm288, %v287
  %s293 = scalar_lea.vmem %s1, 768
  %294 = vst.msk [vmem:[%s293] ss:$-126 sm:$0x70] %vm288, %v287
  %s295 = scalar_lea.vmem %s1, 167
  %296 = vst.msk [vmem:[%s295] sm:$0x80] %vm288, %v287
  %s297 = scalar_lea.vmem %s0, 1
  %v298 = vld.sshfl [vmem:[%s297] sm:$0xff pattern:$0x7e5c3a1]
  %299 = vrot.lane.b32.xlu0 %v298, 116
  %v300 = vpop.permute.xlu0 %299
  %vm301 = vcmask 7168
  %s302 = scalar_lea.vmem %s1, 48
  %303 = vst.msk [vmem:[%s302] ss:$162 sm:$0x3] %vm301, %v300
  %s304 = scalar_lea.vmem %s1, 4294967056
  %305 = vst.msk [vmem:[%s304] ss:$162 sm:$0xc] %vm301, %v300
  %s306 = scalar_lea.vmem %s1, 4294966768
  %307 = vst.msk [vmem:[%s306] ss:$162 sm:$0x30] %vm301, %v300
  %s308 = scalar_lea.vmem %s1, 912
  %309 = vst.msk [vmem:[%s308] ss:$-126 sm:$0xc0] %vm301, %v300
  %v310 = vld.sshfl [vmem:[%s0] sm:$0xff pattern:$0x907e5c3a]
  %311 = vrot.lane.b32.xlu0 %v310, 115
  %v312 = vpop.permute.xlu0 %311
  %vm313 = vcmask 7168
  %s314 = scalar_lea.vmem %s1, 193
  %315 = vst.msk [vmem:[%s314] ss:$-126 sm:$0x3] %vm313, %v312
  %s316 = scalar_lea.vmem %s1, 481
  %317 = vst.msk [vmem:[%s316] ss:$-126 sm:$0xc] %vm313, %v312
  %s318 = scalar_lea.vmem %s1, 769
  %319 = vst.msk [vmem:[%s318] ss:$-126 sm:$0x70] %vm313, %v312
  %s320 = scalar_lea.vmem %s1, 168
  %321 = vst.msk [vmem:[%s320] sm:$0x80] %vm313, %v312
  %s322 = scalar_lea.vmem %s0, 1
  %v323 = vld.sshfl [vmem:[%s322] sm:$0xff pattern:$0x7e5c3a1]
  %324 = vrot.lane.b32.xlu0 %v323, 115
  %v325 = vpop.permute.xlu0 %324
  %vm326 = vcmask 7168
  %s327 = scalar_lea.vmem %s1, 49
  %328 = vst.msk [vmem:[%s327] ss:$162 sm:$0x3] %vm326, %v325
  %s329 = scalar_lea.vmem %s1, 4294967057
  %330 = vst.msk [vmem:[%s329] ss:$162 sm:$0xc] %vm326, %v325
  %s331 = scalar_lea.vmem %s1, 4294966769
  %332 = vst.msk [vmem:[%s331] ss:$162 sm:$0x30] %vm326, %v325
  %s333 = scalar_lea.vmem %s1, 913
  %334 = vst.msk [vmem:[%s333] ss:$-126 sm:$0xc0] %vm326, %v325
  %v335 = vld.sshfl [vmem:[%s0] sm:$0xff pattern:$0x7e5c3a1]
  %336 = vrot.lane.b32.xlu0 %v335, 114
  %v337 = vpop.permute.xlu0 %336
  %vm338 = vcmask 7168
  %s339 = scalar_lea.vmem %s1, 32
  %340 = vst.msk [vmem:[%s339] ss:$162 sm:$0x3] %vm338, %v337
  %s341 = scalar_lea.vmem %s1, 4294967040
  %342 = vst.msk [vmem:[%s341] ss:$162 sm:$0xc] %vm338, %v337
  %s343 = scalar_lea.vmem %s1, 4294966752
  %344 = vst.msk [vmem:[%s343] ss:$162 sm:$0x30] %vm338, %v337
  %s345 = scalar_lea.vmem %s1, 896
  %346 = vst.msk [vmem:[%s345] ss:$-126 sm:$0xc0] %vm338, %v337
  %s347 = scalar_lea.vmem %s0, 2
  %v348 = vld.sshfl [vmem:[%s347] sm:$0xff pattern:$0x6d4b2907]
  %349 = vrot.lane.b32.xlu0 %v348, 114
  %v350 = vpop.permute.xlu0 %349
  %vm351 = vcmask 7168
  %s352 = scalar_lea.vmem %s1, 176
  %353 = vst.msk [vmem:[%s352] ss:$-126 sm:$0x3] %vm351, %v350
  %s354 = scalar_lea.vmem %s1, 464
  %355 = vst.msk [vmem:[%s354] ss:$-126 sm:$0xc] %vm351, %v350
  %s356 = scalar_lea.vmem %s1, 752
  %357 = vst.msk [vmem:[%s356] ss:$-126 sm:$0x30] %vm351, %v350
  %s358 = scalar_lea.vmem %s1, 1040
  %359 = vst.msk [vmem:[%s358] ss:$-126 sm:$0xc0] %vm351, %v350
  %v360 = vld.sshfl [vmem:[%s0] sm:$0xff pattern:$0x7e5c3a1]
  %361 = vrot.lane.b32.xlu0 %v360, 113
  %v362 = vpop.permute.xlu0 %361
  %vm363 = vcmask 7168
  %s364 = scalar_lea.vmem %s1, 33
  %365 = vst.msk [vmem:[%s364] ss:$162 sm:$0x3] %vm363, %v362
  %s366 = scalar_lea.vmem %s1, 4294967041
  %367 = vst.msk [vmem:[%s366] ss:$162 sm:$0xc] %vm363, %v362
  %s368 = scalar_lea.vmem %s1, 4294966753
  %369 = vst.msk [vmem:[%s368] ss:$162 sm:$0x30] %vm363, %v362
  %s370 = scalar_lea.vmem %s1, 897
  %371 = vst.msk [vmem:[%s370] ss:$-126 sm:$0xc0] %vm363, %v362
  %s372 = scalar_lea.vmem %s0, 2
  %v373 = vld.sshfl [vmem:[%s372] sm:$0xff pattern:$0x6d4b2907]
  %374 = vrot.lane.b32.xlu0 %v373, 113
  %v375 = vpop.permute.xlu0 %374
  %vm376 = vcmask 7168
  %s377 = scalar_lea.vmem %s1, 177
  %378 = vst.msk [vmem:[%s377] ss:$-126 sm:$0x3] %vm376, %v375
  %s379 = scalar_lea.vmem %s1, 465
  %380 = vst.msk [vmem:[%s379] ss:$-126 sm:$0xc] %vm376, %v375
  %s381 = scalar_lea.vmem %s1, 753
  %382 = vst.msk [vmem:[%s381] ss:$-126 sm:$0x30] %vm376, %v375
  %s383 = scalar_lea.vmem %s1, 1041
  %384 = vst.msk [vmem:[%s383] ss:$-126 sm:$0xc0] %vm376, %v375
  %s385 = scalar_lea.vmem %s0, 1
  %v386 = vld.sshfl [vmem:[%s385] sm:$0xff pattern:$0x6d4b2907]
  %387 = vrot.lane.b32.xlu0 %v386, 112
  %v388 = vpop.permute.xlu0 %387
  %vm389 = vcmask 7168
  %s390 = scalar_lea.vmem %s1, 160
  %391 = vst.msk [vmem:[%s390] ss:$-126 sm:$0x3] %vm389, %v388
  %s392 = scalar_lea.vmem %s1, 448
  %393 = vst.msk [vmem:[%s392] ss:$-126 sm:$0xc] %vm389, %v388
  %s394 = scalar_lea.vmem %s1, 736
  %395 = vst.msk [vmem:[%s394] ss:$-126 sm:$0x30] %vm389, %v388
  %s396 = scalar_lea.vmem %s1, 1024
  %397 = vst.msk [vmem:[%s396] ss:$-126 sm:$0xc0] %vm389, %v388
  %v398 = vld.sshfl [vmem:[%s0] sm:$0xff pattern:$0xf6d4b290]
  %399 = vrot.lane.b32.xlu0 %v398, 112
  %v400 = vpop.permute.xlu0 %399
  %vm401 = vcmask 7168
  %s402 = scalar_lea.vmem %s1, 16
  %403 = vst.msk [vmem:[%s402] ss:$162 sm:$0x3] %vm401, %v400
  %s404 = scalar_lea.vmem %s1, 4294967024
  %405 = vst.msk [vmem:[%s404] ss:$162 sm:$0xc] %vm401, %v400
  %s406 = scalar_lea.vmem %s1, 4294966736
  %407 = vst.msk [vmem:[%s406] ss:$162 sm:$0x30] %vm401, %v400
  %s408 = scalar_lea.vmem %s1, 4294966448
  %409 = vst.msk [vmem:[%s408] ss:$162 sm:$0xc0] %vm401, %v400
  %s410 = scalar_lea.vmem %s0, 1
  %v411 = vld.sshfl [vmem:[%s410] sm:$0xff pattern:$0x6d4b2907]
  %412 = vrot.lane.b32.xlu0 %v411, 111
  %v413 = vpop.permute.xlu0 %412
  %vm414 = vcmask 7168
  %s415 = scalar_lea.vmem %s1, 161
  %416 = vst.msk [vmem:[%s415] ss:$-126 sm:$0x3] %vm414, %v413
  %s417 = scalar_lea.vmem %s1, 449
  %418 = vst.msk [vmem:[%s417] ss:$-126 sm:$0xc] %vm414, %v413
  %s419 = scalar_lea.vmem %s1, 737
  %420 = vst.msk [vmem:[%s419] ss:$-126 sm:$0x30] %vm414, %v413
  %s421 = scalar_lea.vmem %s1, 1025
  %422 = vst.msk [vmem:[%s421] ss:$-126 sm:$0xc0] %vm414, %v413
  %v423 = vld.sshfl [vmem:[%s0] sm:$0xff pattern:$0xf6d4b290]
  %424 = vrot.lane.b32.xlu0 %v423, 111
  %v425 = vpop.permute.xlu0 %424
  %vm426 = vcmask 7168
  %s427 = scalar_lea.vmem %s1, 17
  %428 = vst.msk [vmem:[%s427] ss:$162 sm:$0x3] %vm426, %v425
  %s429 = scalar_lea.vmem %s1, 4294967025
  %430 = vst.msk [vmem:[%s429] ss:$162 sm:$0xc] %vm426, %v425
  %s431 = scalar_lea.vmem %s1, 4294966737
  %432 = vst.msk [vmem:[%s431] ss:$162 sm:$0x30] %vm426, %v425
  %s433 = scalar_lea.vmem %s1, 4294966449
  %434 = vst.msk [vmem:[%s433] ss:$162 sm:$0xc0] %vm426, %v425

// kernel: dense_block_forward.3
$region0: #{dense_block_forward.3}
  #allocation0 [shape = 'u32[]', space=smem, size = 0x4, offset = 0x4, fixed_abs, tag = 'smem constant byte address 0x4 - core index']
  #allocation1 [shape = 'u32[144,128]{1,0:T(1,128)}', space=vmem, size = 0x12000, scoped, tag = 'internal scratch']
  #allocation2 [shape = 'bf16[328,32]{1,0:T(8,128)(2,1)}', space=vmem, size = 0x14800, scoped, tag = 'scratch operand']
  %s0 = inlined_call_operand.vmem [shape: bf16[2,288,28], index: 0, kind: input, shape index: {}]
  %s1 = inlined_call_operand.vmem [shape: bf16[28,32], index: 1, kind: input, shape index: {}]
  %s2 = inlined_call_operand.vmem [shape: bf16[9,32,8], index: 2, kind: input, shape index: {}]
  %s3 = inlined_call_operand.vmem [shape: f32[288,1], index: 3, kind: input, shape index: {}]
  %s4 = inlined_call_operand.vmem [shape: bf16[2,288,8], index: 4, kind: output, shape index: {}]
  %s5 = sld [smem:[#allocation0]]
  $region49: #{dense_block_forward.3} parent=0
    _
  %s7 = ssub.s32 1, %s5
  %s8 = scalar_select 0, %s7, %s5
  loop: start=0, step=1, limit=4
  $region2: #{dense_block_forward.3} parent=0 // loop_pre_header
    _
  $region3: #{dense_block_forward.3} parent=0 // loop_header
    %s10 = sphi 0, %s14
    %p11 = scmp.ge.s32.totalorder %s10, 4
    %s20 = sphi 0, %s22
    %s23 = sphi 0, %s20
    %s24 = sphi 0, %s23
    %s40 = sphi 0, %s24
    %s44 = sphi 0, %s44
    %s46 = sphi 0, %s44
    %s47 = sphi 0, %s46
    %s61 = sphi 0, %s47
    %s65 = sphi 0, %s65
    %s67 = sphi 0, %s65
    %s68 = sphi 0, %s67
    %s82 = sphi 0, %s68
    %s86 = sphi 0, %s86
    %s88 = sphi 0, %s86
    %s89 = sphi 0, %s88
    %s103 = sphi 0, %s89
    %s109 = sphi 0, %s111
    %s112 = sphi 0, %s109
    %s113 = sphi 0, %s112
    %s129 = sphi 0, %s113
  $region4: #{dense_block_forward.3} parent=0 // loop_header_branch
    %13 = sbr.rel (%p11) target = $region8
  $region5: #{dense_block_forward.3} parent=0 // loop_body
    %s15 = ssub.s32 %s10, 1
    %s16 = ssub.s32 %s10, 2
    %s17 = sadd.s32 %s10, 1
    %s18 = ssub.s32 %s10, %s17
    %p19 = scmp.eq.s32.totalorder %s18, 0
    %s21 = sadd.s32 %s20, 1
    %s22 = scalar_select %p19, %s20, %s21
    %p25 = pneg %p19
    %p26 = scmp.eq.s32.totalorder %s10, 1
    %p27 = por %p25, %p26
    %p28 = scmp.ne.s32.totalorder %s20, %s23
    %p29 = scmp.eq.s32.totalorder %s10, 0
    %p30 = por %p28, %p29
    %p31 = scmp.ne.s32.totalorder %s20, %s23
    %p32 = scmp.eq.s32.totalorder %s15, 1
    %p33 = por %p31, %p32
    %p34 = scmp.ne.s32.totalorder %s23, %s24
    %p35 = scmp.eq.s32.totalorder %s15, 0
    %p36 = por %p34, %p35
    %p37 = scmp.ne.s32.totalorder %s23, %s24
    %p38 = scmp.eq.s32.totalorder %s16, 1
    %p39 = por %p37, %p38
    %p41 = scmp.ne.s32.totalorder %s24, %s40
    %p42 = scmp.eq.s32.totalorder %s16, 0
    %p43 = por %p41, %p42
    %s45 = sadd.s32 %s44, 1
    %p48 = scmp.eq.s32.totalorder %s10, 1
    %p49 = scmp.ne.s32.totalorder %s44, %s46
    %p50 = scmp.eq.s32.totalorder %s10, 0
    %p51 = por %p49, %p50
    %p52 = scmp.ne.s32.totalorder %s44, %s46
    %p53 = scmp.eq.s32.totalorder %s15, 1
    %p54 = por %p52, %p53
    %p55 = scmp.ne.s32.totalorder %s46, %s47
    %p56 = scmp.eq.s32.totalorder %s15, 0
    %p57 = por %p55, %p56
    %p58 = scmp.ne.s32.totalorder %s46, %s47
    %p59 = scmp.eq.s32.totalorder %s16, 1
    %p60 = por %p58, %p59
    %p62 = scmp.ne.s32.totalorder %s47, %s61
    %p63 = scmp.eq.s32.totalorder %s16, 0
    %p64 = por %p62, %p63
    %s66 = sadd.s32 %s65, 1
    %p69 = scmp.eq.s32.totalorder %s10, 1
    %p70 = scmp.ne.s32.totalorder %s65, %s67
    %p71 = scmp.eq.s32.totalorder %s10, 0
    %p72 = por %p70, %p71
    %p73 = scmp.ne.s32.totalorder %s65, %s67
    %p74 = scmp.eq.s32.totalorder %s15, 1
    %p75 = por %p73, %p74
    %p76 = scmp.ne.s32.totalorder %s67, %s68
    %p77 = scmp.eq.s32.totalorder %s15, 0
    %p78 = por %p76, %p77
    %p79 = scmp.ne.s32.totalorder %s67, %s68
    %p80 = scmp.eq.s32.totalorder %s16, 1
    %p81 = por %p79, %p80
    %p83 = scmp.ne.s32.totalorder %s68, %s82
    %p84 = scmp.eq.s32.totalorder %s16, 0
    %p85 = por %p83, %p84
    %s87 = sadd.s32 %s86, 1
    %p90 = scmp.eq.s32.totalorder %s10, 1
    %p91 = scmp.ne.s32.totalorder %s86, %s88
    %p92 = scmp.eq.s32.totalorder %s10, 0
    %p93 = por %p91, %p92
    %p94 = scmp.ne.s32.totalorder %s86, %s88
    %p95 = scmp.eq.s32.totalorder %s15, 1
    %p96 = por %p94, %p95
    %p97 = scmp.ne.s32.totalorder %s88, %s89
    %p98 = scmp.eq.s32.totalorder %s15, 0
    %p99 = por %p97, %p98
    %p100 = scmp.ne.s32.totalorder %s88, %s89
    %p101 = scmp.eq.s32.totalorder %s16, 1
    %p102 = por %p100, %p101
    %p104 = scmp.ne.s32.totalorder %s89, %s103
    %p105 = scmp.eq.s32.totalorder %s16, 0
    %p106 = por %p104, %p105
    %s107 = ssub.s32 %s10, %s17
    %p108 = scmp.eq.s32.totalorder %s107, 0
    %s110 = sadd.s32 %s109, 1
    %s111 = scalar_select %p108, %s109, %s110
    %p114 = pneg %p108
    %p115 = scmp.eq.s32.totalorder %s10, 1
    %p116 = por %p114, %p115
    %p117 = scmp.ne.s32.totalorder %s109, %s112
    %p118 = scmp.eq.s32.totalorder %s10, 0
    %p119 = por %p117, %p118
    %p120 = scmp.ne.s32.totalorder %s109, %s112
    %p121 = scmp.eq.s32.totalorder %s15, 1
    %p122 = por %p120, %p121
    %p123 = scmp.ne.s32.totalorder %s112, %s113
    %p124 = scmp.eq.s32.totalorder %s15, 0
    %p125 = por %p123, %p124
    %p126 = scmp.ne.s32.totalorder %s112, %s113
    %p127 = scmp.eq.s32.totalorder %s16, 1
    %p128 = por %p126, %p127
    %p130 = scmp.ne.s32.totalorder %s113, %s129
    %p131 = scmp.eq.s32.totalorder %s16, 0
    %p132 = por %p130, %p131
    %p133 = scmp.le.s32.totalorder 1, %s10
    %p134 = scmp.lt.s32.totalorder %s10, 3
    %p135 = pnand %p133, %p134
    %p136 = pneg %p135
    // Predicated region
    $region9: #{dense_block_forward.3} parent=5 // pred_check
      _
    $region10: #{dense_block_forward.3} parent=5 // pred_check_branch
      %138 = sbr.rel (%p135) target = $region12
    $region11: #{dense_block_forward.3} parent=5 // pred_region
      %s139 = ssub.s32 %s10, 1
      // Predicated region
      $region13: #{dense_block_forward.3} parent=11 // pred_check
        %p140 = pneg %p57
      $region14: #{dense_block_forward.3} parent=11 // pred_check_branch
        %142 = sbr.rel (%p140) target = $region16
      $region15: #{dense_block_forward.3} parent=11 // pred_region
        _
      $region16: #{dense_block_forward.3} parent=11 // pred_fallthru
        _
      // Predicated region
      $region17: #{dense_block_forward.3} parent=11 // pred_check
        %p143 = pneg %p78
      $region18: #{dense_block_forward.3} parent=11 // pred_check_branch
        %145 = sbr.rel (%p143) target = $region20
      $region19: #{dense_block_forward.3} parent=11 // pred_region
        _
      $region20: #{dense_block_forward.3} parent=11 // pred_fallthru
        _
      // Predicated region
      $region21: #{dense_block_forward.3} parent=11 // pred_check
        %p146 = pneg %p99
      $region22: #{dense_block_forward.3} parent=11 // pred_check_branch
        %148 = sbr.rel (%p146) target = $region24
      $region23: #{dense_block_forward.3} parent=11 // pred_region
        _
      $region24: #{dense_block_forward.3} parent=11 // pred_fallthru
        _
    $region12: #{dense_block_forward.3} parent=5 // pred_fallthru
      _
    %p149 = scmp.lt.s32.totalorder %s10, 2
    // Predicated region
    $region25: #{dense_block_forward.3} parent=5 // pred_check
      %p150 = pneg %p149
    $region26: #{dense_block_forward.3} parent=5 // pred_check_branch
      %152 = sbr.rel (%p150) target = $region28
    $region27: #{dense_block_forward.3} parent=5 // pred_region
      // Predicated region
      $region29: #{dense_block_forward.3} parent=27 // pred_check
        %p153 = pneg %p30
      $region30: #{dense_block_forward.3} parent=27 // pred_check_branch
        %155 = sbr.rel (%p153) target = $region32
      $region31: #{dense_block_forward.3} parent=27 // pred_region
        %p156 = scmp.lt.s32.totalorder %s10, 1
        %s157 = scalar_select %p156, %s10, 1
        %s158 = smul.addr %s157, 36
        %s159 = smul.addr %s158, 4
        %s160 = scalar_lea.vmem %s0, %s159
      $region32: #{dense_block_forward.3} parent=27 // pred_fallthru
        _
    $region28: #{dense_block_forward.3} parent=5 // pred_fallthru
      _
    %p161 = scmp.le.s32.totalorder 1, %s10
    %p162 = scmp.lt.s32.totalorder %s10, 3
    %p163 = pnand %p161, %p162
    %p164 = pneg %p163
    // Predicated region
    $region33: #{dense_block_forward.3} parent=5 // pred_check
      _
    $region34: #{dense_block_forward.3} parent=5 // pred_check_branch
      %166 = sbr.rel (%p163) target = $region36
    $region35: #{dense_block_forward.3} parent=5 // pred_region
      %s167 = ssub.s32 %s10, 1
      %p168 = scmp.lt.s32.totalorder %s15, 1
      %s169 = scalar_select %p168, %s15, 1
      %s170 = smul.addr %s169, 36
      %s171 = smul.addr %s170, 4
      %s172 = scalar_lea.vmem %s0, %s171
      %p173 = pneg %p36
      %p174 = pneg %p33
      %p175 = pneg %p57
      %p176 = pneg %p54
      %p177 = pneg %p78
      %p178 = pneg %p75
      %p179 = pneg %p99
      %p180 = pneg %p96
      %p181 = pneg %p125
      %p182 = pneg %p122
      %p183 = scmp.lt.s32.totalorder %s15, 1
      %s184 = scalar_select %p183, %s15, 1
      %s185 = smul.addr %s184, 36
      %s186 = smul.addr %s185, 4
      %s187 = scalar_lea.vmem %s4, %s186
      %p188 = scmp.lt.s32.totalorder %s15, 1
      %s189 = scalar_select %p188, %s15, 1
      %s190 = smul.addr %s189, 36
      %s191 = smul.addr %s190, 4
      %s192 = scalar_lea.vmem %s0, %s191
      %p193 = scmp.lt.s32.totalorder %s15, 1
      %s194 = scalar_select %p193, %s15, 1
      %s195 = smul.addr %s194, 36
      %s196 = smul.addr %s195, 4
      %s197 = scalar_lea.vmem %s4, %s196
      %v199 = vld [vmem:[%s192] sm:$0xf]
      %v200 = vld [vmem:[%s192 + $0x4] sm:$0xf]
      %v201 = vld [vmem:[%s192 + $0x8] sm:$0xf]
      %v202 = vld [vmem:[%s192 + $0xc] sm:$0xf]
      %v203 = vld [vmem:[%s192 + $0x10] sm:$0xf]
      %v204 = vld [vmem:[%s192 + $0x14] sm:$0xf]
      %v205 = vld [vmem:[%s192 + $0x18] sm:$0xf]
      %v206 = vld [vmem:[%s192 + $0x1c] sm:$0xf]
      %v207 = vld [vmem:[%s192 + $0x20] sm:$0xf]
      %v208 = vld [vmem:[%s192 + $0x24] sm:$0xf]
      %v209 = vld [vmem:[%s192 + $0x28] sm:$0xf]
      %v210 = vld [vmem:[%s192 + $0x2c] sm:$0xf]
      %v211 = vld [vmem:[%s192 + $0x30] sm:$0xf]
      %v212 = vld [vmem:[%s192 + $0x34] sm:$0xf]
      %v213 = vld [vmem:[%s192 + $0x38] sm:$0xf]
      %v214 = vld [vmem:[%s192 + $0x3c] sm:$0xf]
      %v215 = vld [vmem:[%s192 + $0x40] sm:$0xf]
      %v216 = vld [vmem:[%s192 + $0x44] sm:$0xf]
      %v217 = vld [vmem:[%s192 + $0x48] sm:$0xf]
      %v218 = vld [vmem:[%s192 + $0x4c] sm:$0xf]
      %v219 = vld [vmem:[%s192 + $0x50] sm:$0xf]
      %v220 = vld [vmem:[%s192 + $0x54] sm:$0xf]
      %v221 = vld [vmem:[%s192 + $0x58] sm:$0xf]
      %v222 = vld [vmem:[%s192 + $0x5c] sm:$0xf]
      %v223 = vld [vmem:[%s192 + $0x60] sm:$0xf]
      %v224 = vld [vmem:[%s192 + $0x64] sm:$0xf]
      %v225 = vld [vmem:[%s192 + $0x68] sm:$0xf]
      %v226 = vld [vmem:[%s192 + $0x6c] sm:$0xf]
      %v227 = vld [vmem:[%s192 + $0x70] sm:$0xf]
      %v228 = vld [vmem:[%s192 + $0x74] sm:$0xf]
      %v229 = vld [vmem:[%s192 + $0x78] sm:$0xf]
      %v230 = vld [vmem:[%s192 + $0x7c] sm:$0xf]
      %v231 = vld [vmem:[%s192 + $0x80] sm:$0xf]
      %v232 = vld [vmem:[%s192 + $0x84] sm:$0xf]
      %v233 = vld [vmem:[%s192 + $0x88] sm:$0xf]
      %v234 = vld [vmem:[%s192 + $0x8c] sm:$0xf]
      %v235 = vmax.bf16 %v199, 0
      %v236 = vmax.bf16 %v200, 0
      %v237 = vmax.bf16 %v201, 0
      %v238 = vmax.bf16 %v202, 0
      %v239 = vmax.bf16 %v203, 0
      %v240 = vmax.bf16 %v204, 0
      %v241 = vmax.bf16 %v205, 0
      %v242 = vmax.bf16 %v206, 0
      %v243 = vmax.bf16 %v207, 0
      %v244 = vmax.bf16 %v208, 0
      %v245 = vmax.bf16 %v209, 0
      %v246 = vmax.bf16 %v210, 0
      %v247 = vmax.bf16 %v211, 0
      %v248 = vmax.bf16 %v212, 0
      %v249 = vmax.bf16 %v213, 0
      %v250 = vmax.bf16 %v214, 0
      %v251 = vmax.bf16 %v215, 0
      %v252 = vmax.bf16 %v216, 0
      %v253 = vmax.bf16 %v217, 0
      %v254 = vmax.bf16 %v218, 0
      %v255 = vmax.bf16 %v219, 0
      %v256 = vmax.bf16 %v220, 0
      %v257 = vmax.bf16 %v221, 0
      %v258 = vmax.bf16 %v222, 0
      %v259 = vmax.bf16 %v223, 0
      %v260 = vmax.bf16 %v224, 0
      %v261 = vmax.bf16 %v225, 0
      %v262 = vmax.bf16 %v226, 0
      %v263 = vmax.bf16 %v227, 0
      %v264 = vmax.bf16 %v228, 0
      %v265 = vmax.bf16 %v229, 0
      %v266 = vmax.bf16 %v230, 0
      %v267 = vmax.bf16 %v231, 0
      %v268 = vmax.bf16 %v232, 0
      %v269 = vmax.bf16 %v233, 0
      %v270 = vmax.bf16 %v234, 0
      %v271 = vld [vmem:[%s1] sm:$0xf]
      %v272 = vld [vmem:[%s1 + $0x4] sm:$0xf]
      %v273 = vld [vmem:[%s1 + $0x8] sm:$0xf]
      %v274 = vld [vmem:[%s1 + $0xc] sm:$0x3]
      %v311 = vunpack.c.l.b16 %v235
      %v312 = vunpack.c.l.b16 %v236
      %v313 = vunpack.c.l.b16 %v237
      %v314 = vunpack.c.l.b16 %v238
      %v315 = vunpack.c.l.b16 %v239
      %v316 = vunpack.c.l.b16 %v240
      %v317 = vunpack.c.l.b16 %v241
      %v318 = vunpack.c.l.b16 %v242
      %v319 = vunpack.c.l.b16 %v243
      %v320 = vunpack.c.l.b16 %v244
      %v321 = vunpack.c.l.b16 %v245
      %v322 = vunpack.c.l.b16 %v246
      %v323 = vunpack.c.l.b16 %v247
      %v324 = vunpack.c.l.b16 %v248
      %v325 = vunpack.c.l.b16 %v249
      %v326 = vunpack.c.l.b16 %v250
      %v327 = vunpack.c.l.b16 %v251
      %v328 = vunpack.c.l.b16 %v252
      %v329 = vunpack.c.l.b16 %v253
      %v330 = vunpack.c.l.b16 %v254
      %v331 = vunpack.c.l.b16 %v255
      %v332 = vunpack.c.l.b16 %v256
      %v333 = vunpack.c.l.b16 %v257
      %v334 = vunpack.c.l.b16 %v258
      %v335 = vunpack.c.l.b16 %v259
      %v336 = vunpack.c.l.b16 %v260
      %v337 = vunpack.c.l.b16 %v261
      %v338 = vunpack.c.l.b16 %v262
      %v339 = vunpack.c.l.b16 %v263
      %v340 = vunpack.c.l.b16 %v264
      %v341 = vunpack.c.l.b16 %v265
      %v342 = vunpack.c.l.b16 %v266
      %v343 = vunpack.c.l.b16 %v267
      %v344 = vunpack.c.l.b16 %v268
      %v345 = vunpack.c.l.b16 %v269
      %v346 = vunpack.c.l.b16 %v270
      %v347 = vpack.c.b16 %v312, %v311
      %v348 = vpack.c.b16 %v314, %v313
      %v349 = vpack.c.b16 %v316, %v315
      %v350 = vpack.c.b16 %v318, %v317
      %v351 = vpack.c.b16 %v320, %v319
      %v352 = vpack.c.b16 %v322, %v321
      %v353 = vpack.c.b16 %v324, %v323
      %v354 = vpack.c.b16 %v326, %v325
      %v355 = vpack.c.b16 %v328, %v327
      %v356 = vpack.c.b16 %v330, %v329
      %v357 = vpack.c.b16 %v332, %v331
      %v358 = vpack.c.b16 %v334, %v333
      %v359 = vpack.c.b16 %v336, %v335
      %v360 = vpack.c.b16 %v338, %v337
      %v361 = vpack.c.b16 %v340, %v339
      %v362 = vpack.c.b16 %v342, %v341
      %v363 = vpack.c.b16 %v344, %v343
      %v364 = vpack.c.b16 %v346, %v345
      %v369 = vunpack.c.l.b16 %v271
      %v370 = vunpack.c.l.b16 %v272
      %v371 = vunpack.c.l.b16 %v273
      %v372 = vunpack.c.l.b16 %v274
      %v373 = vpack.c.b16 %v370, %v369
      %v374 = vpack.c.b16 %v372, %v371
      %vm376 = vcmask 228352
      %v378 = vsel %vm376, %v347, 0
      %v381 = vsel %vm376, %v348, 0
      %v384 = vsel %vm376, %v349, 0
      %v387 = vsel %vm376, %v350, 0
      %v390 = vsel %vm376, %v351, 0
      %v393 = vsel %vm376, %v352, 0
      %v396 = vsel %vm376, %v353, 0
      %v399 = vsel %vm376, %v354, 0
      %v402 = vsel %vm376, %v355, 0
      %v405 = vsel %vm376, %v356, 0
      %v408 = vsel %vm376, %v357, 0
      %v411 = vsel %vm376, %v358, 0
      %v414 = vsel %vm376, %v359, 0
      %v417 = vsel %vm376, %v360, 0
      %v420 = vsel %vm376, %v361, 0
      %v423 = vsel %vm376, %v362, 0
      %v426 = vsel %vm376, %v363, 0
      %v429 = vsel %vm376, %v364, 0
      %vm431 = vcmask 1045504
      %v433 = vsel %vm431, %v374, 0
      %435 = vmatprep.subr.bf16.mxu0 0
      %436 = vmatpush1.bf16.msra.mxu0 0
      %437 = vmatprep.subr.bf16.mxu0 0
      %438 = vmatpush1.bf16.msra.mxu0 0
      %439 = vmatprep.subr.bf16.mxu0 0
      %440 = vmatpush1.bf16.msra.mxu0 0
      %441 = vmatprep.subr.bf16.mxu0 0
      %442 = vmatpush1.bf16.msra.mxu0 0
      %443 = vmatprep.subr.bf16.mxu0 0
      %444 = vmatpush1.bf16.msra.mxu0 0
      %445 = vmatprep.subr.bf16.mxu0 0
      %446 = vmatpush1.bf16.msra.mxu0 0
      %447 = vmatprep.subr.bf16.mxu0 0
      %448 = vmatpush1.bf16.msra.mxu0 %v433
      %449 = vmatprep.subr.bf16.mxu0 0
      %450 = vmatpush1.bf16.msra.mxu0 %v373
      %451 = vmatprep.subr.bf16.mxu0 0
      %452 = vmatpush2.bf16.msra.mxu0 0
      %453 = vmatprep.subr.bf16.mxu0 0
      %454 = vmatpush2.bf16.msra.mxu0 0
      %455 = vmatprep.subr.bf16.mxu0 0
      %456 = vmatpush2.bf16.msra.mxu0 0
      %457 = vmatprep.subr.bf16.mxu0 0
      %458 = vmatpush2.bf16.msra.mxu0 0
      %459 = vmatprep.subr.bf16.mxu0 0
      %460 = vmatpush2.bf16.msra.mxu0 0
      %461 = vmatprep.subr.bf16.mxu0 0
      %462 = vmatpush2.bf16.msra.mxu0 0
      %463 = vmatprep.subr.bf16.mxu0 0
      %464 = vmatpush2.bf16.msra.mxu0 0
      %465 = vmatprep.subr.bf16.mxu0 0
      %466 = vmatpush2.bf16.msra.mxu0 0
      %467 = vmatprep.mubr.bf16.mxu0 0
      %468 = vmatmul.mubr.bf16.gmra.mxu0 %v378
      %v469 = vpop.f32.mrf.mxu0
      %v470 = vadd.f32 0.0, %v469
      %v471 = vpop.f32.mrf.mxu0
      %v472 = vpop.f32.mrf.mxu0
      %v473 = vadd.f32 0.0, %v472
      %v474 = vpop.f32.mrf.mxu0
      %475 = vmatprep.mubr.bf16.mxu0 0
      %476 = vmatmul.mubr.bf16.gmra.mxu0 %v381
      %v477 = vpop.f32.mrf.mxu0
      %v478 = vadd.f32 0.0, %v477
      %v479 = vpop.f32.mrf.mxu0
      %v480 = vpop.f32.mrf.mxu0
      %v481 = vadd.f32 0.0, %v480
      %v482 = vpop.f32.mrf.mxu0
      %483 = vmatprep.mubr.bf16.mxu0 0
      %484 = vmatmul.mubr.bf16.gmra.mxu0 %v384
      %v485 = vpop.f32.mrf.mxu0
      %v486 = vadd.f32 0.0, %v485
      %v487 = vpop.f32.mrf.mxu0
      %v488 = vpop.f32.mrf.mxu0
      %v489 = vadd.f32 0.0, %v488
      %v490 = vpop.f32.mrf.mxu0
      %491 = vmatprep.mubr.bf16.mxu0 0
      %492 = vmatmul.mubr.bf16.gmra.mxu0 %v387
      %v493 = vpop.f32.mrf.mxu0
      %v494 = vadd.f32 0.0, %v493
      %v495 = vpop.f32.mrf.mxu0
      %v496 = vpop.f32.mrf.mxu0
      %v497 = vadd.f32 0.0, %v496
      %v498 = vpop.f32.mrf.mxu0
      %499 = vmatprep.mubr.bf16.mxu0 0
      %500 = vmatmul.mubr.bf16.gmra.mxu0 %v390
      %v501 = vpop.f32.mrf.mxu0
      %v502 = vadd.f32 0.0, %v501
      %v503 = vpop.f32.mrf.mxu0
      %v504 = vpop.f32.mrf.mxu0
      %v505 = vadd.f32 0.0, %v504
      %v506 = vpop.f32.mrf.mxu0
      %507 = vmatprep.mubr.bf16.mxu0 0
      %508 = vmatmul.mubr.bf16.gmra.mxu0 %v393
      %v509 = vpop.f32.mrf.mxu0
      %v510 = vadd.f32 0.0, %v509
      %v511 = vpop.f32.mrf.mxu0
      %v512 = vpop.f32.mrf.mxu0
      %v513 = vadd.f32 0.0, %v512
      %v514 = vpop.f32.mrf.mxu0
      %515 = vmatprep.mubr.bf16.mxu0 0
      %516 = vmatmul.mubr.bf16.gmra.mxu0 %v396
      %v517 = vpop.f32.mrf.mxu0
      %v518 = vadd.f32 0.0, %v517
      %v519 = vpop.f32.mrf.mxu0
      %v520 = vpop.f32.mrf.mxu0
      %v521 = vadd.f32 0.0, %v520
      %v522 = vpop.f32.mrf.mxu0
      %523 = vmatprep.mubr.bf16.mxu0 0
      %524 = vmatmul.mubr.bf16.gmra.mxu0 %v399
      %v525 = vpop.f32.mrf.mxu0
      %v526 = vadd.f32 0.0, %v525
      %v527 = vpop.f32.mrf.mxu0
      %v528 = vpop.f32.mrf.mxu0
      %v529 = vadd.f32 0.0, %v528
      %v530 = vpop.f32.mrf.mxu0
      %531 = vmatprep.mubr.bf16.mxu0 0
      %532 = vmatmul.mubr.bf16.gmra.mxu0 %v402
      %v533 = vpop.f32.mrf.mxu0
      %v534 = vadd.f32 0.0, %v533
      %v535 = vpop.f32.mrf.mxu0
      %v536 = vpop.f32.mrf.mxu0
      %v537 = vadd.f32 0.0, %v536
      %v538 = vpop.f32.mrf.mxu0
      %539 = vmatprep.mubr.bf16.mxu0 0
      %540 = vmatmul.mubr.bf16.gmra.mxu0 %v405
      %v541 = vpop.f32.mrf.mxu0
      %v542 = vadd.f32 0.0, %v541
      %v543 = vpop.f32.mrf.mxu0
      %v544 = vpop.f32.mrf.mxu0
      %v545 = vadd.f32 0.0, %v544
      %v546 = vpop.f32.mrf.mxu0
      %547 = vmatprep.mubr.bf16.mxu0 0
      %548 = vmatmul.mubr.bf16.gmra.mxu0 %v408
      %v549 = vpop.f32.mrf.mxu0
      %v550 = vadd.f32 0.0, %v549
      %v551 = vpop.f32.mrf.mxu0
      %v552 = vpop.f32.mrf.mxu0
      %v553 = vadd.f32 0.0, %v552
      %v554 = vpop.f32.mrf.mxu0
      %555 = vmatprep.mubr.bf16.mxu0 0
      %556 = vmatmul.mubr.bf16.gmra.mxu0 %v411
      %v557 = vpop.f32.mrf.mxu0
      %v558 = vadd.f32 0.0, %v557
      %v559 = vpop.f32.mrf.mxu0
      %v560 = vpop.f32.mrf.mxu0
      %v561 = vadd.f32 0.0, %v560
      %v562 = vpop.f32.mrf.mxu0
      %563 = vmatprep.mubr.bf16.mxu0 0
      %564 = vmatmul.mubr.bf16.gmra.mxu0 %v414
      %v565 = vpop.f32.mrf.mxu0
      %v566 = vadd.f32 0.0, %v565
      %v567 = vpop.f32.mrf.mxu0
      %v568 = vpop.f32.mrf.mxu0
      %v569 = vadd.f32 0.0, %v568
      %v570 = vpop.f32.mrf.mxu0
      %571 = vmatprep.mubr.bf16.mxu0 0
      %572 = vmatmul.mubr.bf16.gmra.mxu0 %v417
      %v573 = vpop.f32.mrf.mxu0
      %v574 = vadd.f32 0.0, %v573
      %v575 = vpop.f32.mrf.mxu0
      %v576 = vpop.f32.mrf.mxu0
      %v577 = vadd.f32 0.0, %v576
      %v578 = vpop.f32.mrf.mxu0
      %579 = vmatprep.mubr.bf16.mxu0 0
      %580 = vmatmul.mubr.bf16.gmra.mxu0 %v420
      %v581 = vpop.f32.mrf.mxu0
      %v582 = vadd.f32 0.0, %v581
      %v583 = vpop.f32.mrf.mxu0
      %v584 = vpop.f32.mrf.mxu0
      %v585 = vadd.f32 0.0, %v584
      %v586 = vpop.f32.mrf.mxu0
      %587 = vmatprep.mubr.bf16.mxu0 0
      %588 = vmatmul.mubr.bf16.gmra.mxu0 %v423
      %v589 = vpop.f32.mrf.mxu0
      %v590 = vadd.f32 0.0, %v589
      %v591 = vpop.f32.mrf.mxu0
      %v592 = vpop.f32.mrf.mxu0
      %v593 = vadd.f32 0.0, %v592
      %v594 = vpop.f32.mrf.mxu0
      %595 = vmatprep.mubr.bf16.mxu0 0
      %596 = vmatmul.mubr.bf16.gmra.mxu0 %v426
      %v597 = vpop.f32.mrf.mxu0
      %v598 = vadd.f32 0.0, %v597
      %v599 = vpop.f32.mrf.mxu0
      %v600 = vpop.f32.mrf.mxu0
      %v601 = vadd.f32 0.0, %v600
      %v602 = vpop.f32.mrf.mxu0
      %603 = vmatprep.mubr.bf16.mxu0 0
      %604 = vmatmul.mubr.bf16.gmra.mxu0 %v429
      %v605 = vpop.f32.mrf.mxu0
      %v606 = vadd.f32 0.0, %v605
      %v607 = vpop.f32.mrf.mxu0
      %v608 = vpop.f32.mrf.mxu0
      %v609 = vadd.f32 0.0, %v608
      %v610 = vpop.f32.mrf.mxu0
      %611 = vdwg.mxu0
      %v612 = vmax.f32 %v470, 0.0
      %v613 = vmax.f32 %v473, 0.0
      %v614 = vmax.f32 %v478, 0.0
      %v615 = vmax.f32 %v481, 0.0
      %v616 = vmax.f32 %v486, 0.0
      %v617 = vmax.f32 %v489, 0.0
      %v618 = vmax.f32 %v494, 0.0
      %v619 = vmax.f32 %v497, 0.0
      %v620 = vmax.f32 %v502, 0.0
      %v621 = vmax.f32 %v505, 0.0
      %v622 = vmax.f32 %v510, 0.0
      %v623 = vmax.f32 %v513, 0.0
      %v624 = vmax.f32 %v518, 0.0
      %v625 = vmax.f32 %v521, 0.0
      %v626 = vmax.f32 %v526, 0.0
      %v627 = vmax.f32 %v529, 0.0
      %v628 = vmax.f32 %v534, 0.0
      %v629 = vmax.f32 %v537, 0.0
      %v630 = vmax.f32 %v542, 0.0
      %v631 = vmax.f32 %v545, 0.0
      %v632 = vmax.f32 %v550, 0.0
      %v633 = vmax.f32 %v553, 0.0
      %v634 = vmax.f32 %v558, 0.0
      %v635 = vmax.f32 %v561, 0.0
      %v636 = vmax.f32 %v566, 0.0
      %v637 = vmax.f32 %v569, 0.0
      %v638 = vmax.f32 %v574, 0.0
      %v639 = vmax.f32 %v577, 0.0
      %v640 = vmax.f32 %v582, 0.0
      %v641 = vmax.f32 %v585, 0.0
      %v642 = vmax.f32 %v590, 0.0
      %v643 = vmax.f32 %v593, 0.0
      %v644 = vmax.f32 %v598, 0.0
      %v645 = vmax.f32 %v601, 0.0
      %v646 = vmax.f32 %v606, 0.0
      %v647 = vmax.f32 %v609, 0.0
      %v648 = vpack.c.bf16 %v613, %v612
      %v649 = vpack.c.bf16 %v615, %v614
      %v650 = vpack.c.bf16 %v617, %v616
      %v651 = vpack.c.bf16 %v619, %v618
      %v652 = vpack.c.bf16 %v621, %v620
      %v653 = vpack.c.bf16 %v623, %v622
      %v654 = vpack.c.bf16 %v625, %v624
      %v655 = vpack.c.bf16 %v627, %v626
      %v656 = vpack.c.bf16 %v629, %v628
      %v657 = vpack.c.bf16 %v631, %v630
      %v658 = vpack.c.bf16 %v633, %v632
      %v659 = vpack.c.bf16 %v635, %v634
      %v660 = vpack.c.bf16 %v637, %v636
      %v661 = vpack.c.bf16 %v639, %v638
      %v662 = vpack.c.bf16 %v641, %v640
      %v663 = vpack.c.bf16 %v643, %v642
      %v664 = vpack.c.bf16 %v645, %v644
      %v665 = vpack.c.bf16 %v647, %v646
      %vm666 = vcmask 257024
      %667 = vst.msk [vmem:[#allocation2] sm:$0xf] %vm666, 0
      %668 = vst.msk [vmem:[#allocation2 + $0x4] sm:$0xf] %vm666, 0
      %669 = vst.msk [vmem:[#allocation2 + $0x8] sm:$0xf] %vm666, 0
      %670 = vst.msk [vmem:[#allocation2 + $0xc] sm:$0xf] %vm666, 0
      %671 = vst.msk [vmem:[#allocation2 + $0x10] sm:$0xf] %vm666, 0
      %672 = vst.msk [vmem:[#allocation2 + $0x14] sm:$0xf] %vm666, 0
      %673 = vst.msk [vmem:[#allocation2 + $0x18] sm:$0xf] %vm666, 0
      %674 = vst.msk [vmem:[#allocation2 + $0x1c] sm:$0xf] %vm666, 0
      %675 = vst.msk [vmem:[#allocation2 + $0x20] sm:$0xf] %vm666, 0
      %676 = vst.msk [vmem:[#allocation2 + $0x24] sm:$0xf] %vm666, 0
      %677 = vst.msk [vmem:[#allocation2 + $0x28] sm:$0xf] %vm666, 0
      %678 = vst.msk [vmem:[#allocation2 + $0x2c] sm:$0xf] %vm666, 0
      %679 = vst.msk [vmem:[#allocation2 + $0x30] sm:$0xf] %vm666, 0
      %680 = vst.msk [vmem:[#allocation2 + $0x34] sm:$0xf] %vm666, 0
      %681 = vst.msk [vmem:[#allocation2 + $0x38] sm:$0xf] %vm666, 0
      %682 = vst.msk [vmem:[#allocation2 + $0x3c] sm:$0xf] %vm666, 0
      %683 = vst.msk [vmem:[#allocation2 + $0x40] sm:$0xf] %vm666, 0
      %684 = vst.msk [vmem:[#allocation2 + $0x44] sm:$0xf] %vm666, 0
      %685 = vst.msk [vmem:[#allocation2 + $0x48] sm:$0xf] %vm666, 0
      %686 = vst.msk [vmem:[#allocation2 + $0x4c] sm:$0xf] %vm666, 0
      %687 = vst.msk [vmem:[#allocation2 + $0x50] sm:$0xf] %vm666, 0
      %688 = vst.msk [vmem:[#allocation2 + $0x54] sm:$0xf] %vm666, 0
      %689 = vst.msk [vmem:[#allocation2 + $0x58] sm:$0xf] %vm666, 0
      %690 = vst.msk [vmem:[#allocation2 + $0x5c] sm:$0xf] %vm666, 0
      %691 = vst.msk [vmem:[#allocation2 + $0x60] sm:$0xf] %vm666, 0
      %692 = vst.msk [vmem:[#allocation2 + $0x64] sm:$0xf] %vm666, 0
      %693 = vst.msk [vmem:[#allocation2 + $0x68] sm:$0xf] %vm666, 0
      %694 = vst.msk [vmem:[#allocation2 + $0x6c] sm:$0xf] %vm666, 0
      %695 = vst.msk [vmem:[#allocation2 + $0x70] sm:$0xf] %vm666, 0
      %696 = vst.msk [vmem:[#allocation2 + $0x74] sm:$0xf] %vm666, 0
      %697 = vst.msk [vmem:[#allocation2 + $0x78] sm:$0xf] %vm666, 0
      %698 = vst.msk [vmem:[#allocation2 + $0x7c] sm:$0xf] %vm666, 0
      %699 = vst.msk [vmem:[#allocation2 + $0x80] sm:$0xf] %vm666, 0
      %700 = vst.msk [vmem:[#allocation2 + $0x84] sm:$0xf] %vm666, 0
      %701 = vst.msk [vmem:[#allocation2 + $0x88] sm:$0xf] %vm666, 0
      %702 = vst.msk [vmem:[#allocation2 + $0x8c] sm:$0xf] %vm666, 0
      %703 = vst.msk [vmem:[#allocation2 + $0x90] sm:$0xf] %vm666, 0
      %704 = vst.msk [vmem:[#allocation2 + $0x94] sm:$0xf] %vm666, 0
      %705 = vst.msk [vmem:[#allocation2 + $0x98] sm:$0xf] %vm666, 0
      %706 = vst.msk [vmem:[#allocation2 + $0x9c] sm:$0xf] %vm666, 0
      %707 = vst.msk [vmem:[#allocation2 + $0xa0] sm:$0xf] %vm666, 0
      %v726 = vunpack.c.l.b16 %v648
      %v727 = vunpack.c.h.b16 %v648
      %v728 = vunpack.c.l.b16 %v649
      %v729 = vunpack.c.h.b16 %v649
      %v730 = vunpack.c.l.b16 %v650
      %v731 = vunpack.c.h.b16 %v650
      %v732 = vunpack.c.l.b16 %v651
      %v733 = vunpack.c.h.b16 %v651
      %v734 = vunpack.c.l.b16 %v652
      %v735 = vunpack.c.h.b16 %v652
      %v736 = vunpack.c.l.b16 %v653
      %v737 = vunpack.c.h.b16 %v653
      %v738 = vunpack.c.l.b16 %v654
      %v739 = vunpack.c.h.b16 %v654
      %v740 = vunpack.c.l.b16 %v655
      %v741 = vunpack.c.h.b16 %v655
      %v742 = vunpack.c.l.b16 %v656
      %v743 = vunpack.c.h.b16 %v656
      %v744 = vunpack.c.l.b16 %v657
      %v745 = vunpack.c.h.b16 %v657
      %v746 = vunpack.c.l.b16 %v658
      %v747 = vunpack.c.h.b16 %v658
      %v748 = vunpack.c.l.b16 %v659
      %v749 = vunpack.c.h.b16 %v659
      %v750 = vunpack.c.l.b16 %v660
      %v751 = vunpack.c.h.b16 %v660
      %v752 = vunpack.c.l.b16 %v661
      %v753 = vunpack.c.h.b16 %v661
      %v754 = vunpack.c.l.b16 %v662
      %v755 = vunpack.c.h.b16 %v662
      %v756 = vunpack.c.l.b16 %v663
      %v757 = vunpack.c.h.b16 %v663
      %v758 = vunpack.c.l.b16 %v664
      %v759 = vunpack.c.h.b16 %v664
      %v760 = vunpack.c.l.b16 %v665
      %v761 = vunpack.c.h.b16 %v665
      %v762 = vpack.c.b16 %v726, %v726
      %v763 = vpack.c.b16 %v727, %v727
      %v764 = vpack.c.b16 %v728, %v728
      %v765 = vpack.c.b16 %v729, %v729
      %v766 = vpack.c.b16 %v730, %v730
      %v767 = vpack.c.b16 %v731, %v731
      %v768 = vpack.c.b16 %v732, %v732
      %v769 = vpack.c.b16 %v733, %v733
      %v770 = vpack.c.b16 %v734, %v734
      %v771 = vpack.c.b16 %v735, %v735
      %v772 = vpack.c.b16 %v736, %v736
      %v773 = vpack.c.b16 %v737, %v737
      %v774 = vpack.c.b16 %v738, %v738
      %v775 = vpack.c.b16 %v739, %v739
      %v776 = vpack.c.b16 %v740, %v740
      %v777 = vpack.c.b16 %v741, %v741
      %v778 = vpack.c.b16 %v742, %v742
      %v779 = vpack.c.b16 %v743, %v743
      %v780 = vpack.c.b16 %v744, %v744
      %v781 = vpack.c.b16 %v745, %v745
      %v782 = vpack.c.b16 %v746, %v746
      %v783 = vpack.c.b16 %v747, %v747
      %v784 = vpack.c.b16 %v748, %v748
      %v785 = vpack.c.b16 %v749, %v749
      %v786 = vpack.c.b16 %v750, %v750
      %v787 = vpack.c.b16 %v751, %v751
      %v788 = vpack.c.b16 %v752, %v752
      %v789 = vpack.c.b16 %v753, %v753
      %v790 = vpack.c.b16 %v754, %v754
      %v791 = vpack.c.b16 %v755, %v755
      %v792 = vpack.c.b16 %v756, %v756
      %v793 = vpack.c.b16 %v757, %v757
      %v794 = vpack.c.b16 %v758, %v758
      %v795 = vpack.c.b16 %v759, %v759
      %v796 = vpack.c.b16 %v760, %v760
      %v797 = vpack.c.b16 %v761, %v761
      %vm798 = vsmask.f32 1280
      %vm799 = vsmask.f32 5392
      %vm800 = vmor %vm798, %vm799
      %v802 = vshrl.u32 %v762, 16
      %v804 = vrot.slane %v802, 6
      %v805 = vshll.u32 %v762, 16
      %v807 = vrot.slane %v805, 7
      %v808 = vor.u32 %v804, %v807
      %v809 = vrot.slane %v808, 4
      %v811 = vshrl.u32 %v763, 16
      %v813 = vrot.slane %v811, 6
      %v814 = vshll.u32 %v763, 16
      %v816 = vrot.slane %v814, 7
      %v817 = vor.u32 %v813, %v816
      %v818 = vsel %vm800, %v809, %v817
      %v819 = vrot.slane %v817, 4
      %v821 = vshrl.u32 %v764, 16
      %v823 = vrot.slane %v821, 6
      %v824 = vshll.u32 %v764, 16
      %v826 = vrot.slane %v824, 7
      %v827 = vor.u32 %v823, %v826
      %v828 = vsel %vm800, %v819, %v827
      %v829 = vrot.slane %v827, 4
      %v831 = vshrl.u32 %v765, 16
      %v833 = vrot.slane %v831, 6
      %v834 = vshll.u32 %v765, 16
      %v836 = vrot.slane %v834, 7
      %v837 = vor.u32 %v833, %v836
      %v838 = vsel %vm800, %v829, %v837
      %v839 = vrot.slane %v837, 4
      %v841 = vshrl.u32 %v766, 16
      %v843 = vrot.slane %v841, 6
      %v844 = vshll.u32 %v766, 16
      %v846 = vrot.slane %v844, 7
      %v847 = vor.u32 %v843, %v846
      %v848 = vsel %vm800, %v839, %v847
      %v849 = vrot.slane %v847, 4
      %v851 = vshrl.u32 %v767, 16
      %v853 = vrot.slane %v851, 6
      %v854 = vshll.u32 %v767, 16
      %v856 = vrot.slane %v854, 7
      %v857 = vor.u32 %v853, %v856
      %v858 = vsel %vm800, %v849, %v857
      %v859 = vrot.slane %v857, 4
      %v861 = vshrl.u32 %v768, 16
      %v863 = vrot.slane %v861, 6
      %v864 = vshll.u32 %v768, 16
      %v866 = vrot.slane %v864, 7
      %v867 = vor.u32 %v863, %v866
      %v868 = vsel %vm800, %v859, %v867
      %v869 = vrot.slane %v867, 4
      %v871 = vshrl.u32 %v769, 16
      %v873 = vrot.slane %v871, 6
      %v874 = vshll.u32 %v769, 16
      %v876 = vrot.slane %v874, 7
      %v877 = vor.u32 %v873, %v876
      %v878 = vsel %vm800, %v869, %v877
      %v879 = vrot.slane %v877, 4
      %v881 = vshrl.u32 %v770, 16
      %v883 = vrot.slane %v881, 6
      %v884 = vshll.u32 %v770, 16
      %v886 = vrot.slane %v884, 7
      %v887 = vor.u32 %v883, %v886
      %v888 = vsel %vm800, %v879, %v887
      %v889 = vrot.slane %v887, 4
      %v891 = vshrl.u32 %v771, 16
      %v893 = vrot.slane %v891, 6
      %v894 = vshll.u32 %v771, 16
      %v896 = vrot.slane %v894, 7
      %v897 = vor.u32 %v893, %v896
      %v898 = vsel %vm800, %v889, %v897
      %v899 = vrot.slane %v897, 4
      %v901 = vshrl.u32 %v772, 16
      %v903 = vrot.slane %v901, 6
      %v904 = vshll.u32 %v772, 16
      %v906 = vrot.slane %v904, 7
      %v907 = vor.u32 %v903, %v906
      %v908 = vsel %vm800, %v899, %v907
      %v909 = vrot.slane %v907, 4
      %v911 = vshrl.u32 %v773, 16
      %v913 = vrot.slane %v911, 6
      %v914 = vshll.u32 %v773, 16
      %v916 = vrot.slane %v914, 7
      %v917 = vor.u32 %v913, %v916
      %v918 = vsel %vm800, %v909, %v917
      %v919 = vrot.slane %v917, 4
      %v921 = vshrl.u32 %v774, 16
      %v923 = vrot.slane %v921, 6
      %v924 = vshll.u32 %v774, 16
      %v926 = vrot.slane %v924, 7
      %v927 = vor.u32 %v923, %v926
      %v928 = vsel %vm800, %v919, %v927
      %v929 = vrot.slane %v927, 4
      %v931 = vshrl.u32 %v775, 16
      %v933 = vrot.slane %v931, 6
      %v934 = vshll.u32 %v775, 16
      %v936 = vrot.slane %v934, 7
      %v937 = vor.u32 %v933, %v936
      %v938 = vsel %vm800, %v929, %v937
      %v939 = vrot.slane %v937, 4
      %v941 = vshrl.u32 %v776, 16
      %v943 = vrot.slane %v941, 6
      %v944 = vshll.u32 %v776, 16
      %v946 = vrot.slane %v944, 7
      %v947 = vor.u32 %v943, %v946
      %v948 = vsel %vm800, %v939, %v947
      %v949 = vrot.slane %v947, 4
      %v951 = vshrl.u32 %v777, 16
      %v953 = vrot.slane %v951, 6
      %v954 = vshll.u32 %v777, 16
      %v956 = vrot.slane %v954, 7
      %v957 = vor.u32 %v953, %v956
      %v958 = vsel %vm800, %v949, %v957
      %v959 = vrot.slane %v957, 4
      %v961 = vshrl.u32 %v778, 16
      %v963 = vrot.slane %v961, 6
      %v964 = vshll.u32 %v778, 16
      %v966 = vrot.slane %v964, 7
      %v967 = vor.u32 %v963, %v966
      %v968 = vsel %vm800, %v959, %v967
      %v969 = vrot.slane %v967, 4
      %v971 = vshrl.u32 %v779, 16
      %v973 = vrot.slane %v971, 6
      %v974 = vshll.u32 %v779, 16
      %v976 = vrot.slane %v974, 7
      %v977 = vor.u32 %v973, %v976
      %v978 = vsel %vm800, %v969, %v977
      %v979 = vrot.slane %v977, 4
      %v981 = vshrl.u32 %v780, 16
      %v983 = vrot.slane %v981, 6
      %v984 = vshll.u32 %v780, 16
      %v986 = vrot.slane %v984, 7
      %v987 = vor.u32 %v983, %v986
      %v988 = vsel %vm800, %v979, %v987
      %v989 = vrot.slane %v987, 4
      %v991 = vshrl.u32 %v781, 16
      %v993 = vrot.slane %v991, 6
      %v994 = vshll.u32 %v781, 16
      %v996 = vrot.slane %v994, 7
      %v997 = vor.u32 %v993, %v996
      %v998 = vsel %vm800, %v989, %v997
      %v999 = vrot.slane %v997, 4
      %v1001 = vshrl.u32 %v782, 16
      %v1003 = vrot.slane %v1001, 6
      %v1004 = vshll.u32 %v782, 16
      %v1006 = vrot.slane %v1004, 7
      %v1007 = vor.u32 %v1003, %v1006
      %v1008 = vsel %vm800, %v999, %v1007
      %v1009 = vrot.slane %v1007, 4
      %v1011 = vshrl.u32 %v783, 16
      %v1013 = vrot.slane %v1011, 6
      %v1014 = vshll.u32 %v783, 16
      %v1016 = vrot.slane %v1014, 7
      %v1017 = vor.u32 %v1013, %v1016
      %v1018 = vsel %vm800, %v1009, %v1017
      %v1019 = vrot.slane %v1017, 4
      %v1021 = vshrl.u32 %v784, 16
      %v1023 = vrot.slane %v1021, 6
      %v1024 = vshll.u32 %v784, 16
      %v1026 = vrot.slane %v1024, 7
      %v1027 = vor.u32 %v1023, %v1026
      %v1028 = vsel %vm800, %v1019, %v1027
      %v1029 = vrot.slane %v1027, 4
      %v1031 = vshrl.u32 %v785, 16
      %v1033 = vrot.slane %v1031, 6
      %v1034 = vshll.u32 %v785, 16
      %v1036 = vrot.slane %v1034, 7
      %v1037 = vor.u32 %v1033, %v1036
      %v1038 = vsel %vm800, %v1029, %v1037
      %v1039 = vrot.slane %v1037, 4
      %v1041 = vshrl.u32 %v786, 16
      %v1043 = vrot.slane %v1041, 6
      %v1044 = vshll.u32 %v786, 16
      %v1046 = vrot.slane %v1044, 7
      %v1047 = vor.u32 %v1043, %v1046
      %v1048 = vsel %vm800, %v1039, %v1047
      %v1049 = vrot.slane %v1047, 4
      %v1051 = vshrl.u32 %v787, 16
      %v1053 = vrot.slane %v1051, 6
      %v1054 = vshll.u32 %v787, 16
      %v1056 = vrot.slane %v1054, 7
      %v1057 = vor.u32 %v1053, %v1056
      %v1058 = vsel %vm800, %v1049, %v1057
      %v1059 = vrot.slane %v1057, 4
      %v1061 = vshrl.u32 %v788, 16
      %v1063 = vrot.slane %v1061, 6
      %v1064 = vshll.u32 %v788, 16
      %v1066 = vrot.slane %v1064, 7
      %v1067 = vor.u32 %v1063, %v1066
      %v1068 = vsel %vm800, %v1059, %v1067
      %v1069 = vrot.slane %v1067, 4
      %v1071 = vshrl.u32 %v789, 16
      %v1073 = vrot.slane %v1071, 6
      %v1074 = vshll.u32 %v789, 16
      %v1076 = vrot.slane %v1074, 7
      %v1077 = vor.u32 %v1073, %v1076
      %v1078 = vsel %vm800, %v1069, %v1077
      %v1079 = vrot.slane %v1077, 4
      %v1081 = vshrl.u32 %v790, 16
      %v1083 = vrot.slane %v1081, 6
      %v1084 = vshll.u32 %v790, 16
      %v1086 = vrot.slane %v1084, 7
      %v1087 = vor.u32 %v1083, %v1086
      %v1088 = vsel %vm800, %v1079, %v1087
      %v1089 = vrot.slane %v1087, 4
      %v1091 = vshrl.u32 %v791, 16
      %v1093 = vrot.slane %v1091, 6
      %v1094 = vshll.u32 %v791, 16
      %v1096 = vrot.slane %v1094, 7
      %v1097 = vor.u32 %v1093, %v1096
      %v1098 = vsel %vm800, %v1089, %v1097
      %v1099 = vrot.slane %v1097, 4
      %v1101 = vshrl.u32 %v792, 16
      %v1103 = vrot.slane %v1101, 6
      %v1104 = vshll.u32 %v792, 16
      %v1106 = vrot.slane %v1104, 7
      %v1107 = vor.u32 %v1103, %v1106
      %v1108 = vsel %vm800, %v1099, %v1107
      %v1109 = vrot.slane %v1107, 4
      %v1111 = vshrl.u32 %v793, 16
      %v1113 = vrot.slane %v1111, 6
      %v1114 = vshll.u32 %v793, 16
      %v1116 = vrot.slane %v1114, 7
      %v1117 = vor.u32 %v1113, %v1116
      %v1118 = vsel %vm800, %v1109, %v1117
      %v1119 = vrot.slane %v1117, 4
      %v1121 = vshrl.u32 %v794, 16
      %v1123 = vrot.slane %v1121, 6
      %v1124 = vshll.u32 %v794, 16
      %v1126 = vrot.slane %v1124, 7
      %v1127 = vor.u32 %v1123, %v1126
      %v1128 = vsel %vm800, %v1119, %v1127
      %v1129 = vrot.slane %v1127, 4
      %v1131 = vshrl.u32 %v795, 16
      %v1133 = vrot.slane %v1131, 6
      %v1134 = vshll.u32 %v795, 16
      %v1136 = vrot.slane %v1134, 7
      %v1137 = vor.u32 %v1133, %v1136
      %v1138 = vsel %vm800, %v1129, %v1137
      %v1139 = vrot.slane %v1137, 4
      %v1141 = vshrl.u32 %v796, 16
      %v1143 = vrot.slane %v1141, 6
      %v1144 = vshll.u32 %v796, 16
      %v1146 = vrot.slane %v1144, 7
      %v1147 = vor.u32 %v1143, %v1146
      %v1148 = vsel %vm800, %v1139, %v1147
      %v1149 = vrot.slane %v1147, 4
      %v1151 = vshrl.u32 %v797, 16
      %v1153 = vrot.slane %v1151, 6
      %v1154 = vshll.u32 %v797, 16
      %v1156 = vrot.slane %v1154, 7
      %v1157 = vor.u32 %v1153, %v1156
      %v1158 = vsel %vm800, %v1149, %v1157
      %v1159 = vrot.slane %v1157, 4
      %vm1197 = vcmask 257025
      %vm1198 = vsmask.f32 7942
      %vm1199 = vmand %vm1197, %vm1198
      %v1200 = vld [vmem:[#allocation2 + $0x8] sm:$0xe]
      %v1201 = vsel %vm1199, %v808, %v1200
      %1202 = vst [vmem:[#allocation2 + $0x8] sm:$0xe] %v1201
      %1203 = vst.msk [vmem:[#allocation2 + $0xc] sm:$0xf] %vm666, %v818
      %1204 = vst.msk [vmem:[#allocation2 + $0x10] sm:$0xf] %vm666, %v828
      %1205 = vst.msk [vmem:[#allocation2 + $0x14] sm:$0xf] %vm666, %v838
      %1206 = vst.msk [vmem:[#allocation2 + $0x18] sm:$0xf] %vm666, %v848
      %1207 = vst.msk [vmem:[#allocation2 + $0x1c] sm:$0xf] %vm666, %v858
      %1208 = vst.msk [vmem:[#allocation2 + $0x20] sm:$0xf] %vm666, %v868
      %1209 = vst.msk [vmem:[#allocation2 + $0x24] sm:$0xf] %vm666, %v878
      %1210 = vst.msk [vmem:[#allocation2 + $0x28] sm:$0xf] %vm666, %v888
      %1211 = vst.msk [vmem:[#allocation2 + $0x2c] sm:$0xf] %vm666, %v898
      %1212 = vst.msk [vmem:[#allocation2 + $0x30] sm:$0xf] %vm666, %v908
      %1213 = vst.msk [vmem:[#allocation2 + $0x34] sm:$0xf] %vm666, %v918
      %1214 = vst.msk [vmem:[#allocation2 + $0x38] sm:$0xf] %vm666, %v928
      %1215 = vst.msk [vmem:[#allocation2 + $0x3c] sm:$0xf] %vm666, %v938
      %1216 = vst.msk [vmem:[#allocation2 + $0x40] sm:$0xf] %vm666, %v948
      %1217 = vst.msk [vmem:[#allocation2 + $0x44] sm:$0xf] %vm666, %v958
      %1218 = vst.msk [vmem:[#allocation2 + $0x48] sm:$0xf] %vm666, %v968
      %1219 = vst.msk [vmem:[#allocation2 + $0x4c] sm:$0xf] %vm666, %v978
      %1220 = vst.msk [vmem:[#allocation2 + $0x50] sm:$0xf] %vm666, %v988
      %1221 = vst.msk [vmem:[#allocation2 + $0x54] sm:$0xf] %vm666, %v998
      %1222 = vst.msk [vmem:[#allocation2 + $0x58] sm:$0xf] %vm666, %v1008
      %1223 = vst.msk [vmem:[#allocation2 + $0x5c] sm:$0xf] %vm666, %v1018
      %1224 = vst.msk [vmem:[#allocation2 + $0x60] sm:$0xf] %vm666, %v1028
      %1225 = vst.msk [vmem:[#allocation2 + $0x64] sm:$0xf] %vm666, %v1038
      %1226 = vst.msk [vmem:[#allocation2 + $0x68] sm:$0xf] %vm666, %v1048
      %1227 = vst.msk [vmem:[#allocation2 + $0x6c] sm:$0xf] %vm666, %v1058
      %1228 = vst.msk [vmem:[#allocation2 + $0x70] sm:$0xf] %vm666, %v1068
      %1229 = vst.msk [vmem:[#allocation2 + $0x74] sm:$0xf] %vm666, %v1078
      %1230 = vst.msk [vmem:[#allocation2 + $0x78] sm:$0xf] %vm666, %v1088
      %1231 = vst.msk [vmem:[#allocation2 + $0x7c] sm:$0xf] %vm666, %v1098
      %1232 = vst.msk [vmem:[#allocation2 + $0x80] sm:$0xf] %vm666, %v1108
      %1233 = vst.msk [vmem:[#allocation2 + $0x84] sm:$0xf] %vm666, %v1118
      %1234 = vst.msk [vmem:[#allocation2 + $0x88] sm:$0xf] %vm666, %v1128
      %1235 = vst.msk [vmem:[#allocation2 + $0x8c] sm:$0xf] %vm666, %v1138
      %1236 = vst.msk [vmem:[#allocation2 + $0x90] sm:$0xf] %vm666, %v1148
      %1237 = vst.msk [vmem:[#allocation2 + $0x94] sm:$0xf] %vm666, %v1158
      %vm1238 = vcmask 254976
      %vm1239 = vmand %vm1238, %vm798
      %v1240 = vld [vmem:[#allocation2 + $0x98] sm:$0x3]
      %v1241 = vsel %vm1239, %v1159, %v1240
      %1242 = vst [vmem:[#allocation2 + $0x98] sm:$0x3] %v1241
      %v1243 = vld [vmem:[#allocation2] sm:$0xf]
      %v1244 = vld [vmem:[#allocation2 + $0x4] sm:$0xf]
      %v1245 = vld [vmem:[#allocation2 + $0x8] sm:$0xf]
      %v1246 = vld [vmem:[#allocation2 + $0xc] sm:$0xf]
      %v1247 = vld [vmem:[#allocation2 + $0x10] sm:$0xf]
      %v1248 = vld [vmem:[#allocation2 + $0x14] sm:$0xf]
      %v1249 = vld [vmem:[#allocation2 + $0x18] sm:$0xf]
      %v1250 = vld [vmem:[#allocation2 + $0x1c] sm:$0xf]
      %v1251 = vld [vmem:[#allocation2 + $0x20] sm:$0xf]
      %v1252 = vld [vmem:[#allocation2 + $0x24] sm:$0xf]
      %v1253 = vld [vmem:[#allocation2 + $0x28] sm:$0xf]
      %v1254 = vld [vmem:[#allocation2 + $0x2c] sm:$0xf]
      %v1255 = vld [vmem:[#allocation2 + $0x30] sm:$0xf]
      %v1256 = vld [vmem:[#allocation2 + $0x34] sm:$0xf]
      %v1257 = vld [vmem:[#allocation2 + $0x38] sm:$0xf]
      %v1258 = vld [vmem:[#allocation2 + $0x3c] sm:$0xf]
      %v1259 = vld [vmem:[#allocation2 + $0x40] sm:$0xf]
      %v1260 = vld [vmem:[#allocation2 + $0x44] sm:$0xf]
      %v1261 = vld [vmem:[#allocation2 + $0x48] sm:$0xf]
      %v1262 = vld [vmem:[#allocation2 + $0x4c] sm:$0xf]
      %v1263 = vld [vmem:[#allocation2 + $0x50] sm:$0xf]
      %v1264 = vld [vmem:[#allocation2 + $0x54] sm:$0xf]
      %v1265 = vld [vmem:[#allocation2 + $0x58] sm:$0xf]
      %v1266 = vld [vmem:[#allocation2 + $0x5c] sm:$0xf]
      %v1267 = vld [vmem:[#allocation2 + $0x60] sm:$0xf]
      %v1268 = vld [vmem:[#allocation2 + $0x64] sm:$0xf]
      %v1269 = vld [vmem:[#allocation2 + $0x68] sm:$0xf]
      %v1270 = vld [vmem:[#allocation2 + $0x6c] sm:$0xf]
      %v1271 = vld [vmem:[#allocation2 + $0x70] sm:$0xf]
      %v1272 = vld [vmem:[#allocation2 + $0x74] sm:$0xf]
      %v1273 = vld [vmem:[#allocation2 + $0x78] sm:$0xf]
      %v1274 = vld [vmem:[#allocation2 + $0x7c] sm:$0xf]
      %v1275 = vld [vmem:[#allocation2 + $0x80] sm:$0xf]
      %v1276 = vld [vmem:[#allocation2 + $0x84] sm:$0xf]
      %v1277 = vld [vmem:[#allocation2 + $0x88] sm:$0xf]
      %v1278 = vld [vmem:[#allocation2 + $0x8c] sm:$0xf]
      %v1279 = vld [vmem:[%s2] sm:$0xf]
      %v1280 = vld [vmem:[%s2 + $0x4] sm:$0xf]
      %v1281 = vld [vmem:[%s2 + $0x8] sm:$0xf]
      %v1282 = vld [vmem:[%s2 + $0xc] sm:$0xf]
      %v1283 = vld [vmem:[#allocation2 + $0x90] sm:$0x1]
      %s1284 = scalar_lea.vmem %s2, 16
      %v1285 = vld [vmem:[%s1284] sm:$0xf]
      %v1286 = vld [vmem:[%s1284 + $0x4] sm:$0xf]
      %v1287 = vld [vmem:[%s1284 + $0x8] sm:$0xf]
      %v1288 = vld [vmem:[%s1284 + $0xc] sm:$0xf]
      %v1326 = vunpack.c.l.b16 %v1243
      %v1327 = vunpack.c.l.b16 %v1244
      %v1328 = vunpack.c.l.b16 %v1245
      %v1329 = vunpack.c.l.b16 %v1246
      %v1330 = vunpack.c.l.b16 %v1247
      %v1331 = vunpack.c.l.b16 %v1248
      %v1332 = vunpack.c.l.b16 %v1249
      %v1333 = vunpack.c.l.b16 %v1250
      %v1334 = vunpack.c.l.b16 %v1251
      %v1335 = vunpack.c.l.b16 %v1252
      %v1336 = vunpack.c.l.b16 %v1253
      %v1337 = vunpack.c.l.b16 %v1254
      %v1338 = vunpack.c.l.b16 %v1255
      %v1339 = vunpack.c.l.b16 %v1256
      %v1340 = vunpack.c.l.b16 %v1257
      %v1341 = vunpack.c.l.b16 %v1258
      %v1342 = vunpack.c.l.b16 %v1259
      %v1343 = vunpack.c.l.b16 %v1260
      %v1344 = vunpack.c.l.b16 %v1261
      %v1345 = vunpack.c.l.b16 %v1262
      %v1346 = vunpack.c.l.b16 %v1263
      %v1347 = vunpack.c.l.b16 %v1264
      %v1348 = vunpack.c.l.b16 %v1265
      %v1349 = vunpack.c.l.b16 %v1266
      %v1350 = vunpack.c.l.b16 %v1267
      %v1351 = vunpack.c.l.b16 %v1268
      %v1352 = vunpack.c.l.b16 %v1269
      %v1353 = vunpack.c.l.b16 %v1270
      %v1354 = vunpack.c.l.b16 %v1271
      %v1355 = vunpack.c.l.b16 %v1272
      %v1356 = vunpack.c.l.b16 %v1273
      %v1357 = vunpack.c.l.b16 %v1274
      %v1358 = vunpack.c.l.b16 %v1275
      %v1359 = vunpack.c.l.b16 %v1276
      %v1360 = vunpack.c.l.b16 %v1277
      %v1361 = vunpack.c.l.b16 %v1278
      %v1362 = vunpack.c.l.b16 %v1283
      %v1363 = vpack.c.b16 %v1327, %v1326
      %v1364 = vpack.c.b16 %v1329, %v1328
      %v1365 = vpack.c.b16 %v1331, %v1330
      %v1366 = vpack.c.b16 %v1333, %v1332
      %v1367 = vpack.c.b16 %v1335, %v1334
      %v1368 = vpack.c.b16 %v1337, %v1336
      %v1369 = vpack.c.b16 %v1339, %v1338
      %v1370 = vpack.c.b16 %v1341, %v1340
      %v1371 = vpack.c.b16 %v1343, %v1342
      %v1372 = vpack.c.b16 %v1345, %v1344
      %v1373 = vpack.c.b16 %v1347, %v1346
      %v1374 = vpack.c.b16 %v1349, %v1348
      %v1375 = vpack.c.b16 %v1351, %v1350
      %v1376 = vpack.c.b16 %v1353, %v1352
      %v1377 = vpack.c.b16 %v1355, %v1354
      %v1378 = vpack.c.b16 %v1357, %v1356
      %v1379 = vpack.c.b16 %v1359, %v1358
      %v1380 = vpack.c.b16 %v1361, %v1360
      %v1381 = vpack.c.b16 %v1362, %v1362
      %vm1382 = vsmask.f32 7424
      %v1384 = vshrl.u32 %v1363, 16
      %v1386 = vshll.u32 %v1363, 16
      %v1388 = vrot.slane %v1386, 1
      %v1389 = vor.u32 %v1384, %v1388
      %v1391 = vshll.u32 %v1364, 16
      %v1393 = vrot.slane %v1391, 1
      %v1394 = vsel %vm1382, %v1389, %v1393
      %v1395 = vshrl.u32 %v1364, 16
      %v1397 = vor.u32 %v1395, %v1393
      %v1399 = vshll.u32 %v1365, 16
      %v1401 = vrot.slane %v1399, 1
      %v1402 = vsel %vm1382, %v1397, %v1401
      %v1403 = vshrl.u32 %v1365, 16
      %v1405 = vor.u32 %v1403, %v1401
      %v1407 = vshll.u32 %v1366, 16
      %v1409 = vrot.slane %v1407, 1
      %v1410 = vsel %vm1382, %v1405, %v1409
      %v1411 = vshrl.u32 %v1366, 16
      %v1413 = vor.u32 %v1411, %v1409
      %v1415 = vshll.u32 %v1367, 16
      %v1417 = vrot.slane %v1415, 1
      %v1418 = vsel %vm1382, %v1413, %v1417
      %v1419 = vshrl.u32 %v1367, 16
      %v1421 = vor.u32 %v1419, %v1417
      %v1423 = vshll.u32 %v1368, 16
      %v1425 = vrot.slane %v1423, 1
      %v1426 = vsel %vm1382, %v1421, %v1425
      %v1427 = vshrl.u32 %v1368, 16
      %v1429 = vor.u32 %v1427, %v1425
      %v1431 = vshll.u32 %v1369, 16
      %v1433 = vrot.slane %v1431, 1
      %v1434 = vsel %vm1382, %v1429, %v1433
      %v1435 = vshrl.u32 %v1369, 16
      %v1437 = vor.u32 %v1435, %v1433
      %v1439 = vshll.u32 %v1370, 16
      %v1441 = vrot.slane %v1439, 1
      %v1442 = vsel %vm1382, %v1437, %v1441
      %v1443 = vshrl.u32 %v1370, 16
      %v1445 = vor.u32 %v1443, %v1441
      %v1447 = vshll.u32 %v1371, 16
      %v1449 = vrot.slane %v1447, 1
      %v1450 = vsel %vm1382, %v1445, %v1449
      %v1451 = vshrl.u32 %v1371, 16
      %v1453 = vor.u32 %v1451, %v1449
      %v1455 = vshll.u32 %v1372, 16
      %v1457 = vrot.slane %v1455, 1
      %v1458 = vsel %vm1382, %v1453, %v1457
      %v1459 = vshrl.u32 %v1372, 16
      %v1461 = vor.u32 %v1459, %v1457
      %v1463 = vshll.u32 %v1373, 16
      %v1465 = vrot.slane %v1463, 1
      %v1466 = vsel %vm1382, %v1461, %v1465
      %v1467 = vshrl.u32 %v1373, 16
      %v1469 = vor.u32 %v1467, %v1465
      %v1471 = vshll.u32 %v1374, 16
      %v1473 = vrot.slane %v1471, 1
      %v1474 = vsel %vm1382, %v1469, %v1473
      %v1475 = vshrl.u32 %v1374, 16
      %v1477 = vor.u32 %v1475, %v1473
      %v1479 = vshll.u32 %v1375, 16
      %v1481 = vrot.slane %v1479, 1
      %v1482 = vsel %vm1382, %v1477, %v1481
      %v1483 = vshrl.u32 %v1375, 16
      %v1485 = vor.u32 %v1483, %v1481
      %v1487 = vshll.u32 %v1376, 16
      %v1489 = vrot.slane %v1487, 1
      %v1490 = vsel %vm1382, %v1485, %v1489
      %v1491 = vshrl.u32 %v1376, 16
      %v1493 = vor.u32 %v1491, %v1489
      %v1495 = vshll.u32 %v1377, 16
      %v1497 = vrot.slane %v1495, 1
      %v1498 = vsel %vm1382, %v1493, %v1497
      %v1499 = vshrl.u32 %v1377, 16
      %v1501 = vor.u32 %v1499, %v1497
      %v1503 = vshll.u32 %v1378, 16
      %v1505 = vrot.slane %v1503, 1
      %v1506 = vsel %vm1382, %v1501, %v1505
      %v1507 = vshrl.u32 %v1378, 16
      %v1509 = vor.u32 %v1507, %v1505
      %v1511 = vshll.u32 %v1379, 16
      %v1513 = vrot.slane %v1511, 1
      %v1514 = vsel %vm1382, %v1509, %v1513
      %v1515 = vshrl.u32 %v1379, 16
      %v1517 = vor.u32 %v1515, %v1513
      %v1519 = vshll.u32 %v1380, 16
      %v1521 = vrot.slane %v1519, 1
      %v1522 = vsel %vm1382, %v1517, %v1521
      %v1523 = vshrl.u32 %v1380, 16
      %v1525 = vor.u32 %v1523, %v1521
      %v1527 = vshll.u32 %v1381, 16
      %v1529 = vrot.slane %v1527, 1
      %v1530 = vsel %vm1382, %v1525, %v1529
      %v1535 = vunpack.c.l.b16 %v1285
      %v1536 = vunpack.c.l.b16 %v1286
      %v1537 = vunpack.c.l.b16 %v1287
      %v1538 = vunpack.c.l.b16 %v1288
      %v1539 = vpack.c.b16 %v1536, %v1535
      %v1540 = vpack.c.b16 %v1538, %v1537
      %vm1543 = vcmask 261120
      %v1545 = vsel %vm1543, %v1394, 0
      %v1548 = vsel %vm1543, %v1402, 0
      %v1551 = vsel %vm1543, %v1410, 0
      %v1554 = vsel %vm1543, %v1418, 0
      %v1557 = vsel %vm1543, %v1426, 0
      %v1560 = vsel %vm1543, %v1434, 0
      %v1563 = vsel %vm1543, %v1442, 0
      %v1566 = vsel %vm1543, %v1450, 0
      %v1569 = vsel %vm1543, %v1458, 0
      %v1572 = vsel %vm1543, %v1466, 0
      %v1575 = vsel %vm1543, %v1474, 0
      %v1578 = vsel %vm1543, %v1482, 0
      %v1581 = vsel %vm1543, %v1490, 0
      %v1584 = vsel %vm1543, %v1498, 0
      %v1587 = vsel %vm1543, %v1506, 0
      %v1590 = vsel %vm1543, %v1514, 0
      %v1593 = vsel %vm1543, %v1522, 0
      %v1596 = vsel %vm1543, %v1530, 0
      %1598 = vmatprep.subr.bf16.mxu0 0
      %1599 = vmatpush1.bf16.msra.mxu0 0
      %1600 = vmatprep.subr.bf16.mxu0 0
      %1601 = vmatpush1.bf16.msra.mxu0 0
      %1602 = vmatprep.subr.bf16.mxu0 0
      %1603 = vmatpush1.bf16.msra.mxu0 0
      %1604 = vmatprep.subr.bf16.mxu0 0
      %1605 = vmatpush1.bf16.msra.mxu0 0
      %1606 = vmatprep.subr.bf16.mxu0 0
      %1607 = vmatpush1.bf16.msra.mxu0 0
      %1608 = vmatprep.subr.bf16.mxu0 0
      %1609 = vmatpush1.bf16.msra.mxu0 0
      %1610 = vmatprep.subr.bf16.mxu0 0
      %1611 = vmatpush1.bf16.msra.mxu0 %v1540
      %1612 = vmatprep.subr.bf16.mxu0 0
      %1613 = vmatpush1.bf16.msra.mxu0 %v1539
      %1614 = vmatprep.subr.bf16.mxu0 0
      %1615 = vmatpush2.bf16.msra.mxu0 0
      %1616 = vmatprep.subr.bf16.mxu0 0
      %1617 = vmatpush2.bf16.msra.mxu0 0
      %1618 = vmatprep.subr.bf16.mxu0 0
      %1619 = vmatpush2.bf16.msra.mxu0 0
      %1620 = vmatprep.subr.bf16.mxu0 0
      %1621 = vmatpush2.bf16.msra.mxu0 0
      %1622 = vmatprep.subr.bf16.mxu0 0
      %1623 = vmatpush2.bf16.msra.mxu0 0
      %1624 = vmatprep.subr.bf16.mxu0 0
      %1625 = vmatpush2.bf16.msra.mxu0 0
      %1626 = vmatprep.subr.bf16.mxu0 0
      %1627 = vmatpush2.bf16.msra.mxu0 0
      %1628 = vmatprep.subr.bf16.mxu0 0
      %1629 = vmatpush2.bf16.msra.mxu0 0
      %1630 = vmatprep.mubr.bf16.mxu0 0
      %1631 = vmatmul.mubr.bf16.gmra.mxu0 %v1545
      %v1632 = vpop.f32.mrf.mxu0
      %v1633 = vadd.f32 0.0, %v1632
      %v1634 = vpop.f32.mrf.mxu0
      %v1635 = vpop.f32.mrf.mxu0
      %v1636 = vadd.f32 0.0, %v1635
      %v1637 = vpop.f32.mrf.mxu0
      %1638 = vmatprep.mubr.bf16.mxu0 0
      %1639 = vmatmul.mubr.bf16.gmra.mxu0 %v1548
      %v1640 = vpop.f32.mrf.mxu0
      %v1641 = vadd.f32 0.0, %v1640
      %v1642 = vpop.f32.mrf.mxu0
      %v1643 = vpop.f32.mrf.mxu0
      %v1644 = vadd.f32 0.0, %v1643
      %v1645 = vpop.f32.mrf.mxu0
      %1646 = vmatprep.mubr.bf16.mxu0 0
      %1647 = vmatmul.mubr.bf16.gmra.mxu0 %v1551
      %v1648 = vpop.f32.mrf.mxu0
      %v1649 = vadd.f32 0.0, %v1648
      %v1650 = vpop.f32.mrf.mxu0
      %v1651 = vpop.f32.mrf.mxu0
      %v1652 = vadd.f32 0.0, %v1651
      %v1653 = vpop.f32.mrf.mxu0
      %1654 = vmatprep.mubr.bf16.mxu0 0
      %1655 = vmatmul.mubr.bf16.gmra.mxu0 %v1554
      %v1656 = vpop.f32.mrf.mxu0
      %v1657 = vadd.f32 0.0, %v1656
      %v1658 = vpop.f32.mrf.mxu0
      %v1659 = vpop.f32.mrf.mxu0
      %v1660 = vadd.f32 0.0, %v1659
      %v1661 = vpop.f32.mrf.mxu0
      %1662 = vmatprep.mubr.bf16.mxu0 0
      %1663 = vmatmul.mubr.bf16.gmra.mxu0 %v1557
      %v1664 = vpop.f32.mrf.mxu0
      %v1665 = vadd.f32 0.0, %v1664
      %v1666 = vpop.f32.mrf.mxu0
      %v1667 = vpop.f32.mrf.mxu0
      %v1668 = vadd.f32 0.0, %v1667
      %v1669 = vpop.f32.mrf.mxu0
      %1670 = vmatprep.mubr.bf16.mxu0 0
      %1671 = vmatmul.mubr.bf16.gmra.mxu0 %v1560
      %v1672 = vpop.f32.mrf.mxu0
      %v1673 = vadd.f32 0.0, %v1672
      %v1674 = vpop.f32.mrf.mxu0
      %v1675 = vpop.f32.mrf.mxu0
      %v1676 = vadd.f32 0.0, %v1675
      %v1677 = vpop.f32.mrf.mxu0
      %1678 = vmatprep.mubr.bf16.mxu0 0
      %1679 = vmatmul.mubr.bf16.gmra.mxu0 %v1563
      %v1680 = vpop.f32.mrf.mxu0
      %v1681 = vadd.f32 0.0, %v1680
      %v1682 = vpop.f32.mrf.mxu0
      %v1683 = vpop.f32.mrf.mxu0
      %v1684 = vadd.f32 0.0, %v1683
      %v1685 = vpop.f32.mrf.mxu0
      %1686 = vmatprep.mubr.bf16.mxu0 0
      %1687 = vmatmul.mubr.bf16.gmra.mxu0 %v1566
      %v1688 = vpop.f32.mrf.mxu0
      %v1689 = vadd.f32 0.0, %v1688
      %v1690 = vpop.f32.mrf.mxu0
      %v1691 = vpop.f32.mrf.mxu0
      %v1692 = vadd.f32 0.0, %v1691
      %v1693 = vpop.f32.mrf.mxu0
      %1694 = vmatprep.mubr.bf16.mxu0 0
      %1695 = vmatmul.mubr.bf16.gmra.mxu0 %v1569
      %v1696 = vpop.f32.mrf.mxu0
      %v1697 = vadd.f32 0.0, %v1696
      %v1698 = vpop.f32.mrf.mxu0
      %v1699 = vpop.f32.mrf.mxu0
      %v1700 = vadd.f32 0.0, %v1699
      %v1701 = vpop.f32.mrf.mxu0
      %1702 = vmatprep.mubr.bf16.mxu0 0
      %1703 = vmatmul.mubr.bf16.gmra.mxu0 %v1572
      %v1704 = vpop.f32.mrf.mxu0
      %v1705 = vadd.f32 0.0, %v1704
      %v1706 = vpop.f32.mrf.mxu0
      %v1707 = vpop.f32.mrf.mxu0
      %v1708 = vadd.f32 0.0, %v1707
      %v1709 = vpop.f32.mrf.mxu0
      %1710 = vmatprep.mubr.bf16.mxu0 0
      %1711 = vmatmul.mubr.bf16.gmra.mxu0 %v1575
      %v1712 = vpop.f32.mrf.mxu0
      %v1713 = vadd.f32 0.0, %v1712
      %v1714 = vpop.f32.mrf.mxu0
      %v1715 = vpop.f32.mrf.mxu0
      %v1716 = vadd.f32 0.0, %v1715
      %v1717 = vpop.f32.mrf.mxu0
      %1718 = vmatprep.mubr.bf16.mxu0 0
      %1719 = vmatmul.mubr.bf16.gmra.mxu0 %v1578
      %v1720 = vpop.f32.mrf.mxu0
      %v1721 = vadd.f32 0.0, %v1720
      %v1722 = vpop.f32.mrf.mxu0
      %v1723 = vpop.f32.mrf.mxu0
      %v1724 = vadd.f32 0.0, %v1723
      %v1725 = vpop.f32.mrf.mxu0
      %1726 = vmatprep.mubr.bf16.mxu0 0
      %1727 = vmatmul.mubr.bf16.gmra.mxu0 %v1581
      %v1728 = vpop.f32.mrf.mxu0
      %v1729 = vadd.f32 0.0, %v1728
      %v1730 = vpop.f32.mrf.mxu0
      %v1731 = vpop.f32.mrf.mxu0
      %v1732 = vadd.f32 0.0, %v1731
      %v1733 = vpop.f32.mrf.mxu0
      %1734 = vmatprep.mubr.bf16.mxu0 0
      %1735 = vmatmul.mubr.bf16.gmra.mxu0 %v1584
      %v1736 = vpop.f32.mrf.mxu0
      %v1737 = vadd.f32 0.0, %v1736
      %v1738 = vpop.f32.mrf.mxu0
      %v1739 = vpop.f32.mrf.mxu0
      %v1740 = vadd.f32 0.0, %v1739
      %v1741 = vpop.f32.mrf.mxu0
      %1742 = vmatprep.mubr.bf16.mxu0 0
      %1743 = vmatmul.mubr.bf16.gmra.mxu0 %v1587
      %v1744 = vpop.f32.mrf.mxu0
      %v1745 = vadd.f32 0.0, %v1744
      %v1746 = vpop.f32.mrf.mxu0
      %v1747 = vpop.f32.mrf.mxu0
      %v1748 = vadd.f32 0.0, %v1747
      %v1749 = vpop.f32.mrf.mxu0
      %1750 = vmatprep.mubr.bf16.mxu0 0
      %1751 = vmatmul.mubr.bf16.gmra.mxu0 %v1590
      %v1752 = vpop.f32.mrf.mxu0
      %v1753 = vadd.f32 0.0, %v1752
      %v1754 = vpop.f32.mrf.mxu0
      %v1755 = vpop.f32.mrf.mxu0
      %v1756 = vadd.f32 0.0, %v1755
      %v1757 = vpop.f32.mrf.mxu0
      %1758 = vmatprep.mubr.bf16.mxu0 0
      %1759 = vmatmul.mubr.bf16.gmra.mxu0 %v1593
      %v1760 = vpop.f32.mrf.mxu0
      %v1761 = vadd.f32 0.0, %v1760
      %v1762 = vpop.f32.mrf.mxu0
      %v1763 = vpop.f32.mrf.mxu0
      %v1764 = vadd.f32 0.0, %v1763
      %v1765 = vpop.f32.mrf.mxu0
      %1766 = vmatprep.mubr.bf16.mxu0 0
      %1767 = vmatmul.mubr.bf16.gmra.mxu0 %v1596
      %v1768 = vpop.f32.mrf.mxu0
      %v1769 = vadd.f32 0.0, %v1768
      %v1770 = vpop.f32.mrf.mxu0
      %v1771 = vpop.f32.mrf.mxu0
      %v1772 = vadd.f32 0.0, %v1771
      %v1773 = vpop.f32.mrf.mxu0
      %1774 = vdwg.mxu0
      %v1779 = vunpack.c.l.b16 %v1279
      %v1780 = vunpack.c.l.b16 %v1280
      %v1781 = vunpack.c.l.b16 %v1281
      %v1782 = vunpack.c.l.b16 %v1282
      %v1783 = vpack.c.b16 %v1780, %v1779
      %v1784 = vpack.c.b16 %v1782, %v1781
      %v1787 = vsel %vm1543, %v1363, 0
      %v1789 = vsel %vm1543, %v1364, 0
      %v1791 = vsel %vm1543, %v1365, 0
      %v1793 = vsel %vm1543, %v1366, 0
      %v1795 = vsel %vm1543, %v1367, 0
      %v1797 = vsel %vm1543, %v1368, 0
      %v1799 = vsel %vm1543, %v1369, 0
      %v1801 = vsel %vm1543, %v1370, 0
      %v1803 = vsel %vm1543, %v1371, 0
      %v1805 = vsel %vm1543, %v1372, 0
      %v1807 = vsel %vm1543, %v1373, 0
      %v1809 = vsel %vm1543, %v1374, 0
      %v1811 = vsel %vm1543, %v1375, 0
      %v1813 = vsel %vm1543, %v1376, 0
      %v1815 = vsel %vm1543, %v1377, 0
      %v1817 = vsel %vm1543, %v1378, 0
      %v1819 = vsel %vm1543, %v1379, 0
      %v1821 = vsel %vm1543, %v1380, 0
      %1823 = vmatprep.subr.bf16.mxu0 0
      %1824 = vmatpush1.bf16.msra.mxu0 0
      %1825 = vmatprep.subr.bf16.mxu0 0
      %1826 = vmatpush1.bf16.msra.mxu0 0
      %1827 = vmatprep.subr.bf16.mxu0 0
      %1828 = vmatpush1.bf16.msra.mxu0 0
      %1829 = vmatprep.subr.bf16.mxu0 0
      %1830 = vmatpush1.bf16.msra.mxu0 0
      %1831 = vmatprep.subr.bf16.mxu0 0
      %1832 = vmatpush1.bf16.msra.mxu0 0
      %1833 = vmatprep.subr.bf16.mxu0 0
      %1834 = vmatpush1.bf16.msra.mxu0 0
      %1835 = vmatprep.subr.bf16.mxu0 0
      %1836 = vmatpush1.bf16.msra.mxu0 %v1784
      %1837 = vmatprep.subr.bf16.mxu0 0
      %1838 = vmatpush1.bf16.msra.mxu0 %v1783
      %1839 = vmatprep.subr.bf16.mxu0 0
      %1840 = vmatpush2.bf16.msra.mxu0 0
      %1841 = vmatprep.subr.bf16.mxu0 0
      %1842 = vmatpush2.bf16.msra.mxu0 0
      %1843 = vmatprep.subr.bf16.mxu0 0
      %1844 = vmatpush2.bf16.msra.mxu0 0
      %1845 = vmatprep.subr.bf16.mxu0 0
      %1846 = vmatpush2.bf16.msra.mxu0 0
      %1847 = vmatprep.subr.bf16.mxu0 0
      %1848 = vmatpush2.bf16.msra.mxu0 0
      %1849 = vmatprep.subr.bf16.mxu0 0
      %1850 = vmatpush2.bf16.msra.mxu0 0
      %1851 = vmatprep.subr.bf16.mxu0 0
      %1852 = vmatpush2.bf16.msra.mxu0 0
      %1853 = vmatprep.subr.bf16.mxu0 0
      %1854 = vmatpush2.bf16.msra.mxu0 0
      %1855 = vmatprep.mubr.bf16.mxu0 0
      %1856 = vmatmul.mubr.bf16.gmra.mxu0 %v1787
      %v1857 = vpop.f32.mrf.mxu0
      %v1858 = vadd.f32 %v1633, %v1857
      %v1859 = vpop.f32.mrf.mxu0
      %v1860 = vpop.f32.mrf.mxu0
      %v1861 = vadd.f32 %v1636, %v1860
      %v1862 = vpop.f32.mrf.mxu0
      %1863 = vmatprep.mubr.bf16.mxu0 0
      %1864 = vmatmul.mubr.bf16.gmra.mxu0 %v1789
      %v1865 = vpop.f32.mrf.mxu0
      %v1866 = vadd.f32 %v1641, %v1865
      %v1867 = vpop.f32.mrf.mxu0
      %v1868 = vpop.f32.mrf.mxu0
      %v1869 = vadd.f32 %v1644, %v1868
      %v1870 = vpop.f32.mrf.mxu0
      %1871 = vmatprep.mubr.bf16.mxu0 0
      %1872 = vmatmul.mubr.bf16.gmra.mxu0 %v1791
      %v1873 = vpop.f32.mrf.mxu0
      %v1874 = vadd.f32 %v1649, %v1873
      %v1875 = vpop.f32.mrf.mxu0
      %v1876 = vpop.f32.mrf.mxu0
      %v1877 = vadd.f32 %v1652, %v1876
      %v1878 = vpop.f32.mrf.mxu0
      %1879 = vmatprep.mubr.bf16.mxu0 0
      %1880 = vmatmul.mubr.bf16.gmra.mxu0 %v1793
      %v1881 = vpop.f32.mrf.mxu0
      %v1882 = vadd.f32 %v1657, %v1881
      %v1883 = vpop.f32.mrf.mxu0
      %v1884 = vpop.f32.mrf.mxu0
      %v1885 = vadd.f32 %v1660, %v1884
      %v1886 = vpop.f32.mrf.mxu0
      %1887 = vmatprep.mubr.bf16.mxu0 0
      %1888 = vmatmul.mubr.bf16.gmra.mxu0 %v1795
      %v1889 = vpop.f32.mrf.mxu0
      %v1890 = vadd.f32 %v1665, %v1889
      %v1891 = vpop.f32.mrf.mxu0
      %v1892 = vpop.f32.mrf.mxu0
      %v1893 = vadd.f32 %v1668, %v1892
      %v1894 = vpop.f32.mrf.mxu0
      %1895 = vmatprep.mubr.bf16.mxu0 0
      %1896 = vmatmul.mubr.bf16.gmra.mxu0 %v1797
      %v1897 = vpop.f32.mrf.mxu0
      %v1898 = vadd.f32 %v1673, %v1897
      %v1899 = vpop.f32.mrf.mxu0
      %v1900 = vpop.f32.mrf.mxu0
      %v1901 = vadd.f32 %v1676, %v1900
      %v1902 = vpop.f32.mrf.mxu0
      %1903 = vmatprep.mubr.bf16.mxu0 0
      %1904 = vmatmul.mubr.bf16.gmra.mxu0 %v1799
      %v1905 = vpop.f32.mrf.mxu0
      %v1906 = vadd.f32 %v1681, %v1905
      %v1907 = vpop.f32.mrf.mxu0
      %v1908 = vpop.f32.mrf.mxu0
      %v1909 = vadd.f32 %v1684, %v1908
      %v1910 = vpop.f32.mrf.mxu0
      %1911 = vmatprep.mubr.bf16.mxu0 0
      %1912 = vmatmul.mubr.bf16.gmra.mxu0 %v1801
      %v1913 = vpop.f32.mrf.mxu0
      %v1914 = vadd.f32 %v1689, %v1913
      %v1915 = vpop.f32.mrf.mxu0
      %v1916 = vpop.f32.mrf.mxu0
      %v1917 = vadd.f32 %v1692, %v1916
      %v1918 = vpop.f32.mrf.mxu0
      %1919 = vmatprep.mubr.bf16.mxu0 0
      %1920 = vmatmul.mubr.bf16.gmra.mxu0 %v1803
      %v1921 = vpop.f32.mrf.mxu0
      %v1922 = vadd.f32 %v1697, %v1921
      %v1923 = vpop.f32.mrf.mxu0
      %v1924 = vpop.f32.mrf.mxu0
      %v1925 = vadd.f32 %v1700, %v1924
      %v1926 = vpop.f32.mrf.mxu0
      %1927 = vmatprep.mubr.bf16.mxu0 0
      %1928 = vmatmul.mubr.bf16.gmra.mxu0 %v1805
      %v1929 = vpop.f32.mrf.mxu0
      %v1930 = vadd.f32 %v1705, %v1929
      %v1931 = vpop.f32.mrf.mxu0
      %v1932 = vpop.f32.mrf.mxu0
      %v1933 = vadd.f32 %v1708, %v1932
      %v1934 = vpop.f32.mrf.mxu0
      %1935 = vmatprep.mubr.bf16.mxu0 0
      %1936 = vmatmul.mubr.bf16.gmra.mxu0 %v1807
      %v1937 = vpop.f32.mrf.mxu0
      %v1938 = vadd.f32 %v1713, %v1937
      %v1939 = vpop.f32.mrf.mxu0
      %v1940 = vpop.f32.mrf.mxu0
      %v1941 = vadd.f32 %v1716, %v1940
      %v1942 = vpop.f32.mrf.mxu0
      %1943 = vmatprep.mubr.bf16.mxu0 0
      %1944 = vmatmul.mubr.bf16.gmra.mxu0 %v1809
      %v1945 = vpop.f32.mrf.mxu0
      %v1946 = vadd.f32 %v1721, %v1945
      %v1947 = vpop.f32.mrf.mxu0
      %v1948 = vpop.f32.mrf.mxu0
      %v1949 = vadd.f32 %v1724, %v1948
      %v1950 = vpop.f32.mrf.mxu0
      %1951 = vmatprep.mubr.bf16.mxu0 0
      %1952 = vmatmul.mubr.bf16.gmra.mxu0 %v1811
      %v1953 = vpop.f32.mrf.mxu0
      %v1954 = vadd.f32 %v1729, %v1953
      %v1955 = vpop.f32.mrf.mxu0
      %v1956 = vpop.f32.mrf.mxu0
      %v1957 = vadd.f32 %v1732, %v1956
      %v1958 = vpop.f32.mrf.mxu0
      %1959 = vmatprep.mubr.bf16.mxu0 0
      %1960 = vmatmul.mubr.bf16.gmra.mxu0 %v1813
      %v1961 = vpop.f32.mrf.mxu0
      %v1962 = vadd.f32 %v1737, %v1961
      %v1963 = vpop.f32.mrf.mxu0
      %v1964 = vpop.f32.mrf.mxu0
      %v1965 = vadd.f32 %v1740, %v1964
      %v1966 = vpop.f32.mrf.mxu0
      %1967 = vmatprep.mubr.bf16.mxu0 0
      %1968 = vmatmul.mubr.bf16.gmra.mxu0 %v1815
      %v1969 = vpop.f32.mrf.mxu0
      %v1970 = vadd.f32 %v1745, %v1969
      %v1971 = vpop.f32.mrf.mxu0
      %v1972 = vpop.f32.mrf.mxu0
      %v1973 = vadd.f32 %v1748, %v1972
      %v1974 = vpop.f32.mrf.mxu0
      %1975 = vmatprep.mubr.bf16.mxu0 0
      %1976 = vmatmul.mubr.bf16.gmra.mxu0 %v1817
      %v1977 = vpop.f32.mrf.mxu0
      %v1978 = vadd.f32 %v1753, %v1977
      %v1979 = vpop.f32.mrf.mxu0
      %v1980 = vpop.f32.mrf.mxu0
      %v1981 = vadd.f32 %v1756, %v1980
      %v1982 = vpop.f32.mrf.mxu0
      %1983 = vmatprep.mubr.bf16.mxu0 0
      %1984 = vmatmul.mubr.bf16.gmra.mxu0 %v1819
      %v1985 = vpop.f32.mrf.mxu0
      %v1986 = vadd.f32 %v1761, %v1985
      %v1987 = vpop.f32.mrf.mxu0
      %v1988 = vpop.f32.mrf.mxu0
      %v1989 = vadd.f32 %v1764, %v1988
      %v1990 = vpop.f32.mrf.mxu0
      %1991 = vmatprep.mubr.bf16.mxu0 0
      %1992 = vmatmul.mubr.bf16.gmra.mxu0 %v1821
      %v1993 = vpop.f32.mrf.mxu0
      %v1994 = vadd.f32 %v1769, %v1993
      %v1995 = vpop.f32.mrf.mxu0
      %v1996 = vpop.f32.mrf.mxu0
      %v1997 = vadd.f32 %v1772, %v1996
      %v1998 = vpop.f32.mrf.mxu0
      %1999 = vdwg.mxu0
      %v2000 = vld [vmem:[#allocation2] sm:$0xe]
      %s2001 = scalar_lea.vmem %s2, 32
      %v2002 = vld [vmem:[%s2001] sm:$0xf]
      %v2003 = vld [vmem:[%s2001 + $0x4] sm:$0xf]
      %v2004 = vld [vmem:[%s2001 + $0x8] sm:$0xf]
      %v2005 = vld [vmem:[%s2001 + $0xc] sm:$0xf]
      %v2007 = vunpack.c.l.b16 %v2000
      %v2008 = vpack.c.b16 %v1327, %v2007
      %vm2009 = vcmask 1046528
      %v2010 = vrot.slane %v2008, 1
      %v2011 = vrot.slane %v1364, 1
      %v2012 = vsel %vm2009, %v2010, %v2011
      %v2013 = vrot.slane %v1365, 1
      %v2014 = vsel %vm2009, %v2011, %v2013
      %v2015 = vrot.slane %v1366, 1
      %v2016 = vsel %vm2009, %v2013, %v2015
      %v2017 = vrot.slane %v1367, 1
      %v2018 = vsel %vm2009, %v2015, %v2017
      %v2019 = vrot.slane %v1368, 1
      %v2020 = vsel %vm2009, %v2017, %v2019
      %v2021 = vrot.slane %v1369, 1
      %v2022 = vsel %vm2009, %v2019, %v2021
      %v2023 = vrot.slane %v1370, 1
      %v2024 = vsel %vm2009, %v2021, %v2023
      %v2025 = vrot.slane %v1371, 1
      %v2026 = vsel %vm2009, %v2023, %v2025
      %v2027 = vrot.slane %v1372, 1
      %v2028 = vsel %vm2009, %v2025, %v2027
      %v2029 = vrot.slane %v1373, 1
      %v2030 = vsel %vm2009, %v2027, %v2029
      %v2031 = vrot.slane %v1374, 1
      %v2032 = vsel %vm2009, %v2029, %v2031
      %v2033 = vrot.slane %v1375, 1
      %v2034 = vsel %vm2009, %v2031, %v2033
      %v2035 = vrot.slane %v1376, 1
      %v2036 = vsel %vm2009, %v2033, %v2035
      %v2037 = vrot.slane %v1377, 1
      %v2038 = vsel %vm2009, %v2035, %v2037
      %v2039 = vrot.slane %v1378, 1
      %v2040 = vsel %vm2009, %v2037, %v2039
      %v2041 = vrot.slane %v1379, 1
      %v2042 = vsel %vm2009, %v2039, %v2041
      %v2043 = vrot.slane %v1380, 1
      %v2044 = vsel %vm2009, %v2041, %v2043
      %v2045 = vrot.slane %v1381, 1
      %v2046 = vsel %vm2009, %v2043, %v2045
      %v2051 = vunpack.c.l.b16 %v2002
      %v2052 = vunpack.c.l.b16 %v2003
      %v2053 = vunpack.c.l.b16 %v2004
      %v2054 = vunpack.c.l.b16 %v2005
      %v2055 = vpack.c.b16 %v2052, %v2051
      %v2056 = vpack.c.b16 %v2054, %v2053
      %v2060 = vsel %vm1543, %v2012, 0
      %v2063 = vsel %vm1543, %v2014, 0
      %v2066 = vsel %vm1543, %v2016, 0
      %v2069 = vsel %vm1543, %v2018, 0
      %v2072 = vsel %vm1543, %v2020, 0
      %v2075 = vsel %vm1543, %v2022, 0
      %v2078 = vsel %vm1543, %v2024, 0
      %v2081 = vsel %vm1543, %v2026, 0
      %v2084 = vsel %vm1543, %v2028, 0
      %v2087 = vsel %vm1543, %v2030, 0
      %v2090 = vsel %vm1543, %v2032, 0
      %v2093 = vsel %vm1543, %v2034, 0
      %v2096 = vsel %vm1543, %v2036, 0
      %v2099 = vsel %vm1543, %v2038, 0
      %v2102 = vsel %vm1543, %v2040, 0
      %v2105 = vsel %vm1543, %v2042, 0
      %v2108 = vsel %vm1543, %v2044, 0
      %v2111 = vsel %vm1543, %v2046, 0
      %2113 = vmatprep.subr.bf16.mxu0 0
      %2114 = vmatpush1.bf16.msra.mxu0 0
      %2115 = vmatprep.subr.bf16.mxu0 0
      %2116 = vmatpush1.bf16.msra.mxu0 0
      %2117 = vmatprep.subr.bf16.mxu0 0
      %2118 = vmatpush1.bf16.msra.mxu0 0
      %2119 = vmatprep.subr.bf16.mxu0 0
      %2120 = vmatpush1.bf16.msra.mxu0 0
      %2121 = vmatprep.subr.bf16.mxu0 0
      %2122 = vmatpush1.bf16.msra.mxu0 0
      %2123 = vmatprep.subr.bf16.mxu0 0
      %2124 = vmatpush1.bf16.msra.mxu0 0
      %2125 = vmatprep.subr.bf16.mxu0 0
      %2126 = vmatpush1.bf16.msra.mxu0 %v2056
      %2127 = vmatprep.subr.bf16.mxu0 0
      %2128 = vmatpush1.bf16.msra.mxu0 %v2055
      %2129 = vmatprep.subr.bf16.mxu0 0
      %2130 = vmatpush2.bf16.msra.mxu0 0
      %2131 = vmatprep.subr.bf16.mxu0 0
      %2132 = vmatpush2.bf16.msra.mxu0 0
      %2133 = vmatprep.subr.bf16.mxu0 0
      %2134 = vmatpush2.bf16.msra.mxu0 0
      %2135 = vmatprep.subr.bf16.mxu0 0
      %2136 = vmatpush2.bf16.msra.mxu0 0
      %2137 = vmatprep.subr.bf16.mxu0 0
      %2138 = vmatpush2.bf16.msra.mxu0 0
      %2139 = vmatprep.subr.bf16.mxu0 0
      %2140 = vmatpush2.bf16.msra.mxu0 0
      %2141 = vmatprep.subr.bf16.mxu0 0
      %2142 = vmatpush2.bf16.msra.mxu0 0
      %2143 = vmatprep.subr.bf16.mxu0 0
      %2144 = vmatpush2.bf16.msra.mxu0 0
      %2145 = vmatprep.mubr.bf16.mxu0 0
      %2146 = vmatmul.mubr.bf16.gmra.mxu0 %v2060
      %v2147 = vpop.f32.mrf.mxu0
      %v2148 = vadd.f32 0.0, %v2147
      %v2149 = vpop.f32.mrf.mxu0
      %v2150 = vpop.f32.mrf.mxu0
      %v2151 = vadd.f32 0.0, %v2150
      %v2152 = vpop.f32.mrf.mxu0
      %2153 = vmatprep.mubr.bf16.mxu0 0
      %2154 = vmatmul.mubr.bf16.gmra.mxu0 %v2063
      %v2155 = vpop.f32.mrf.mxu0
      %v2156 = vadd.f32 0.0, %v2155
      %v2157 = vpop.f32.mrf.mxu0
      %v2158 = vpop.f32.mrf.mxu0
      %v2159 = vadd.f32 0.0, %v2158
      %v2160 = vpop.f32.mrf.mxu0
      %2161 = vmatprep.mubr.bf16.mxu0 0
      %2162 = vmatmul.mubr.bf16.gmra.mxu0 %v2066
      %v2163 = vpop.f32.mrf.mxu0
      %v2164 = vadd.f32 0.0, %v2163
      %v2165 = vpop.f32.mrf.mxu0
      %v2166 = vpop.f32.mrf.mxu0
      %v2167 = vadd.f32 0.0, %v2166
      %v2168 = vpop.f32.mrf.mxu0
      %2169 = vmatprep.mubr.bf16.mxu0 0
      %2170 = vmatmul.mubr.bf16.gmra.mxu0 %v2069
      %v2171 = vpop.f32.mrf.mxu0
      %v2172 = vadd.f32 0.0, %v2171
      %v2173 = vpop.f32.mrf.mxu0
      %v2174 = vpop.f32.mrf.mxu0
      %v2175 = vadd.f32 0.0, %v2174
      %v2176 = vpop.f32.mrf.mxu0
      %2177 = vmatprep.mubr.bf16.mxu0 0
      %2178 = vmatmul.mubr.bf16.gmra.mxu0 %v2072
      %v2179 = vpop.f32.mrf.mxu0
      %v2180 = vadd.f32 0.0, %v2179
      %v2181 = vpop.f32.mrf.mxu0
      %v2182 = vpop.f32.mrf.mxu0
      %v2183 = vadd.f32 0.0, %v2182
      %v2184 = vpop.f32.mrf.mxu0
      %2185 = vmatprep.mubr.bf16.mxu0 0
      %2186 = vmatmul.mubr.bf16.gmra.mxu0 %v2075
      %v2187 = vpop.f32.mrf.mxu0
      %v2188 = vadd.f32 0.0, %v2187
      %v2189 = vpop.f32.mrf.mxu0
      %v2190 = vpop.f32.mrf.mxu0
      %v2191 = vadd.f32 0.0, %v2190
      %v2192 = vpop.f32.mrf.mxu0
      %2193 = vmatprep.mubr.bf16.mxu0 0
      %2194 = vmatmul.mubr.bf16.gmra.mxu0 %v2078
      %v2195 = vpop.f32.mrf.mxu0
      %v2196 = vadd.f32 0.0, %v2195
      %v2197 = vpop.f32.mrf.mxu0
      %v2198 = vpop.f32.mrf.mxu0
      %v2199 = vadd.f32 0.0, %v2198
      %v2200 = vpop.f32.mrf.mxu0
      %2201 = vmatprep.mubr.bf16.mxu0 0
      %2202 = vmatmul.mubr.bf16.gmra.mxu0 %v2081
      %v2203 = vpop.f32.mrf.mxu0
      %v2204 = vadd.f32 0.0, %v2203
      %v2205 = vpop.f32.mrf.mxu0
      %v2206 = vpop.f32.mrf.mxu0
      %v2207 = vadd.f32 0.0, %v2206
      %v2208 = vpop.f32.mrf.mxu0
      %2209 = vmatprep.mubr.bf16.mxu0 0
      %2210 = vmatmul.mubr.bf16.gmra.mxu0 %v2084
      %v2211 = vpop.f32.mrf.mxu0
      %v2212 = vadd.f32 0.0, %v2211
      %v2213 = vpop.f32.mrf.mxu0
      %v2214 = vpop.f32.mrf.mxu0
      %v2215 = vadd.f32 0.0, %v2214
      %v2216 = vpop.f32.mrf.mxu0
      %2217 = vmatprep.mubr.bf16.mxu0 0
      %2218 = vmatmul.mubr.bf16.gmra.mxu0 %v2087
      %v2219 = vpop.f32.mrf.mxu0
      %v2220 = vadd.f32 0.0, %v2219
      %v2221 = vpop.f32.mrf.mxu0
      %v2222 = vpop.f32.mrf.mxu0
      %v2223 = vadd.f32 0.0, %v2222
      %v2224 = vpop.f32.mrf.mxu0
      %2225 = vmatprep.mubr.bf16.mxu0 0
      %2226 = vmatmul.mubr.bf16.gmra.mxu0 %v2090
      %v2227 = vpop.f32.mrf.mxu0
      %v2228 = vadd.f32 0.0, %v2227
      %v2229 = vpop.f32.mrf.mxu0
      %v2230 = vpop.f32.mrf.mxu0
      %v2231 = vadd.f32 0.0, %v2230
      %v2232 = vpop.f32.mrf.mxu0
      %2233 = vmatprep.mubr.bf16.mxu0 0
      %2234 = vmatmul.mubr.bf16.gmra.mxu0 %v2093
      %v2235 = vpop.f32.mrf.mxu0
      %v2236 = vadd.f32 0.0, %v2235
      %v2237 = vpop.f32.mrf.mxu0
      %v2238 = vpop.f32.mrf.mxu0
      %v2239 = vadd.f32 0.0, %v2238
      %v2240 = vpop.f32.mrf.mxu0
      %2241 = vmatprep.mubr.bf16.mxu0 0
      %2242 = vmatmul.mubr.bf16.gmra.mxu0 %v2096
      %v2243 = vpop.f32.mrf.mxu0
      %v2244 = vadd.f32 0.0, %v2243
      %v2245 = vpop.f32.mrf.mxu0
      %v2246 = vpop.f32.mrf.mxu0
      %v2247 = vadd.f32 0.0, %v2246
      %v2248 = vpop.f32.mrf.mxu0
      %2249 = vmatprep.mubr.bf16.mxu0 0
      %2250 = vmatmul.mubr.bf16.gmra.mxu0 %v2099
      %v2251 = vpop.f32.mrf.mxu0
      %v2252 = vadd.f32 0.0, %v2251
      %v2253 = vpop.f32.mrf.mxu0
      %v2254 = vpop.f32.mrf.mxu0
      %v2255 = vadd.f32 0.0, %v2254
      %v2256 = vpop.f32.mrf.mxu0
      %2257 = vmatprep.mubr.bf16.mxu0 0
      %2258 = vmatmul.mubr.bf16.gmra.mxu0 %v2102
      %v2259 = vpop.f32.mrf.mxu0
      %v2260 = vadd.f32 0.0, %v2259
      %v2261 = vpop.f32.mrf.mxu0
      %v2262 = vpop.f32.mrf.mxu0
      %v2263 = vadd.f32 0.0, %v2262
      %v2264 = vpop.f32.mrf.mxu0
      %2265 = vmatprep.mubr.bf16.mxu0 0
      %2266 = vmatmul.mubr.bf16.gmra.mxu0 %v2105
      %v2267 = vpop.f32.mrf.mxu0
      %v2268 = vadd.f32 0.0, %v2267
      %v2269 = vpop.f32.mrf.mxu0
      %v2270 = vpop.f32.mrf.mxu0
      %v2271 = vadd.f32 0.0, %v2270
      %v2272 = vpop.f32.mrf.mxu0
      %2273 = vmatprep.mubr.bf16.mxu0 0
      %2274 = vmatmul.mubr.bf16.gmra.mxu0 %v2108
      %v2275 = vpop.f32.mrf.mxu0
      %v2276 = vadd.f32 0.0, %v2275
      %v2277 = vpop.f32.mrf.mxu0
      %v2278 = vpop.f32.mrf.mxu0
      %v2279 = vadd.f32 0.0, %v2278
      %v2280 = vpop.f32.mrf.mxu0
      %2281 = vmatprep.mubr.bf16.mxu0 0
      %2282 = vmatmul.mubr.bf16.gmra.mxu0 %v2111
      %v2283 = vpop.f32.mrf.mxu0
      %v2284 = vadd.f32 0.0, %v2283
      %v2285 = vpop.f32.mrf.mxu0
      %v2286 = vpop.f32.mrf.mxu0
      %v2287 = vadd.f32 0.0, %v2286
      %v2288 = vpop.f32.mrf.mxu0
      %2289 = vdwg.mxu0
      %v2290 = vadd.f32 %v1858, %v2148
      %v2291 = vadd.f32 %v1861, %v2151
      %v2292 = vadd.f32 %v1866, %v2156
      %v2293 = vadd.f32 %v1869, %v2159
      %v2294 = vadd.f32 %v1874, %v2164
      %v2295 = vadd.f32 %v1877, %v2167
      %v2296 = vadd.f32 %v1882, %v2172
      %v2297 = vadd.f32 %v1885, %v2175
      %v2298 = vadd.f32 %v1890, %v2180
      %v2299 = vadd.f32 %v1893, %v2183
      %v2300 = vadd.f32 %v1898, %v2188
      %v2301 = vadd.f32 %v1901, %v2191
      %v2302 = vadd.f32 %v1906, %v2196
      %v2303 = vadd.f32 %v1909, %v2199
      %v2304 = vadd.f32 %v1914, %v2204
      %v2305 = vadd.f32 %v1917, %v2207
      %v2306 = vadd.f32 %v1922, %v2212
      %v2307 = vadd.f32 %v1925, %v2215
      %v2308 = vadd.f32 %v1930, %v2220
      %v2309 = vadd.f32 %v1933, %v2223
      %v2310 = vadd.f32 %v1938, %v2228
      %v2311 = vadd.f32 %v1941, %v2231
      %v2312 = vadd.f32 %v1946, %v2236
      %v2313 = vadd.f32 %v1949, %v2239
      %v2314 = vadd.f32 %v1954, %v2244
      %v2315 = vadd.f32 %v1957, %v2247
      %v2316 = vadd.f32 %v1962, %v2252
      %v2317 = vadd.f32 %v1965, %v2255
      %v2318 = vadd.f32 %v1970, %v2260
      %v2319 = vadd.f32 %v1973, %v2263
      %v2320 = vadd.f32 %v1978, %v2268
      %v2321 = vadd.f32 %v1981, %v2271
      %v2322 = vadd.f32 %v1986, %v2276
      %v2323 = vadd.f32 %v1989, %v2279
      %v2324 = vadd.f32 %v1994, %v2284
      %v2325 = vadd.f32 %v1997, %v2287
      %v2326 = vld [vmem:[#allocation2 + $0x8] sm:$0xe]
      %v2327 = vld [vmem:[#allocation2 + $0xc] sm:$0xf]
      %v2328 = vld [vmem:[#allocation2 + $0x10] sm:$0xf]
      %v2329 = vld [vmem:[#allocation2 + $0x14] sm:$0xf]
      %v2330 = vld [vmem:[#allocation2 + $0x18] sm:$0xf]
      %v2331 = vld [vmem:[#allocation2 + $0x1c] sm:$0xf]
      %v2332 = vld [vmem:[#allocation2 + $0x20] sm:$0xf]
      %v2333 = vld [vmem:[#allocation2 + $0x24] sm:$0xf]
      %v2334 = vld [vmem:[#allocation2 + $0x28] sm:$0xf]
      %v2335 = vld [vmem:[#allocation2 + $0x2c] sm:$0xf]
      %v2336 = vld [vmem:[#allocation2 + $0x30] sm:$0xf]
      %v2337 = vld [vmem:[#allocation2 + $0x34] sm:$0xf]
      %v2338 = vld [vmem:[#allocation2 + $0x38] sm:$0xf]
      %v2339 = vld [vmem:[#allocation2 + $0x3c] sm:$0xf]
      %v2340 = vld [vmem:[#allocation2 + $0x40] sm:$0xf]
      %v2341 = vld [vmem:[#allocation2 + $0x44] sm:$0xf]
      %v2342 = vld [vmem:[#allocation2 + $0x48] sm:$0xf]
      %v2343 = vld [vmem:[#allocation2 + $0x4c] sm:$0xf]
      %v2344 = vld [vmem:[#allocation2 + $0x50] sm:$0xf]
      %v2345 = vld [vmem:[#allocation2 + $0x54] sm:$0xf]
      %v2346 = vld [vmem:[#allocation2 + $0x58] sm:$0xf]
      %v2347 = vld [vmem:[#allocation2 + $0x5c] sm:$0xf]
      %v2348 = vld [vmem:[#allocation2 + $0x60] sm:$0xf]
      %v2349 = vld [vmem:[#allocation2 + $0x64] sm:$0xf]
      %v2350 = vld [vmem:[#allocation2 + $0x68] sm:$0xf]
      %v2351 = vld [vmem:[#allocation2 + $0x6c] sm:$0xf]
      %v2352 = vld [vmem:[#allocation2 + $0x70] sm:$0xf]
      %v2353 = vld [vmem:[#allocation2 + $0x74] sm:$0xf]
      %v2354 = vld [vmem:[#allocation2 + $0x78] sm:$0xf]
      %v2355 = vld [vmem:[#allocation2 + $0x7c] sm:$0xf]
      %v2356 = vld [vmem:[#allocation2 + $0x80] sm:$0xf]
      %v2357 = vld [vmem:[#allocation2 + $0x84] sm:$0xf]
      %v2358 = vld [vmem:[#allocation2 + $0x88] sm:$0xf]
      %v2359 = vld [vmem:[#allocation2 + $0x8c] sm:$0xf]
      %v2360 = vld [vmem:[#allocation2 + $0x90] sm:$0xf]
      %v2361 = vld [vmem:[#allocation2 + $0x94] sm:$0xf]
      %v2362 = vld [vmem:[#allocation2 + $0x98] sm:$0x1]
      %s2363 = scalar_lea.vmem %s2, 48
      %v2364 = vld [vmem:[%s2363] sm:$0xf]
      %v2365 = vld [vmem:[%s2363 + $0x4] sm:$0xf]
      %v2366 = vld [vmem:[%s2363 + $0x8] sm:$0xf]
      %v2367 = vld [vmem:[%s2363 + $0xc] sm:$0xf]
      %v2405 = vunpack.c.l.b16 %v2326
      %v2406 = vunpack.c.l.b16 %v2327
      %v2407 = vunpack.c.l.b16 %v2328
      %v2408 = vunpack.c.l.b16 %v2329
      %v2409 = vunpack.c.l.b16 %v2330
      %v2410 = vunpack.c.l.b16 %v2331
      %v2411 = vunpack.c.l.b16 %v2332
      %v2412 = vunpack.c.l.b16 %v2333
      %v2413 = vunpack.c.l.b16 %v2334
      %v2414 = vunpack.c.l.b16 %v2335
      %v2415 = vunpack.c.l.b16 %v2336
      %v2416 = vunpack.c.l.b16 %v2337
      %v2417 = vunpack.c.l.b16 %v2338
      %v2418 = vunpack.c.l.b16 %v2339
      %v2419 = vunpack.c.l.b16 %v2340
      %v2420 = vunpack.c.l.b16 %v2341
      %v2421 = vunpack.c.l.b16 %v2342
      %v2422 = vunpack.c.l.b16 %v2343
      %v2423 = vunpack.c.l.b16 %v2344
      %v2424 = vunpack.c.l.b16 %v2345
      %v2425 = vunpack.c.l.b16 %v2346
      %v2426 = vunpack.c.l.b16 %v2347
      %v2427 = vunpack.c.l.b16 %v2348
      %v2428 = vunpack.c.l.b16 %v2349
      %v2429 = vunpack.c.l.b16 %v2350
      %v2430 = vunpack.c.l.b16 %v2351
      %v2431 = vunpack.c.l.b16 %v2352
      %v2432 = vunpack.c.l.b16 %v2353
      %v2433 = vunpack.c.l.b16 %v2354
      %v2434 = vunpack.c.l.b16 %v2355
      %v2435 = vunpack.c.l.b16 %v2356
      %v2436 = vunpack.c.l.b16 %v2357
      %v2437 = vunpack.c.l.b16 %v2358
      %v2438 = vunpack.c.l.b16 %v2359
      %v2439 = vunpack.c.l.b16 %v2360
      %v2440 = vunpack.c.l.b16 %v2361
      %v2441 = vunpack.c.l.b16 %v2362
      %v2442 = vpack.c.b16 %v2406, %v2405
      %v2443 = vpack.c.b16 %v2408, %v2407
      %v2444 = vpack.c.b16 %v2410, %v2409
      %v2445 = vpack.c.b16 %v2412, %v2411
      %v2446 = vpack.c.b16 %v2414, %v2413
      %v2447 = vpack.c.b16 %v2416, %v2415
      %v2448 = vpack.c.b16 %v2418, %v2417
      %v2449 = vpack.c.b16 %v2420, %v2419
      %v2450 = vpack.c.b16 %v2422, %v2421
      %v2451 = vpack.c.b16 %v2424, %v2423
      %v2452 = vpack.c.b16 %v2426, %v2425
      %v2453 = vpack.c.b16 %v2428, %v2427
      %v2454 = vpack.c.b16 %v2430, %v2429
      %v2455 = vpack.c.b16 %v2432, %v2431
      %v2456 = vpack.c.b16 %v2434, %v2433
      %v2457 = vpack.c.b16 %v2436, %v2435
      %v2458 = vpack.c.b16 %v2438, %v2437
      %v2459 = vpack.c.b16 %v2440, %v2439
      %v2460 = vpack.c.b16 %v2441, %v2441
      %v2461 = vrot.slane %v2442, 1
      %v2462 = vrot.slane %v2443, 1
      %v2463 = vsel %vm2009, %v2461, %v2462
      %v2464 = vrot.slane %v2444, 1
      %v2465 = vsel %vm2009, %v2462, %v2464
      %v2466 = vrot.slane %v2445, 1
      %v2467 = vsel %vm2009, %v2464, %v2466
      %v2468 = vrot.slane %v2446, 1
      %v2469 = vsel %vm2009, %v2466, %v2468
      %v2470 = vrot.slane %v2447, 1
      %v2471 = vsel %vm2009, %v2468, %v2470
      %v2472 = vrot.slane %v2448, 1
      %v2473 = vsel %vm2009, %v2470, %v2472
      %v2474 = vrot.slane %v2449, 1
      %v2475 = vsel %vm2009, %v2472, %v2474
      %v2476 = vrot.slane %v2450, 1
      %v2477 = vsel %vm2009, %v2474, %v2476
      %v2478 = vrot.slane %v2451, 1
      %v2479 = vsel %vm2009, %v2476, %v2478
      %v2480 = vrot.slane %v2452, 1
      %v2481 = vsel %vm2009, %v2478, %v2480
      %v2482 = vrot.slane %v2453, 1
      %v2483 = vsel %vm2009, %v2480, %v2482
      %v2484 = vrot.slane %v2454, 1
      %v2485 = vsel %vm2009, %v2482, %v2484
      %v2486 = vrot.slane %v2455, 1
      %v2487 = vsel %vm2009, %v2484, %v2486
      %v2488 = vrot.slane %v2456, 1
      %v2489 = vsel %vm2009, %v2486, %v2488
      %v2490 = vrot.slane %v2457, 1
      %v2491 = vsel %vm2009, %v2488, %v2490
      %v2492 = vrot.slane %v2458, 1
      %v2493 = vsel %vm2009, %v2490, %v2492
      %v2494 = vrot.slane %v2459, 1
      %v2495 = vsel %vm2009, %v2492, %v2494
      %v2496 = vrot.slane %v2460, 1
      %v2497 = vsel %vm2009, %v2494, %v2496
      %v2502 = vunpack.c.l.b16 %v2364
      %v2503 = vunpack.c.l.b16 %v2365
      %v2504 = vunpack.c.l.b16 %v2366
      %v2505 = vunpack.c.l.b16 %v2367
      %v2506 = vpack.c.b16 %v2503, %v2502
      %v2507 = vpack.c.b16 %v2505, %v2504
      %v2511 = vsel %vm1543, %v2463, 0
      %v2514 = vsel %vm1543, %v2465, 0
      %v2517 = vsel %vm1543, %v2467, 0
      %v2520 = vsel %vm1543, %v2469, 0
      %v2523 = vsel %vm1543, %v2471, 0
      %v2526 = vsel %vm1543, %v2473, 0
      %v2529 = vsel %vm1543, %v2475, 0
      %v2532 = vsel %vm1543, %v2477, 0
      %v2535 = vsel %vm1543, %v2479, 0
      %v2538 = vsel %vm1543, %v2481, 0
      %v2541 = vsel %vm1543, %v2483, 0
      %v2544 = vsel %vm1543, %v2485, 0
      %v2547 = vsel %vm1543, %v2487, 0
      %v2550 = vsel %vm1543, %v2489, 0
      %v2553 = vsel %vm1543, %v2491, 0
      %v2556 = vsel %vm1543, %v2493, 0
      %v2559 = vsel %vm1543, %v2495, 0
      %v2562 = vsel %vm1543, %v2497, 0
      %2564 = vmatprep.subr.bf16.mxu0 0
      %2565 = vmatpush1.bf16.msra.mxu0 0
      %2566 = vmatprep.subr.bf16.mxu0 0
      %2567 = vmatpush1.bf16.msra.mxu0 0
      %2568 = vmatprep.subr.bf16.mxu0 0
      %2569 = vmatpush1.bf16.msra.mxu0 0
      %2570 = vmatprep.subr.bf16.mxu0 0
      %2571 = vmatpush1.bf16.msra.mxu0 0
      %2572 = vmatprep.subr.bf16.mxu0 0
      %2573 = vmatpush1.bf16.msra.mxu0 0
      %2574 = vmatprep.subr.bf16.mxu0 0
      %2575 = vmatpush1.bf16.msra.mxu0 0
      %2576 = vmatprep.subr.bf16.mxu0 0
      %2577 = vmatpush1.bf16.msra.mxu0 %v2507
      %2578 = vmatprep.subr.bf16.mxu0 0
      %2579 = vmatpush1.bf16.msra.mxu0 %v2506
      %2580 = vmatprep.subr.bf16.mxu0 0
      %2581 = vmatpush2.bf16.msra.mxu0 0
      %2582 = vmatprep.subr.bf16.mxu0 0
      %2583 = vmatpush2.bf16.msra.mxu0 0
      %2584 = vmatprep.subr.bf16.mxu0 0
      %2585 = vmatpush2.bf16.msra.mxu0 0
      %2586 = vmatprep.subr.bf16.mxu0 0
      %2587 = vmatpush2.bf16.msra.mxu0 0
      %2588 = vmatprep.subr.bf16.mxu0 0
      %2589 = vmatpush2.bf16.msra.mxu0 0
      %2590 = vmatprep.subr.bf16.mxu0 0
      %2591 = vmatpush2.bf16.msra.mxu0 0
      %2592 = vmatprep.subr.bf16.mxu0 0
      %2593 = vmatpush2.bf16.msra.mxu0 0
      %2594 = vmatprep.subr.bf16.mxu0 0
      %2595 = vmatpush2.bf16.msra.mxu0 0
      %2596 = vmatprep.mubr.bf16.mxu0 0
      %2597 = vmatmul.mubr.bf16.gmra.mxu0 %v2511
      %v2598 = vpop.f32.mrf.mxu0
      %v2599 = vadd.f32 0.0, %v2598
      %v2600 = vpop.f32.mrf.mxu0
      %v2601 = vpop.f32.mrf.mxu0
      %v2602 = vadd.f32 0.0, %v2601
      %v2603 = vpop.f32.mrf.mxu0
      %2604 = vmatprep.mubr.bf16.mxu0 0
      %2605 = vmatmul.mubr.bf16.gmra.mxu0 %v2514
      %v2606 = vpop.f32.mrf.mxu0
      %v2607 = vadd.f32 0.0, %v2606
      %v2608 = vpop.f32.mrf.mxu0
      %v2609 = vpop.f32.mrf.mxu0
      %v2610 = vadd.f32 0.0, %v2609
      %v2611 = vpop.f32.mrf.mxu0
      %2612 = vmatprep.mubr.bf16.mxu0 0
      %2613 = vmatmul.mubr.bf16.gmra.mxu0 %v2517
      %v2614 = vpop.f32.mrf.mxu0
      %v2615 = vadd.f32 0.0, %v2614
      %v2616 = vpop.f32.mrf.mxu0
      %v2617 = vpop.f32.mrf.mxu0
      %v2618 = vadd.f32 0.0, %v2617
      %v2619 = vpop.f32.mrf.mxu0
      %2620 = vmatprep.mubr.bf16.mxu0 0
      %2621 = vmatmul.mubr.bf16.gmra.mxu0 %v2520
      %v2622 = vpop.f32.mrf.mxu0
      %v2623 = vadd.f32 0.0, %v2622
      %v2624 = vpop.f32.mrf.mxu0
      %v2625 = vpop.f32.mrf.mxu0
      %v2626 = vadd.f32 0.0, %v2625
      %v2627 = vpop.f32.mrf.mxu0
      %2628 = vmatprep.mubr.bf16.mxu0 0
      %2629 = vmatmul.mubr.bf16.gmra.mxu0 %v2523
      %v2630 = vpop.f32.mrf.mxu0
      %v2631 = vadd.f32 0.0, %v2630
      %v2632 = vpop.f32.mrf.mxu0
      %v2633 = vpop.f32.mrf.mxu0
      %v2634 = vadd.f32 0.0, %v2633
      %v2635 = vpop.f32.mrf.mxu0
      %2636 = vmatprep.mubr.bf16.mxu0 0
      %2637 = vmatmul.mubr.bf16.gmra.mxu0 %v2526
      %v2638 = vpop.f32.mrf.mxu0
      %v2639 = vadd.f32 0.0, %v2638
      %v2640 = vpop.f32.mrf.mxu0
      %v2641 = vpop.f32.mrf.mxu0
      %v2642 = vadd.f32 0.0, %v2641
      %v2643 = vpop.f32.mrf.mxu0
      %2644 = vmatprep.mubr.bf16.mxu0 0
      %2645 = vmatmul.mubr.bf16.gmra.mxu0 %v2529
      %v2646 = vpop.f32.mrf.mxu0
      %v2647 = vadd.f32 0.0, %v2646
      %v2648 = vpop.f32.mrf.mxu0
      %v2649 = vpop.f32.mrf.mxu0
      %v2650 = vadd.f32 0.0, %v2649
      %v2651 = vpop.f32.mrf.mxu0
      %2652 = vmatprep.mubr.bf16.mxu0 0
      %2653 = vmatmul.mubr.bf16.gmra.mxu0 %v2532
      %v2654 = vpop.f32.mrf.mxu0
      %v2655 = vadd.f32 0.0, %v2654
      %v2656 = vpop.f32.mrf.mxu0
      %v2657 = vpop.f32.mrf.mxu0
      %v2658 = vadd.f32 0.0, %v2657
      %v2659 = vpop.f32.mrf.mxu0
      %2660 = vmatprep.mubr.bf16.mxu0 0
      %2661 = vmatmul.mubr.bf16.gmra.mxu0 %v2535
      %v2662 = vpop.f32.mrf.mxu0
      %v2663 = vadd.f32 0.0, %v2662
      %v2664 = vpop.f32.mrf.mxu0
      %v2665 = vpop.f32.mrf.mxu0
      %v2666 = vadd.f32 0.0, %v2665
      %v2667 = vpop.f32.mrf.mxu0
      %2668 = vmatprep.mubr.bf16.mxu0 0
      %2669 = vmatmul.mubr.bf16.gmra.mxu0 %v2538
      %v2670 = vpop.f32.mrf.mxu0
      %v2671 = vadd.f32 0.0, %v2670
      %v2672 = vpop.f32.mrf.mxu0
      %v2673 = vpop.f32.mrf.mxu0
      %v2674 = vadd.f32 0.0, %v2673
      %v2675 = vpop.f32.mrf.mxu0
      %2676 = vmatprep.mubr.bf16.mxu0 0
      %2677 = vmatmul.mubr.bf16.gmra.mxu0 %v2541
      %v2678 = vpop.f32.mrf.mxu0
      %v2679 = vadd.f32 0.0, %v2678
      %v2680 = vpop.f32.mrf.mxu0
      %v2681 = vpop.f32.mrf.mxu0
      %v2682 = vadd.f32 0.0, %v2681
      %v2683 = vpop.f32.mrf.mxu0
      %2684 = vmatprep.mubr.bf16.mxu0 0
      %2685 = vmatmul.mubr.bf16.gmra.mxu0 %v2544
      %v2686 = vpop.f32.mrf.mxu0
      %v2687 = vadd.f32 0.0, %v2686
      %v2688 = vpop.f32.mrf.mxu0
      %v2689 = vpop.f32.mrf.mxu0
      %v2690 = vadd.f32 0.0, %v2689
      %v2691 = vpop.f32.mrf.mxu0
      %2692 = vmatprep.mubr.bf16.mxu0 0
      %2693 = vmatmul.mubr.bf16.gmra.mxu0 %v2547
      %v2694 = vpop.f32.mrf.mxu0
      %v2695 = vadd.f32 0.0, %v2694
      %v2696 = vpop.f32.mrf.mxu0
      %v2697 = vpop.f32.mrf.mxu0
      %v2698 = vadd.f32 0.0, %v2697
      %v2699 = vpop.f32.mrf.mxu0
      %2700 = vmatprep.mubr.bf16.mxu0 0
      %2701 = vmatmul.mubr.bf16.gmra.mxu0 %v2550
      %v2702 = vpop.f32.mrf.mxu0
      %v2703 = vadd.f32 0.0, %v2702
      %v2704 = vpop.f32.mrf.mxu0
      %v2705 = vpop.f32.mrf.mxu0
      %v2706 = vadd.f32 0.0, %v2705
      %v2707 = vpop.f32.mrf.mxu0
      %2708 = vmatprep.mubr.bf16.mxu0 0
      %2709 = vmatmul.mubr.bf16.gmra.mxu0 %v2553
      %v2710 = vpop.f32.mrf.mxu0
      %v2711 = vadd.f32 0.0, %v2710
      %v2712 = vpop.f32.mrf.mxu0
      %v2713 = vpop.f32.mrf.mxu0
      %v2714 = vadd.f32 0.0, %v2713
      %v2715 = vpop.f32.mrf.mxu0
      %2716 = vmatprep.mubr.bf16.mxu0 0
      %2717 = vmatmul.mubr.bf16.gmra.mxu0 %v2556
      %v2718 = vpop.f32.mrf.mxu0
      %v2719 = vadd.f32 0.0, %v2718
      %v2720 = vpop.f32.mrf.mxu0
      %v2721 = vpop.f32.mrf.mxu0
      %v2722 = vadd.f32 0.0, %v2721
      %v2723 = vpop.f32.mrf.mxu0
      %2724 = vmatprep.mubr.bf16.mxu0 0
      %2725 = vmatmul.mubr.bf16.gmra.mxu0 %v2559
      %v2726 = vpop.f32.mrf.mxu0
      %v2727 = vadd.f32 0.0, %v2726
      %v2728 = vpop.f32.mrf.mxu0
      %v2729 = vpop.f32.mrf.mxu0
      %v2730 = vadd.f32 0.0, %v2729
      %v2731 = vpop.f32.mrf.mxu0
      %2732 = vmatprep.mubr.bf16.mxu0 0
      %2733 = vmatmul.mubr.bf16.gmra.mxu0 %v2562
      %v2734 = vpop.f32.mrf.mxu0
      %v2735 = vadd.f32 0.0, %v2734
      %v2736 = vpop.f32.mrf.mxu0
      %v2737 = vpop.f32.mrf.mxu0
      %v2738 = vadd.f32 0.0, %v2737
      %v2739 = vpop.f32.mrf.mxu0
      %2740 = vdwg.mxu0
      %v2741 = vadd.f32 %v2290, %v2599
      %v2742 = vadd.f32 %v2291, %v2602
      %v2743 = vadd.f32 %v2292, %v2607
      %v2744 = vadd.f32 %v2293, %v2610
      %v2745 = vadd.f32 %v2294, %v2615
      %v2746 = vadd.f32 %v2295, %v2618
      %v2747 = vadd.f32 %v2296, %v2623
      %v2748 = vadd.f32 %v2297, %v2626
      %v2749 = vadd.f32 %v2298, %v2631
      %v2750 = vadd.f32 %v2299, %v2634
      %v2751 = vadd.f32 %v2300, %v2639
      %v2752 = vadd.f32 %v2301, %v2642
      %v2753 = vadd.f32 %v2302, %v2647
      %v2754 = vadd.f32 %v2303, %v2650
      %v2755 = vadd.f32 %v2304, %v2655
      %v2756 = vadd.f32 %v2305, %v2658
      %v2757 = vadd.f32 %v2306, %v2663
      %v2758 = vadd.f32 %v2307, %v2666
      %v2759 = vadd.f32 %v2308, %v2671
      %v2760 = vadd.f32 %v2309, %v2674
      %v2761 = vadd.f32 %v2310, %v2679
      %v2762 = vadd.f32 %v2311, %v2682
      %v2763 = vadd.f32 %v2312, %v2687
      %v2764 = vadd.f32 %v2313, %v2690
      %v2765 = vadd.f32 %v2314, %v2695
      %v2766 = vadd.f32 %v2315, %v2698
      %v2767 = vadd.f32 %v2316, %v2703
      %v2768 = vadd.f32 %v2317, %v2706
      %v2769 = vadd.f32 %v2318, %v2711
      %v2770 = vadd.f32 %v2319, %v2714
      %v2771 = vadd.f32 %v2320, %v2719
      %v2772 = vadd.f32 %v2321, %v2722
      %v2773 = vadd.f32 %v2322, %v2727
      %v2774 = vadd.f32 %v2323, %v2730
      %v2775 = vadd.f32 %v2324, %v2735
      %v2776 = vadd.f32 %v2325, %v2738
      %v2777 = vld [vmem:[#allocation2 + $0x98] sm:$0x3]
      %s2778 = scalar_lea.vmem %s2, 64
      %v2779 = vld [vmem:[%s2778] sm:$0xf]
      %v2780 = vld [vmem:[%s2778 + $0x4] sm:$0xf]
      %v2781 = vld [vmem:[%s2778 + $0x8] sm:$0xf]
      %v2782 = vld [vmem:[%s2778 + $0xc] sm:$0xf]
      %v2784 = vunpack.c.l.b16 %v2777
      %v2785 = vpack.c.b16 %v2784, %v2784
      %vm2786 = vsmask.f32 6400
      %v2788 = vshrl.u32 %v2442, 16
      %v2790 = vrot.slane %v2788, 1
      %v2791 = vshll.u32 %v2442, 16
      %v2793 = vrot.slane %v2791, 2
      %v2794 = vor.u32 %v2790, %v2793
      %v2796 = vshrl.u32 %v2443, 16
      %v2798 = vrot.slane %v2796, 1
      %v2799 = vshll.u32 %v2443, 16
      %v2801 = vrot.slane %v2799, 2
      %v2802 = vor.u32 %v2798, %v2801
      %v2803 = vsel %vm2786, %v2794, %v2802
      %v2805 = vshrl.u32 %v2444, 16
      %v2807 = vrot.slane %v2805, 1
      %v2808 = vshll.u32 %v2444, 16
      %v2810 = vrot.slane %v2808, 2
      %v2811 = vor.u32 %v2807, %v2810
      %v2812 = vsel %vm2786, %v2802, %v2811
      %v2814 = vshrl.u32 %v2445, 16
      %v2816 = vrot.slane %v2814, 1
      %v2817 = vshll.u32 %v2445, 16
      %v2819 = vrot.slane %v2817, 2
      %v2820 = vor.u32 %v2816, %v2819
      %v2821 = vsel %vm2786, %v2811, %v2820
      %v2823 = vshrl.u32 %v2446, 16
      %v2825 = vrot.slane %v2823, 1
      %v2826 = vshll.u32 %v2446, 16
      %v2828 = vrot.slane %v2826, 2
      %v2829 = vor.u32 %v2825, %v2828
      %v2830 = vsel %vm2786, %v2820, %v2829
      %v2832 = vshrl.u32 %v2447, 16
      %v2834 = vrot.slane %v2832, 1
      %v2835 = vshll.u32 %v2447, 16
      %v2837 = vrot.slane %v2835, 2
      %v2838 = vor.u32 %v2834, %v2837
      %v2839 = vsel %vm2786, %v2829, %v2838
      %v2841 = vshrl.u32 %v2448, 16
      %v2843 = vrot.slane %v2841, 1
      %v2844 = vshll.u32 %v2448, 16
      %v2846 = vrot.slane %v2844, 2
      %v2847 = vor.u32 %v2843, %v2846
      %v2848 = vsel %vm2786, %v2838, %v2847
      %v2850 = vshrl.u32 %v2449, 16
      %v2852 = vrot.slane %v2850, 1
      %v2853 = vshll.u32 %v2449, 16
      %v2855 = vrot.slane %v2853, 2
      %v2856 = vor.u32 %v2852, %v2855
      %v2857 = vsel %vm2786, %v2847, %v2856
      %v2859 = vshrl.u32 %v2450, 16
      %v2861 = vrot.slane %v2859, 1
      %v2862 = vshll.u32 %v2450, 16
      %v2864 = vrot.slane %v2862, 2
      %v2865 = vor.u32 %v2861, %v2864
      %v2866 = vsel %vm2786, %v2856, %v2865
      %v2868 = vshrl.u32 %v2451, 16
      %v2870 = vrot.slane %v2868, 1
      %v2871 = vshll.u32 %v2451, 16
      %v2873 = vrot.slane %v2871, 2
      %v2874 = vor.u32 %v2870, %v2873
      %v2875 = vsel %vm2786, %v2865, %v2874
      %v2877 = vshrl.u32 %v2452, 16
      %v2879 = vrot.slane %v2877, 1
      %v2880 = vshll.u32 %v2452, 16
      %v2882 = vrot.slane %v2880, 2
      %v2883 = vor.u32 %v2879, %v2882
      %v2884 = vsel %vm2786, %v2874, %v2883
      %v2886 = vshrl.u32 %v2453, 16
      %v2888 = vrot.slane %v2886, 1
      %v2889 = vshll.u32 %v2453, 16
      %v2891 = vrot.slane %v2889, 2
      %v2892 = vor.u32 %v2888, %v2891
      %v2893 = vsel %vm2786, %v2883, %v2892
      %v2895 = vshrl.u32 %v2454, 16
      %v2897 = vrot.slane %v2895, 1
      %v2898 = vshll.u32 %v2454, 16
      %v2900 = vrot.slane %v2898, 2
      %v2901 = vor.u32 %v2897, %v2900
      %v2902 = vsel %vm2786, %v2892, %v2901
      %v2904 = vshrl.u32 %v2455, 16
      %v2906 = vrot.slane %v2904, 1
      %v2907 = vshll.u32 %v2455, 16
      %v2909 = vrot.slane %v2907, 2
      %v2910 = vor.u32 %v2906, %v2909
      %v2911 = vsel %vm2786, %v2901, %v2910
      %v2913 = vshrl.u32 %v2456, 16
      %v2915 = vrot.slane %v2913, 1
      %v2916 = vshll.u32 %v2456, 16
      %v2918 = vrot.slane %v2916, 2
      %v2919 = vor.u32 %v2915, %v2918
      %v2920 = vsel %vm2786, %v2910, %v2919
      %v2922 = vshrl.u32 %v2457, 16
      %v2924 = vrot.slane %v2922, 1
      %v2925 = vshll.u32 %v2457, 16
      %v2927 = vrot.slane %v2925, 2
      %v2928 = vor.u32 %v2924, %v2927
      %v2929 = vsel %vm2786, %v2919, %v2928
      %v2931 = vshrl.u32 %v2458, 16
      %v2933 = vrot.slane %v2931, 1
      %v2934 = vshll.u32 %v2458, 16
      %v2936 = vrot.slane %v2934, 2
      %v2937 = vor.u32 %v2933, %v2936
      %v2938 = vsel %vm2786, %v2928, %v2937
      %v2940 = vshrl.u32 %v2459, 16
      %v2942 = vrot.slane %v2940, 1
      %v2943 = vshll.u32 %v2459, 16
      %v2945 = vrot.slane %v2943, 2
      %v2946 = vor.u32 %v2942, %v2945
      %v2947 = vsel %vm2786, %v2937, %v2946
      %v2949 = vshrl.u32 %v2785, 16
      %v2951 = vrot.slane %v2949, 1
      %v2952 = vshll.u32 %v2785, 16
      %v2954 = vrot.slane %v2952, 2
      %v2955 = vor.u32 %v2951, %v2954
      %v2956 = vsel %vm2786, %v2946, %v2955
      %v2961 = vunpack.c.l.b16 %v2779
      %v2962 = vunpack.c.l.b16 %v2780
      %v2963 = vunpack.c.l.b16 %v2781
      %v2964 = vunpack.c.l.b16 %v2782
      %v2965 = vpack.c.b16 %v2962, %v2961
      %v2966 = vpack.c.b16 %v2964, %v2963
      %v2970 = vsel %vm1543, %v2803, 0
      %v2973 = vsel %vm1543, %v2812, 0
      %v2976 = vsel %vm1543, %v2821, 0
      %v2979 = vsel %vm1543, %v2830, 0
      %v2982 = vsel %vm1543, %v2839, 0
      %v2985 = vsel %vm1543, %v2848, 0
      %v2988 = vsel %vm1543, %v2857, 0
      %v2991 = vsel %vm1543, %v2866, 0
      %v2994 = vsel %vm1543, %v2875, 0
      %v2997 = vsel %vm1543, %v2884, 0
      %v3000 = vsel %vm1543, %v2893, 0
      %v3003 = vsel %vm1543, %v2902, 0
      %v3006 = vsel %vm1543, %v2911, 0
      %v3009 = vsel %vm1543, %v2920, 0
      %v3012 = vsel %vm1543, %v2929, 0
      %v3015 = vsel %vm1543, %v2938, 0
      %v3018 = vsel %vm1543, %v2947, 0
      %v3021 = vsel %vm1543, %v2956, 0
      %3023 = vmatprep.subr.bf16.mxu0 0
      %3024 = vmatpush1.bf16.msra.mxu0 0
      %3025 = vmatprep.subr.bf16.mxu0 0
      %3026 = vmatpush1.bf16.msra.mxu0 0
      %3027 = vmatprep.subr.bf16.mxu0 0
      %3028 = vmatpush1.bf16.msra.mxu0 0
      %3029 = vmatprep.subr.bf16.mxu0 0
      %3030 = vmatpush1.bf16.msra.mxu0 0
      %3031 = vmatprep.subr.bf16.mxu0 0
      %3032 = vmatpush1.bf16.msra.mxu0 0
      %3033 = vmatprep.subr.bf16.mxu0 0
      %3034 = vmatpush1.bf16.msra.mxu0 0
      %3035 = vmatprep.subr.bf16.mxu0 0
      %3036 = vmatpush1.bf16.msra.mxu0 %v2966
      %3037 = vmatprep.subr.bf16.mxu0 0
      %3038 = vmatpush1.bf16.msra.mxu0 %v2965
      %3039 = vmatprep.subr.bf16.mxu0 0
      %3040 = vmatpush2.bf16.msra.mxu0 0
      %3041 = vmatprep.subr.bf16.mxu0 0
      %3042 = vmatpush2.bf16.msra.mxu0 0
      %3043 = vmatprep.subr.bf16.mxu0 0
      %3044 = vmatpush2.bf16.msra.mxu0 0
      %3045 = vmatprep.subr.bf16.mxu0 0
      %3046 = vmatpush2.bf16.msra.mxu0 0
      %3047 = vmatprep.subr.bf16.mxu0 0
      %3048 = vmatpush2.bf16.msra.mxu0 0
      %3049 = vmatprep.subr.bf16.mxu0 0
      %3050 = vmatpush2.bf16.msra.mxu0 0
      %3051 = vmatprep.subr.bf16.mxu0 0
      %3052 = vmatpush2.bf16.msra.mxu0 0
      %3053 = vmatprep.subr.bf16.mxu0 0
      %3054 = vmatpush2.bf16.msra.mxu0 0
      %3055 = vmatprep.mubr.bf16.mxu0 0
      %3056 = vmatmul.mubr.bf16.gmra.mxu0 %v2970
      %v3057 = vpop.f32.mrf.mxu0
      %v3058 = vadd.f32 0.0, %v3057
      %v3059 = vpop.f32.mrf.mxu0
      %v3060 = vpop.f32.mrf.mxu0
      %v3061 = vadd.f32 0.0, %v3060
      %v3062 = vpop.f32.mrf.mxu0
      %3063 = vmatprep.mubr.bf16.mxu0 0
      %3064 = vmatmul.mubr.bf16.gmra.mxu0 %v2973
      %v3065 = vpop.f32.mrf.mxu0
      %v3066 = vadd.f32 0.0, %v3065
      %v3067 = vpop.f32.mrf.mxu0
      %v3068 = vpop.f32.mrf.mxu0
      %v3069 = vadd.f32 0.0, %v3068
      %v3070 = vpop.f32.mrf.mxu0
      %3071 = vmatprep.mubr.bf16.mxu0 0
      %3072 = vmatmul.mubr.bf16.gmra.mxu0 %v2976
      %v3073 = vpop.f32.mrf.mxu0
      %v3074 = vadd.f32 0.0, %v3073
      %v3075 = vpop.f32.mrf.mxu0
      %v3076 = vpop.f32.mrf.mxu0
      %v3077 = vadd.f32 0.0, %v3076
      %v3078 = vpop.f32.mrf.mxu0
      %3079 = vmatprep.mubr.bf16.mxu0 0
      %3080 = vmatmul.mubr.bf16.gmra.mxu0 %v2979
      %v3081 = vpop.f32.mrf.mxu0
      %v3082 = vadd.f32 0.0, %v3081
      %v3083 = vpop.f32.mrf.mxu0
      %v3084 = vpop.f32.mrf.mxu0
      %v3085 = vadd.f32 0.0, %v3084
      %v3086 = vpop.f32.mrf.mxu0
      %3087 = vmatprep.mubr.bf16.mxu0 0
      %3088 = vmatmul.mubr.bf16.gmra.mxu0 %v2982
      %v3089 = vpop.f32.mrf.mxu0
      %v3090 = vadd.f32 0.0, %v3089
      %v3091 = vpop.f32.mrf.mxu0
      %v3092 = vpop.f32.mrf.mxu0
      %v3093 = vadd.f32 0.0, %v3092
      %v3094 = vpop.f32.mrf.mxu0
      %3095 = vmatprep.mubr.bf16.mxu0 0
      %3096 = vmatmul.mubr.bf16.gmra.mxu0 %v2985
      %v3097 = vpop.f32.mrf.mxu0
      %v3098 = vadd.f32 0.0, %v3097
      %v3099 = vpop.f32.mrf.mxu0
      %v3100 = vpop.f32.mrf.mxu0
      %v3101 = vadd.f32 0.0, %v3100
      %v3102 = vpop.f32.mrf.mxu0
      %3103 = vmatprep.mubr.bf16.mxu0 0
      %3104 = vmatmul.mubr.bf16.gmra.mxu0 %v2988
      %v3105 = vpop.f32.mrf.mxu0
      %v3106 = vadd.f32 0.0, %v3105
      %v3107 = vpop.f32.mrf.mxu0
      %v3108 = vpop.f32.mrf.mxu0
      %v3109 = vadd.f32 0.0, %v3108
      %v3110 = vpop.f32.mrf.mxu0
      %3111 = vmatprep.mubr.bf16.mxu0 0
      %3112 = vmatmul.mubr.bf16.gmra.mxu0 %v2991
      %v3113 = vpop.f32.mrf.mxu0
      %v3114 = vadd.f32 0.0, %v3113
      %v3115 = vpop.f32.mrf.mxu0
      %v3116 = vpop.f32.mrf.mxu0
      %v3117 = vadd.f32 0.0, %v3116
      %v3118 = vpop.f32.mrf.mxu0
      %3119 = vmatprep.mubr.bf16.mxu0 0
      %3120 = vmatmul.mubr.bf16.gmra.mxu0 %v2994
      %v3121 = vpop.f32.mrf.mxu0
      %v3122 = vadd.f32 0.0, %v3121
      %v3123 = vpop.f32.mrf.mxu0
      %v3124 = vpop.f32.mrf.mxu0
      %v3125 = vadd.f32 0.0, %v3124
      %v3126 = vpop.f32.mrf.mxu0
      %3127 = vmatprep.mubr.bf16.mxu0 0
      %3128 = vmatmul.mubr.bf16.gmra.mxu0 %v2997
      %v3129 = vpop.f32.mrf.mxu0
      %v3130 = vadd.f32 0.0, %v3129
      %v3131 = vpop.f32.mrf.mxu0
      %v3132 = vpop.f32.mrf.mxu0
      %v3133 = vadd.f32 0.0, %v3132
      %v3134 = vpop.f32.mrf.mxu0
      %3135 = vmatprep.mubr.bf16.mxu0 0
      %3136 = vmatmul.mubr.bf16.gmra.mxu0 %v3000
      %v3137 = vpop.f32.mrf.mxu0
      %v3138 = vadd.f32 0.0, %v3137
      %v3139 = vpop.f32.mrf.mxu0
      %v3140 = vpop.f32.mrf.mxu0
      %v3141 = vadd.f32 0.0, %v3140
      %v3142 = vpop.f32.mrf.mxu0
      %3143 = vmatprep.mubr.bf16.mxu0 0
      %3144 = vmatmul.mubr.bf16.gmra.mxu0 %v3003
      %v3145 = vpop.f32.mrf.mxu0
      %v3146 = vadd.f32 0.0, %v3145
      %v3147 = vpop.f32.mrf.mxu0
      %v3148 = vpop.f32.mrf.mxu0
      %v3149 = vadd.f32 0.0, %v3148
      %v3150 = vpop.f32.mrf.mxu0
      %3151 = vmatprep.mubr.bf16.mxu0 0
      %3152 = vmatmul.mubr.bf16.gmra.mxu0 %v3006
      %v3153 = vpop.f32.mrf.mxu0
      %v3154 = vadd.f32 0.0, %v3153
      %v3155 = vpop.f32.mrf.mxu0
      %v3156 = vpop.f32.mrf.mxu0
      %v3157 = vadd.f32 0.0, %v3156
      %v3158 = vpop.f32.mrf.mxu0
      %3159 = vmatprep.mubr.bf16.mxu0 0
      %3160 = vmatmul.mubr.bf16.gmra.mxu0 %v3009
      %v3161 = vpop.f32.mrf.mxu0
      %v3162 = vadd.f32 0.0, %v3161
      %v3163 = vpop.f32.mrf.mxu0
      %v3164 = vpop.f32.mrf.mxu0
      %v3165 = vadd.f32 0.0, %v3164
      %v3166 = vpop.f32.mrf.mxu0
      %3167 = vmatprep.mubr.bf16.mxu0 0
      %3168 = vmatmul.mubr.bf16.gmra.mxu0 %v3012
      %v3169 = vpop.f32.mrf.mxu0
      %v3170 = vadd.f32 0.0, %v3169
      %v3171 = vpop.f32.mrf.mxu0
      %v3172 = vpop.f32.mrf.mxu0
      %v3173 = vadd.f32 0.0, %v3172
      %v3174 = vpop.f32.mrf.mxu0
      %3175 = vmatprep.mubr.bf16.mxu0 0
      %3176 = vmatmul.mubr.bf16.gmra.mxu0 %v3015
      %v3177 = vpop.f32.mrf.mxu0
      %v3178 = vadd.f32 0.0, %v3177
      %v3179 = vpop.f32.mrf.mxu0
      %v3180 = vpop.f32.mrf.mxu0
      %v3181 = vadd.f32 0.0, %v3180
      %v3182 = vpop.f32.mrf.mxu0
      %3183 = vmatprep.mubr.bf16.mxu0 0
      %3184 = vmatmul.mubr.bf16.gmra.mxu0 %v3018
      %v3185 = vpop.f32.mrf.mxu0
      %v3186 = vadd.f32 0.0, %v3185
      %v3187 = vpop.f32.mrf.mxu0
      %v3188 = vpop.f32.mrf.mxu0
      %v3189 = vadd.f32 0.0, %v3188
      %v3190 = vpop.f32.mrf.mxu0
      %3191 = vmatprep.mubr.bf16.mxu0 0
      %3192 = vmatmul.mubr.bf16.gmra.mxu0 %v3021
      %v3193 = vpop.f32.mrf.mxu0
      %v3194 = vadd.f32 0.0, %v3193
      %v3195 = vpop.f32.mrf.mxu0
      %v3196 = vpop.f32.mrf.mxu0
      %v3197 = vadd.f32 0.0, %v3196
      %v3198 = vpop.f32.mrf.mxu0
      %3199 = vdwg.mxu0
      %v3200 = vadd.f32 %v2741, %v3058
      %v3201 = vadd.f32 %v2742, %v3061
      %v3202 = vadd.f32 %v2743, %v3066
      %v3203 = vadd.f32 %v2744, %v3069
      %v3204 = vadd.f32 %v2745, %v3074
      %v3205 = vadd.f32 %v2746, %v3077
      %v3206 = vadd.f32 %v2747, %v3082
      %v3207 = vadd.f32 %v2748, %v3085
      %v3208 = vadd.f32 %v2749, %v3090
      %v3209 = vadd.f32 %v2750, %v3093
      %v3210 = vadd.f32 %v2751, %v3098
      %v3211 = vadd.f32 %v2752, %v3101
      %v3212 = vadd.f32 %v2753, %v3106
      %v3213 = vadd.f32 %v2754, %v3109
      %v3214 = vadd.f32 %v2755, %v3114
      %v3215 = vadd.f32 %v2756, %v3117
      %v3216 = vadd.f32 %v2757, %v3122
      %v3217 = vadd.f32 %v2758, %v3125
      %v3218 = vadd.f32 %v2759, %v3130
      %v3219 = vadd.f32 %v2760, %v3133
      %v3220 = vadd.f32 %v2761, %v3138
      %v3221 = vadd.f32 %v2762, %v3141
      %v3222 = vadd.f32 %v2763, %v3146
      %v3223 = vadd.f32 %v2764, %v3149
      %v3224 = vadd.f32 %v2765, %v3154
      %v3225 = vadd.f32 %v2766, %v3157
      %v3226 = vadd.f32 %v2767, %v3162
      %v3227 = vadd.f32 %v2768, %v3165
      %v3228 = vadd.f32 %v2769, %v3170
      %v3229 = vadd.f32 %v2770, %v3173
      %v3230 = vadd.f32 %v2771, %v3178
      %v3231 = vadd.f32 %v2772, %v3181
      %v3232 = vadd.f32 %v2773, %v3186
      %v3233 = vadd.f32 %v2774, %v3189
      %v3234 = vadd.f32 %v2775, %v3194
      %v3235 = vadd.f32 %v2776, %v3197
      %v3236 = vld [vmem:[#allocation2 + $0x8] sm:$0xc]
      %s3237 = scalar_lea.vmem %s2, 80
      %v3238 = vld [vmem:[%s3237] sm:$0xf]
      %v3239 = vld [vmem:[%s3237 + $0x4] sm:$0xf]
      %v3240 = vld [vmem:[%s3237 + $0x8] sm:$0xf]
      %v3241 = vld [vmem:[%s3237 + $0xc] sm:$0xf]
      %v3243 = vunpack.c.l.b16 %v3236
      %v3244 = vpack.c.b16 %v2406, %v3243
      %vm3245 = vcmask 1045504
      %v3246 = vrot.slane %v3244, 2
      %v3247 = vrot.slane %v2443, 2
      %v3248 = vsel %vm3245, %v3246, %v3247
      %v3249 = vrot.slane %v2444, 2
      %v3250 = vsel %vm3245, %v3247, %v3249
      %v3251 = vrot.slane %v2445, 2
      %v3252 = vsel %vm3245, %v3249, %v3251
      %v3253 = vrot.slane %v2446, 2
      %v3254 = vsel %vm3245, %v3251, %v3253
      %v3255 = vrot.slane %v2447, 2
      %v3256 = vsel %vm3245, %v3253, %v3255
      %v3257 = vrot.slane %v2448, 2
      %v3258 = vsel %vm3245, %v3255, %v3257
      %v3259 = vrot.slane %v2449, 2
      %v3260 = vsel %vm3245, %v3257, %v3259
      %v3261 = vrot.slane %v2450, 2
      %v3262 = vsel %vm3245, %v3259, %v3261
      %v3263 = vrot.slane %v2451, 2
      %v3264 = vsel %vm3245, %v3261, %v3263
      %v3265 = vrot.slane %v2452, 2
      %v3266 = vsel %vm3245, %v3263, %v3265
      %v3267 = vrot.slane %v2453, 2
      %v3268 = vsel %vm3245, %v3265, %v3267
      %v3269 = vrot.slane %v2454, 2
      %v3270 = vsel %vm3245, %v3267, %v3269
      %v3271 = vrot.slane %v2455, 2
      %v3272 = vsel %vm3245, %v3269, %v3271
      %v3273 = vrot.slane %v2456, 2
      %v3274 = vsel %vm3245, %v3271, %v3273
      %v3275 = vrot.slane %v2457, 2
      %v3276 = vsel %vm3245, %v3273, %v3275
      %v3277 = vrot.slane %v2458, 2
      %v3278 = vsel %vm3245, %v3275, %v3277
      %v3279 = vrot.slane %v2459, 2
      %v3280 = vsel %vm3245, %v3277, %v3279
      %v3281 = vrot.slane %v2785, 2
      %v3282 = vsel %vm3245, %v3279, %v3281
      %v3287 = vunpack.c.l.b16 %v3238
      %v3288 = vunpack.c.l.b16 %v3239
      %v3289 = vunpack.c.l.b16 %v3240
      %v3290 = vunpack.c.l.b16 %v3241
      %v3291 = vpack.c.b16 %v3288, %v3287
      %v3292 = vpack.c.b16 %v3290, %v3289
      %v3296 = vsel %vm1543, %v3248, 0
      %v3299 = vsel %vm1543, %v3250, 0
      %v3302 = vsel %vm1543, %v3252, 0
      %v3305 = vsel %vm1543, %v3254, 0
      %v3308 = vsel %vm1543, %v3256, 0
      %v3311 = vsel %vm1543, %v3258, 0
      %v3314 = vsel %vm1543, %v3260, 0
      %v3317 = vsel %vm1543, %v3262, 0
      %v3320 = vsel %vm1543, %v3264, 0
      %v3323 = vsel %vm1543, %v3266, 0
      %v3326 = vsel %vm1543, %v3268, 0
      %v3329 = vsel %vm1543, %v3270, 0
      %v3332 = vsel %vm1543, %v3272, 0
      %v3335 = vsel %vm1543, %v3274, 0
      %v3338 = vsel %vm1543, %v3276, 0
      %v3341 = vsel %vm1543, %v3278, 0
      %v3344 = vsel %vm1543, %v3280, 0
      %v3347 = vsel %vm1543, %v3282, 0
      %3349 = vmatprep.subr.bf16.mxu0 0
      %3350 = vmatpush1.bf16.msra.mxu0 0
      %3351 = vmatprep.subr.bf16.mxu0 0
      %3352 = vmatpush1.bf16.msra.mxu0 0
      %3353 = vmatprep.subr.bf16.mxu0 0
      %3354 = vmatpush1.bf16.msra.mxu0 0
      %3355 = vmatprep.subr.bf16.mxu0 0
      %3356 = vmatpush1.bf16.msra.mxu0 0
      %3357 = vmatprep.subr.bf16.mxu0 0
      %3358 = vmatpush1.bf16.msra.mxu0 0
      %3359 = vmatprep.subr.bf16.mxu0 0
      %3360 = vmatpush1.bf16.msra.mxu0 0
      %3361 = vmatprep.subr.bf16.mxu0 0
      %3362 = vmatpush1.bf16.msra.mxu0 %v3292
      %3363 = vmatprep.subr.bf16.mxu0 0
      %3364 = vmatpush1.bf16.msra.mxu0 %v3291
      %3365 = vmatprep.subr.bf16.mxu0 0
      %3366 = vmatpush2.bf16.msra.mxu0 0
      %3367 = vmatprep.subr.bf16.mxu0 0
      %3368 = vmatpush2.bf16.msra.mxu0 0
      %3369 = vmatprep.subr.bf16.mxu0 0
      %3370 = vmatpush2.bf16.msra.mxu0 0
      %3371 = vmatprep.subr.bf16.mxu0 0
      %3372 = vmatpush2.bf16.msra.mxu0 0
      %3373 = vmatprep.subr.bf16.mxu0 0
      %3374 = vmatpush2.bf16.msra.mxu0 0
      %3375 = vmatprep.subr.bf16.mxu0 0
      %3376 = vmatpush2.bf16.msra.mxu0 0
      %3377 = vmatprep.subr.bf16.mxu0 0
      %3378 = vmatpush2.bf16.msra.mxu0 0
      %3379 = vmatprep.subr.bf16.mxu0 0
      %3380 = vmatpush2.bf16.msra.mxu0 0
      %3381 = vmatprep.mubr.bf16.mxu0 0
      %3382 = vmatmul.mubr.bf16.gmra.mxu0 %v3296
      %v3383 = vpop.f32.mrf.mxu0
      %v3384 = vadd.f32 0.0, %v3383
      %v3385 = vpop.f32.mrf.mxu0
      %v3386 = vpop.f32.mrf.mxu0
      %v3387 = vadd.f32 0.0, %v3386
      %v3388 = vpop.f32.mrf.mxu0
      %3389 = vmatprep.mubr.bf16.mxu0 0
      %3390 = vmatmul.mubr.bf16.gmra.mxu0 %v3299
      %v3391 = vpop.f32.mrf.mxu0
      %v3392 = vadd.f32 0.0, %v3391
      %v3393 = vpop.f32.mrf.mxu0
      %v3394 = vpop.f32.mrf.mxu0
      %v3395 = vadd.f32 0.0, %v3394
      %v3396 = vpop.f32.mrf.mxu0
      %3397 = vmatprep.mubr.bf16.mxu0 0
      %3398 = vmatmul.mubr.bf16.gmra.mxu0 %v3302
      %v3399 = vpop.f32.mrf.mxu0
      %v3400 = vadd.f32 0.0, %v3399
      %v3401 = vpop.f32.mrf.mxu0
      %v3402 = vpop.f32.mrf.mxu0
      %v3403 = vadd.f32 0.0, %v3402
      %v3404 = vpop.f32.mrf.mxu0
      %3405 = vmatprep.mubr.bf16.mxu0 0
      %3406 = vmatmul.mubr.bf16.gmra.mxu0 %v3305
      %v3407 = vpop.f32.mrf.mxu0
      %v3408 = vadd.f32 0.0, %v3407
      %v3409 = vpop.f32.mrf.mxu0
      %v3410 = vpop.f32.mrf.mxu0
      %v3411 = vadd.f32 0.0, %v3410
      %v3412 = vpop.f32.mrf.mxu0
      %3413 = vmatprep.mubr.bf16.mxu0 0
      %3414 = vmatmul.mubr.bf16.gmra.mxu0 %v3308
      %v3415 = vpop.f32.mrf.mxu0
      %v3416 = vadd.f32 0.0, %v3415
      %v3417 = vpop.f32.mrf.mxu0
      %v3418 = vpop.f32.mrf.mxu0
      %v3419 = vadd.f32 0.0, %v3418
      %v3420 = vpop.f32.mrf.mxu0
      %3421 = vmatprep.mubr.bf16.mxu0 0
      %3422 = vmatmul.mubr.bf16.gmra.mxu0 %v3311
      %v3423 = vpop.f32.mrf.mxu0
      %v3424 = vadd.f32 0.0, %v3423
      %v3425 = vpop.f32.mrf.mxu0
      %v3426 = vpop.f32.mrf.mxu0
      %v3427 = vadd.f32 0.0, %v3426
      %v3428 = vpop.f32.mrf.mxu0
      %3429 = vmatprep.mubr.bf16.mxu0 0
      %3430 = vmatmul.mubr.bf16.gmra.mxu0 %v3314
      %v3431 = vpop.f32.mrf.mxu0
      %v3432 = vadd.f32 0.0, %v3431
      %v3433 = vpop.f32.mrf.mxu0
      %v3434 = vpop.f32.mrf.mxu0
      %v3435 = vadd.f32 0.0, %v3434
      %v3436 = vpop.f32.mrf.mxu0
      %3437 = vmatprep.mubr.bf16.mxu0 0
      %3438 = vmatmul.mubr.bf16.gmra.mxu0 %v3317
      %v3439 = vpop.f32.mrf.mxu0
      %v3440 = vadd.f32 0.0, %v3439
      %v3441 = vpop.f32.mrf.mxu0
      %v3442 = vpop.f32.mrf.mxu0
      %v3443 = vadd.f32 0.0, %v3442
      %v3444 = vpop.f32.mrf.mxu0
      %3445 = vmatprep.mubr.bf16.mxu0 0
      %3446 = vmatmul.mubr.bf16.gmra.mxu0 %v3320
      %v3447 = vpop.f32.mrf.mxu0
      %v3448 = vadd.f32 0.0, %v3447
      %v3449 = vpop.f32.mrf.mxu0
      %v3450 = vpop.f32.mrf.mxu0
      %v3451 = vadd.f32 0.0, %v3450
      %v3452 = vpop.f32.mrf.mxu0
      %3453 = vmatprep.mubr.bf16.mxu0 0
      %3454 = vmatmul.mubr.bf16.gmra.mxu0 %v3323
      %v3455 = vpop.f32.mrf.mxu0
      %v3456 = vadd.f32 0.0, %v3455
      %v3457 = vpop.f32.mrf.mxu0
      %v3458 = vpop.f32.mrf.mxu0
      %v3459 = vadd.f32 0.0, %v3458
      %v3460 = vpop.f32.mrf.mxu0
      %3461 = vmatprep.mubr.bf16.mxu0 0
      %3462 = vmatmul.mubr.bf16.gmra.mxu0 %v3326
      %v3463 = vpop.f32.mrf.mxu0
      %v3464 = vadd.f32 0.0, %v3463
      %v3465 = vpop.f32.mrf.mxu0
      %v3466 = vpop.f32.mrf.mxu0
      %v3467 = vadd.f32 0.0, %v3466
      %v3468 = vpop.f32.mrf.mxu0
      %3469 = vmatprep.mubr.bf16.mxu0 0
      %3470 = vmatmul.mubr.bf16.gmra.mxu0 %v3329
      %v3471 = vpop.f32.mrf.mxu0
      %v3472 = vadd.f32 0.0, %v3471
      %v3473 = vpop.f32.mrf.mxu0
      %v3474 = vpop.f32.mrf.mxu0
      %v3475 = vadd.f32 0.0, %v3474
      %v3476 = vpop.f32.mrf.mxu0
      %3477 = vmatprep.mubr.bf16.mxu0 0
      %3478 = vmatmul.mubr.bf16.gmra.mxu0 %v3332
      %v3479 = vpop.f32.mrf.mxu0
      %v3480 = vadd.f32 0.0, %v3479
      %v3481 = vpop.f32.mrf.mxu0
      %v3482 = vpop.f32.mrf.mxu0
      %v3483 = vadd.f32 0.0, %v3482
      %v3484 = vpop.f32.mrf.mxu0
      %3485 = vmatprep.mubr.bf16.mxu0 0
      %3486 = vmatmul.mubr.bf16.gmra.mxu0 %v3335
      %v3487 = vpop.f32.mrf.mxu0
      %v3488 = vadd.f32 0.0, %v3487
      %v3489 = vpop.f32.mrf.mxu0
      %v3490 = vpop.f32.mrf.mxu0
      %v3491 = vadd.f32 0.0, %v3490
      %v3492 = vpop.f32.mrf.mxu0
      %3493 = vmatprep.mubr.bf16.mxu0 0
      %3494 = vmatmul.mubr.bf16.gmra.mxu0 %v3338
      %v3495 = vpop.f32.mrf.mxu0
      %v3496 = vadd.f32 0.0, %v3495
      %v3497 = vpop.f32.mrf.mxu0
      %v3498 = vpop.f32.mrf.mxu0
      %v3499 = vadd.f32 0.0, %v3498
      %v3500 = vpop.f32.mrf.mxu0
      %3501 = vmatprep.mubr.bf16.mxu0 0
      %3502 = vmatmul.mubr.bf16.gmra.mxu0 %v3341
      %v3503 = vpop.f32.mrf.mxu0
      %v3504 = vadd.f32 0.0, %v3503
      %v3505 = vpop.f32.mrf.mxu0
      %v3506 = vpop.f32.mrf.mxu0
      %v3507 = vadd.f32 0.0, %v3506
      %v3508 = vpop.f32.mrf.mxu0
      %3509 = vmatprep.mubr.bf16.mxu0 0
      %3510 = vmatmul.mubr.bf16.gmra.mxu0 %v3344
      %v3511 = vpop.f32.mrf.mxu0
      %v3512 = vadd.f32 0.0, %v3511
      %v3513 = vpop.f32.mrf.mxu0
      %v3514 = vpop.f32.mrf.mxu0
      %v3515 = vadd.f32 0.0, %v3514
      %v3516 = vpop.f32.mrf.mxu0
      %3517 = vmatprep.mubr.bf16.mxu0 0
      %3518 = vmatmul.mubr.bf16.gmra.mxu0 %v3347
      %v3519 = vpop.f32.mrf.mxu0
      %v3520 = vadd.f32 0.0, %v3519
      %v3521 = vpop.f32.mrf.mxu0
      %v3522 = vpop.f32.mrf.mxu0
      %v3523 = vadd.f32 0.0, %v3522
      %v3524 = vpop.f32.mrf.mxu0
      %3525 = vdwg.mxu0
      %v3526 = vadd.f32 %v3200, %v3384
      %v3527 = vadd.f32 %v3201, %v3387
      %v3528 = vadd.f32 %v3202, %v3392
      %v3529 = vadd.f32 %v3203, %v3395
      %v3530 = vadd.f32 %v3204, %v3400
      %v3531 = vadd.f32 %v3205, %v3403
      %v3532 = vadd.f32 %v3206, %v3408
      %v3533 = vadd.f32 %v3207, %v3411
      %v3534 = vadd.f32 %v3208, %v3416
      %v3535 = vadd.f32 %v3209, %v3419
      %v3536 = vadd.f32 %v3210, %v3424
      %v3537 = vadd.f32 %v3211, %v3427
      %v3538 = vadd.f32 %v3212, %v3432
      %v3539 = vadd.f32 %v3213, %v3435
      %v3540 = vadd.f32 %v3214, %v3440
      %v3541 = vadd.f32 %v3215, %v3443
      %v3542 = vadd.f32 %v3216, %v3448
      %v3543 = vadd.f32 %v3217, %v3451
      %v3544 = vadd.f32 %v3218, %v3456
      %v3545 = vadd.f32 %v3219, %v3459
      %v3546 = vadd.f32 %v3220, %v3464
      %v3547 = vadd.f32 %v3221, %v3467
      %v3548 = vadd.f32 %v3222, %v3472
      %v3549 = vadd.f32 %v3223, %v3475
      %v3550 = vadd.f32 %v3224, %v3480
      %v3551 = vadd.f32 %v3225, %v3483
      %v3552 = vadd.f32 %v3226, %v3488
      %v3553 = vadd.f32 %v3227, %v3491
      %v3554 = vadd.f32 %v3228, %v3496
      %v3555 = vadd.f32 %v3229, %v3499
      %v3556 = vadd.f32 %v3230, %v3504
      %v3557 = vadd.f32 %v3231, %v3507
      %v3558 = vadd.f32 %v3232, %v3512
      %v3559 = vadd.f32 %v3233, %v3515
      %v3560 = vadd.f32 %v3234, %v3520
      %v3561 = vadd.f32 %v3235, %v3523
      %v3562 = vld [vmem:[#allocation2 + $0x10] sm:$0xc]
      %v3563 = vld [vmem:[#allocation2 + $0x14] sm:$0xf]
      %v3564 = vld [vmem:[#allocation2 + $0x18] sm:$0xf]
      %v3565 = vld [vmem:[#allocation2 + $0x1c] sm:$0xf]
      %v3566 = vld [vmem:[#allocation2 + $0x20] sm:$0xf]
      %v3567 = vld [vmem:[#allocation2 + $0x24] sm:$0xf]
      %v3568 = vld [vmem:[#allocation2 + $0x28] sm:$0xf]
      %v3569 = vld [vmem:[#allocation2 + $0x2c] sm:$0xf]
      %v3570 = vld [vmem:[#allocation2 + $0x30] sm:$0xf]
      %v3571 = vld [vmem:[#allocation2 + $0x34] sm:$0xf]
      %v3572 = vld [vmem:[#allocation2 + $0x38] sm:$0xf]
      %v3573 = vld [vmem:[#allocation2 + $0x3c] sm:$0xf]
      %v3574 = vld [vmem:[#allocation2 + $0x40] sm:$0xf]
      %v3575 = vld [vmem:[#allocation2 + $0x44] sm:$0xf]
      %v3576 = vld [vmem:[#allocation2 + $0x48] sm:$0xf]
      %v3577 = vld [vmem:[#allocation2 + $0x4c] sm:$0xf]
      %v3578 = vld [vmem:[#allocation2 + $0x50] sm:$0xf]
      %v3579 = vld [vmem:[#allocation2 + $0x54] sm:$0xf]
      %v3580 = vld [vmem:[#allocation2 + $0x58] sm:$0xf]
      %v3581 = vld [vmem:[#allocation2 + $0x5c] sm:$0xf]
      %v3582 = vld [vmem:[#allocation2 + $0x60] sm:$0xf]
      %v3583 = vld [vmem:[#allocation2 + $0x64] sm:$0xf]
      %v3584 = vld [vmem:[#allocation2 + $0x68] sm:$0xf]
      %v3585 = vld [vmem:[#allocation2 + $0x6c] sm:$0xf]
      %v3586 = vld [vmem:[#allocation2 + $0x70] sm:$0xf]
      %v3587 = vld [vmem:[#allocation2 + $0x74] sm:$0xf]
      %v3588 = vld [vmem:[#allocation2 + $0x78] sm:$0xf]
      %v3589 = vld [vmem:[#allocation2 + $0x7c] sm:$0xf]
      %v3590 = vld [vmem:[#allocation2 + $0x80] sm:$0xf]
      %v3591 = vld [vmem:[#allocation2 + $0x84] sm:$0xf]
      %v3592 = vld [vmem:[#allocation2 + $0x88] sm:$0xf]
      %v3593 = vld [vmem:[#allocation2 + $0x8c] sm:$0xf]
      %v3594 = vld [vmem:[#allocation2 + $0x90] sm:$0xf]
      %v3595 = vld [vmem:[#allocation2 + $0x94] sm:$0xf]
      %v3596 = vld [vmem:[#allocation2 + $0x98] sm:$0xf]
      %v3597 = vld [vmem:[#allocation2 + $0x9c] sm:$0xf]
      %v3598 = vld [vmem:[#allocation2 + $0xa0] sm:$0x3]
      %s3599 = scalar_lea.vmem %s2, 96
      %v3600 = vld [vmem:[%s3599] sm:$0xf]
      %v3601 = vld [vmem:[%s3599 + $0x4] sm:$0xf]
      %v3602 = vld [vmem:[%s3599 + $0x8] sm:$0xf]
      %v3603 = vld [vmem:[%s3599 + $0xc] sm:$0xf]
      %v3641 = vunpack.c.l.b16 %v3562
      %v3642 = vunpack.c.l.b16 %v3563
      %v3643 = vunpack.c.l.b16 %v3564
      %v3644 = vunpack.c.l.b16 %v3565
      %v3645 = vunpack.c.l.b16 %v3566
      %v3646 = vunpack.c.l.b16 %v3567
      %v3647 = vunpack.c.l.b16 %v3568
      %v3648 = vunpack.c.l.b16 %v3569
      %v3649 = vunpack.c.l.b16 %v3570
      %v3650 = vunpack.c.l.b16 %v3571
      %v3651 = vunpack.c.l.b16 %v3572
      %v3652 = vunpack.c.l.b16 %v3573
      %v3653 = vunpack.c.l.b16 %v3574
      %v3654 = vunpack.c.l.b16 %v3575
      %v3655 = vunpack.c.l.b16 %v3576
      %v3656 = vunpack.c.l.b16 %v3577
      %v3657 = vunpack.c.l.b16 %v3578
      %v3658 = vunpack.c.l.b16 %v3579
      %v3659 = vunpack.c.l.b16 %v3580
      %v3660 = vunpack.c.l.b16 %v3581
      %v3661 = vunpack.c.l.b16 %v3582
      %v3662 = vunpack.c.l.b16 %v3583
      %v3663 = vunpack.c.l.b16 %v3584
      %v3664 = vunpack.c.l.b16 %v3585
      %v3665 = vunpack.c.l.b16 %v3586
      %v3666 = vunpack.c.l.b16 %v3587
      %v3667 = vunpack.c.l.b16 %v3588
      %v3668 = vunpack.c.l.b16 %v3589
      %v3669 = vunpack.c.l.b16 %v3590
      %v3670 = vunpack.c.l.b16 %v3591
      %v3671 = vunpack.c.l.b16 %v3592
      %v3672 = vunpack.c.l.b16 %v3593
      %v3673 = vunpack.c.l.b16 %v3594
      %v3674 = vunpack.c.l.b16 %v3595
      %v3675 = vunpack.c.l.b16 %v3596
      %v3676 = vunpack.c.l.b16 %v3597
      %v3677 = vunpack.c.l.b16 %v3598
      %v3678 = vpack.c.b16 %v3642, %v3641
      %v3679 = vpack.c.b16 %v3644, %v3643
      %v3680 = vpack.c.b16 %v3646, %v3645
      %v3681 = vpack.c.b16 %v3648, %v3647
      %v3682 = vpack.c.b16 %v3650, %v3649
      %v3683 = vpack.c.b16 %v3652, %v3651
      %v3684 = vpack.c.b16 %v3654, %v3653
      %v3685 = vpack.c.b16 %v3656, %v3655
      %v3686 = vpack.c.b16 %v3658, %v3657
      %v3687 = vpack.c.b16 %v3660, %v3659
      %v3688 = vpack.c.b16 %v3662, %v3661
      %v3689 = vpack.c.b16 %v3664, %v3663
      %v3690 = vpack.c.b16 %v3666, %v3665
      %v3691 = vpack.c.b16 %v3668, %v3667
      %v3692 = vpack.c.b16 %v3670, %v3669
      %v3693 = vpack.c.b16 %v3672, %v3671
      %v3694 = vpack.c.b16 %v3674, %v3673
      %v3695 = vpack.c.b16 %v3676, %v3675
      %v3696 = vpack.c.b16 %v3677, %v3677
      %v3697 = vrot.slane %v3678, 2
      %v3698 = vrot.slane %v3679, 2
      %v3699 = vsel %vm3245, %v3697, %v3698
      %v3700 = vrot.slane %v3680, 2
      %v3701 = vsel %vm3245, %v3698, %v3700
      %v3702 = vrot.slane %v3681, 2
      %v3703 = vsel %vm3245, %v3700, %v3702
      %v3704 = vrot.slane %v3682, 2
      %v3705 = vsel %vm3245, %v3702, %v3704
      %v3706 = vrot.slane %v3683, 2
      %v3707 = vsel %vm3245, %v3704, %v3706
      %v3708 = vrot.slane %v3684, 2
      %v3709 = vsel %vm3245, %v3706, %v3708
      %v3710 = vrot.slane %v3685, 2
      %v3711 = vsel %vm3245, %v3708, %v3710
      %v3712 = vrot.slane %v3686, 2
      %v3713 = vsel %vm3245, %v3710, %v3712
      %v3714 = vrot.slane %v3687, 2
      %v3715 = vsel %vm3245, %v3712, %v3714
      %v3716 = vrot.slane %v3688, 2
      %v3717 = vsel %vm3245, %v3714, %v3716
      %v3718 = vrot.slane %v3689, 2
      %v3719 = vsel %vm3245, %v3716, %v3718
      %v3720 = vrot.slane %v3690, 2
      %v3721 = vsel %vm3245, %v3718, %v3720
      %v3722 = vrot.slane %v3691, 2
      %v3723 = vsel %vm3245, %v3720, %v3722
      %v3724 = vrot.slane %v3692, 2
      %v3725 = vsel %vm3245, %v3722, %v3724
      %v3726 = vrot.slane %v3693, 2
      %v3727 = vsel %vm3245, %v3724, %v3726
      %v3728 = vrot.slane %v3694, 2
      %v3729 = vsel %vm3245, %v3726, %v3728
      %v3730 = vrot.slane %v3695, 2
      %v3731 = vsel %vm3245, %v3728, %v3730
      %v3732 = vrot.slane %v3696, 2
      %v3733 = vsel %vm3245, %v3730, %v3732
      %v3738 = vunpack.c.l.b16 %v3600
      %v3739 = vunpack.c.l.b16 %v3601
      %v3740 = vunpack.c.l.b16 %v3602
      %v3741 = vunpack.c.l.b16 %v3603
      %v3742 = vpack.c.b16 %v3739, %v3738
      %v3743 = vpack.c.b16 %v3741, %v3740
      %v3747 = vsel %vm1543, %v3699, 0
      %v3750 = vsel %vm1543, %v3701, 0
      %v3753 = vsel %vm1543, %v3703, 0
      %v3756 = vsel %vm1543, %v3705, 0
      %v3759 = vsel %vm1543, %v3707, 0
      %v3762 = vsel %vm1543, %v3709, 0
      %v3765 = vsel %vm1543, %v3711, 0
      %v3768 = vsel %vm1543, %v3713, 0
      %v3771 = vsel %vm1543, %v3715, 0
      %v3774 = vsel %vm1543, %v3717, 0
      %v3777 = vsel %vm1543, %v3719, 0
      %v3780 = vsel %vm1543, %v3721, 0
      %v3783 = vsel %vm1543, %v3723, 0
      %v3786 = vsel %vm1543, %v3725, 0
      %v3789 = vsel %vm1543, %v3727, 0
      %v3792 = vsel %vm1543, %v3729, 0
      %v3795 = vsel %vm1543, %v3731, 0
      %v3798 = vsel %vm1543, %v3733, 0
      %3800 = vmatprep.subr.bf16.mxu0 0
      %3801 = vmatpush1.bf16.msra.mxu0 0
      %3802 = vmatprep.subr.bf16.mxu0 0
      %3803 = vmatpush1.bf16.msra.mxu0 0
      %3804 = vmatprep.subr.bf16.mxu0 0
      %3805 = vmatpush1.bf16.msra.mxu0 0
      %3806 = vmatprep.subr.bf16.mxu0 0
      %3807 = vmatpush1.bf16.msra.mxu0 0
      %3808 = vmatprep.subr.bf16.mxu0 0
      %3809 = vmatpush1.bf16.msra.mxu0 0
      %3810 = vmatprep.subr.bf16.mxu0 0
      %3811 = vmatpush1.bf16.msra.mxu0 0
      %3812 = vmatprep.subr.bf16.mxu0 0
      %3813 = vmatpush1.bf16.msra.mxu0 %v3743
      %3814 = vmatprep.subr.bf16.mxu0 0
      %3815 = vmatpush1.bf16.msra.mxu0 %v3742
      %3816 = vmatprep.subr.bf16.mxu0 0
      %3817 = vmatpush2.bf16.msra.mxu0 0
      %3818 = vmatprep.subr.bf16.mxu0 0
      %3819 = vmatpush2.bf16.msra.mxu0 0
      %3820 = vmatprep.subr.bf16.mxu0 0
      %3821 = vmatpush2.bf16.msra.mxu0 0
      %3822 = vmatprep.subr.bf16.mxu0 0
      %3823 = vmatpush2.bf16.msra.mxu0 0
      %3824 = vmatprep.subr.bf16.mxu0 0
      %3825 = vmatpush2.bf16.msra.mxu0 0
      %3826 = vmatprep.subr.bf16.mxu0 0
      %3827 = vmatpush2.bf16.msra.mxu0 0
      %3828 = vmatprep.subr.bf16.mxu0 0
      %3829 = vmatpush2.bf16.msra.mxu0 0
      %3830 = vmatprep.subr.bf16.mxu0 0
      %3831 = vmatpush2.bf16.msra.mxu0 0
      %3832 = vmatprep.mubr.bf16.mxu0 0
      %3833 = vmatmul.mubr.bf16.gmra.mxu0 %v3747
      %v3834 = vpop.f32.mrf.mxu0
      %v3835 = vadd.f32 0.0, %v3834
      %v3836 = vpop.f32.mrf.mxu0
      %v3837 = vpop.f32.mrf.mxu0
      %v3838 = vadd.f32 0.0, %v3837
      %v3839 = vpop.f32.mrf.mxu0
      %3840 = vmatprep.mubr.bf16.mxu0 0
      %3841 = vmatmul.mubr.bf16.gmra.mxu0 %v3750
      %v3842 = vpop.f32.mrf.mxu0
      %v3843 = vadd.f32 0.0, %v3842
      %v3844 = vpop.f32.mrf.mxu0
      %v3845 = vpop.f32.mrf.mxu0
      %v3846 = vadd.f32 0.0, %v3845
      %v3847 = vpop.f32.mrf.mxu0
      %3848 = vmatprep.mubr.bf16.mxu0 0
      %3849 = vmatmul.mubr.bf16.gmra.mxu0 %v3753
      %v3850 = vpop.f32.mrf.mxu0
      %v3851 = vadd.f32 0.0, %v3850
      %v3852 = vpop.f32.mrf.mxu0
      %v3853 = vpop.f32.mrf.mxu0
      %v3854 = vadd.f32 0.0, %v3853
      %v3855 = vpop.f32.mrf.mxu0
      %3856 = vmatprep.mubr.bf16.mxu0 0
      %3857 = vmatmul.mubr.bf16.gmra.mxu0 %v3756
      %v3858 = vpop.f32.mrf.mxu0
      %v3859 = vadd.f32 0.0, %v3858
      %v3860 = vpop.f32.mrf.mxu0
      %v3861 = vpop.f32.mrf.mxu0
      %v3862 = vadd.f32 0.0, %v3861
      %v3863 = vpop.f32.mrf.mxu0
      %3864 = vmatprep.mubr.bf16.mxu0 0
      %3865 = vmatmul.mubr.bf16.gmra.mxu0 %v3759
      %v3866 = vpop.f32.mrf.mxu0
      %v3867 = vadd.f32 0.0, %v3866
      %v3868 = vpop.f32.mrf.mxu0
      %v3869 = vpop.f32.mrf.mxu0
      %v3870 = vadd.f32 0.0, %v3869
      %v3871 = vpop.f32.mrf.mxu0
      %3872 = vmatprep.mubr.bf16.mxu0 0
      %3873 = vmatmul.mubr.bf16.gmra.mxu0 %v3762
      %v3874 = vpop.f32.mrf.mxu0
      %v3875 = vadd.f32 0.0, %v3874
      %v3876 = vpop.f32.mrf.mxu0
      %v3877 = vpop.f32.mrf.mxu0
      %v3878 = vadd.f32 0.0, %v3877
      %v3879 = vpop.f32.mrf.mxu0
      %3880 = vmatprep.mubr.bf16.mxu0 0
      %3881 = vmatmul.mubr.bf16.gmra.mxu0 %v3765
      %v3882 = vpop.f32.mrf.mxu0
      %v3883 = vadd.f32 0.0, %v3882
      %v3884 = vpop.f32.mrf.mxu0
      %v3885 = vpop.f32.mrf.mxu0
      %v3886 = vadd.f32 0.0, %v3885
      %v3887 = vpop.f32.mrf.mxu0
      %3888 = vmatprep.mubr.bf16.mxu0 0
      %3889 = vmatmul.mubr.bf16.gmra.mxu0 %v3768
      %v3890 = vpop.f32.mrf.mxu0
      %v3891 = vadd.f32 0.0, %v3890
      %v3892 = vpop.f32.mrf.mxu0
      %v3893 = vpop.f32.mrf.mxu0
      %v3894 = vadd.f32 0.0, %v3893
      %v3895 = vpop.f32.mrf.mxu0
      %3896 = vmatprep.mubr.bf16.mxu0 0
      %3897 = vmatmul.mubr.bf16.gmra.mxu0 %v3771
      %v3898 = vpop.f32.mrf.mxu0
      %v3899 = vadd.f32 0.0, %v3898
      %v3900 = vpop.f32.mrf.mxu0
      %v3901 = vpop.f32.mrf.mxu0
      %v3902 = vadd.f32 0.0, %v3901
      %v3903 = vpop.f32.mrf.mxu0
      %3904 = vmatprep.mubr.bf16.mxu0 0
      %3905 = vmatmul.mubr.bf16.gmra.mxu0 %v3774
      %v3906 = vpop.f32.mrf.mxu0
      %v3907 = vadd.f32 0.0, %v3906
      %v3908 = vpop.f32.mrf.mxu0
      %v3909 = vpop.f32.mrf.mxu0
      %v3910 = vadd.f32 0.0, %v3909
      %v3911 = vpop.f32.mrf.mxu0
      %3912 = vmatprep.mubr.bf16.mxu0 0
      %3913 = vmatmul.mubr.bf16.gmra.mxu0 %v3777
      %v3914 = vpop.f32.mrf.mxu0
      %v3915 = vadd.f32 0.0, %v3914
      %v3916 = vpop.f32.mrf.mxu0
      %v3917 = vpop.f32.mrf.mxu0
      %v3918 = vadd.f32 0.0, %v3917
      %v3919 = vpop.f32.mrf.mxu0
      %3920 = vmatprep.mubr.bf16.mxu0 0
      %3921 = vmatmul.mubr.bf16.gmra.mxu0 %v3780
      %v3922 = vpop.f32.mrf.mxu0
      %v3923 = vadd.f32 0.0, %v3922
      %v3924 = vpop.f32.mrf.mxu0
      %v3925 = vpop.f32.mrf.mxu0
      %v3926 = vadd.f32 0.0, %v3925
      %v3927 = vpop.f32.mrf.mxu0
      %3928 = vmatprep.mubr.bf16.mxu0 0
      %3929 = vmatmul.mubr.bf16.gmra.mxu0 %v3783
      %v3930 = vpop.f32.mrf.mxu0
      %v3931 = vadd.f32 0.0, %v3930
      %v3932 = vpop.f32.mrf.mxu0
      %v3933 = vpop.f32.mrf.mxu0
      %v3934 = vadd.f32 0.0, %v3933
      %v3935 = vpop.f32.mrf.mxu0
      %3936 = vmatprep.mubr.bf16.mxu0 0
      %3937 = vmatmul.mubr.bf16.gmra.mxu0 %v3786
      %v3938 = vpop.f32.mrf.mxu0
      %v3939 = vadd.f32 0.0, %v3938
      %v3940 = vpop.f32.mrf.mxu0
      %v3941 = vpop.f32.mrf.mxu0
      %v3942 = vadd.f32 0.0, %v3941
      %v3943 = vpop.f32.mrf.mxu0
      %3944 = vmatprep.mubr.bf16.mxu0 0
      %3945 = vmatmul.mubr.bf16.gmra.mxu0 %v3789
      %v3946 = vpop.f32.mrf.mxu0
      %v3947 = vadd.f32 0.0, %v3946
      %v3948 = vpop.f32.mrf.mxu0
      %v3949 = vpop.f32.mrf.mxu0
      %v3950 = vadd.f32 0.0, %v3949
      %v3951 = vpop.f32.mrf.mxu0
      %3952 = vmatprep.mubr.bf16.mxu0 0
      %3953 = vmatmul.mubr.bf16.gmra.mxu0 %v3792
      %v3954 = vpop.f32.mrf.mxu0
      %v3955 = vadd.f32 0.0, %v3954
      %v3956 = vpop.f32.mrf.mxu0
      %v3957 = vpop.f32.mrf.mxu0
      %v3958 = vadd.f32 0.0, %v3957
      %v3959 = vpop.f32.mrf.mxu0
      %3960 = vmatprep.mubr.bf16.mxu0 0
      %3961 = vmatmul.mubr.bf16.gmra.mxu0 %v3795
      %v3962 = vpop.f32.mrf.mxu0
      %v3963 = vadd.f32 0.0, %v3962
      %v3964 = vpop.f32.mrf.mxu0
      %v3965 = vpop.f32.mrf.mxu0
      %v3966 = vadd.f32 0.0, %v3965
      %v3967 = vpop.f32.mrf.mxu0
      %3968 = vmatprep.mubr.bf16.mxu0 0
      %3969 = vmatmul.mubr.bf16.gmra.mxu0 %v3798
      %v3970 = vpop.f32.mrf.mxu0
      %v3971 = vadd.f32 0.0, %v3970
      %v3972 = vpop.f32.mrf.mxu0
      %v3973 = vpop.f32.mrf.mxu0
      %v3974 = vadd.f32 0.0, %v3973
      %v3975 = vpop.f32.mrf.mxu0
      %3976 = vdwg.mxu0
      %v3977 = vadd.f32 %v3526, %v3835
      %v3978 = vadd.f32 %v3527, %v3838
      %v3979 = vadd.f32 %v3528, %v3843
      %v3980 = vadd.f32 %v3529, %v3846
      %v3981 = vadd.f32 %v3530, %v3851
      %v3982 = vadd.f32 %v3531, %v3854
      %v3983 = vadd.f32 %v3532, %v3859
      %v3984 = vadd.f32 %v3533, %v3862
      %v3985 = vadd.f32 %v3534, %v3867
      %v3986 = vadd.f32 %v3535, %v3870
      %v3987 = vadd.f32 %v3536, %v3875
      %v3988 = vadd.f32 %v3537, %v3878
      %v3989 = vadd.f32 %v3538, %v3883
      %v3990 = vadd.f32 %v3539, %v3886
      %v3991 = vadd.f32 %v3540, %v3891
      %v3992 = vadd.f32 %v3541, %v3894
      %v3993 = vadd.f32 %v3542, %v3899
      %v3994 = vadd.f32 %v3543, %v3902
      %v3995 = vadd.f32 %v3544, %v3907
      %v3996 = vadd.f32 %v3545, %v3910
      %v3997 = vadd.f32 %v3546, %v3915
      %v3998 = vadd.f32 %v3547, %v3918
      %v3999 = vadd.f32 %v3548, %v3923
      %v4000 = vadd.f32 %v3549, %v3926
      %v4001 = vadd.f32 %v3550, %v3931
      %v4002 = vadd.f32 %v3551, %v3934
      %v4003 = vadd.f32 %v3552, %v3939
      %v4004 = vadd.f32 %v3553, %v3942
      %v4005 = vadd.f32 %v3554, %v3947
      %v4006 = vadd.f32 %v3555, %v3950
      %v4007 = vadd.f32 %v3556, %v3955
      %v4008 = vadd.f32 %v3557, %v3958
      %v4009 = vadd.f32 %v3558, %v3963
      %v4010 = vadd.f32 %v3559, %v3966
      %v4011 = vadd.f32 %v3560, %v3971
      %v4012 = vadd.f32 %v3561, %v3974
      %v4013 = vld [vmem:[#allocation2 + $0xa0] sm:$0x7]
      %s4014 = scalar_lea.vmem %s2, 112
      %v4015 = vld [vmem:[%s4014] sm:$0xf]
      %v4016 = vld [vmem:[%s4014 + $0x4] sm:$0xf]
      %v4017 = vld [vmem:[%s4014 + $0x8] sm:$0xf]
      %v4018 = vld [vmem:[%s4014 + $0xc] sm:$0xf]
      %v4020 = vunpack.c.l.b16 %v4013
      %v4021 = vpack.c.b16 %v4020, %v4020
      %vm4022 = vsmask.f32 5376
      %v4024 = vshrl.u32 %v3678, 16
      %v4026 = vrot.slane %v4024, 2
      %v4027 = vshll.u32 %v3678, 16
      %v4029 = vrot.slane %v4027, 3
      %v4030 = vor.u32 %v4026, %v4029
      %v4032 = vshrl.u32 %v3679, 16
      %v4034 = vrot.slane %v4032, 2
      %v4035 = vshll.u32 %v3679, 16
      %v4037 = vrot.slane %v4035, 3
      %v4038 = vor.u32 %v4034, %v4037
      %v4039 = vsel %vm4022, %v4030, %v4038
      %v4041 = vshrl.u32 %v3680, 16
      %v4043 = vrot.slane %v4041, 2
      %v4044 = vshll.u32 %v3680, 16
      %v4046 = vrot.slane %v4044, 3
      %v4047 = vor.u32 %v4043, %v4046
      %v4048 = vsel %vm4022, %v4038, %v4047
      %v4050 = vshrl.u32 %v3681, 16
      %v4052 = vrot.slane %v4050, 2
      %v4053 = vshll.u32 %v3681, 16
      %v4055 = vrot.slane %v4053, 3
      %v4056 = vor.u32 %v4052, %v4055
      %v4057 = vsel %vm4022, %v4047, %v4056
      %v4059 = vshrl.u32 %v3682, 16
      %v4061 = vrot.slane %v4059, 2
      %v4062 = vshll.u32 %v3682, 16
      %v4064 = vrot.slane %v4062, 3
      %v4065 = vor.u32 %v4061, %v4064
      %v4066 = vsel %vm4022, %v4056, %v4065
      %v4068 = vshrl.u32 %v3683, 16
      %v4070 = vrot.slane %v4068, 2
      %v4071 = vshll.u32 %v3683, 16
      %v4073 = vrot.slane %v4071, 3
      %v4074 = vor.u32 %v4070, %v4073
      %v4075 = vsel %vm4022, %v4065, %v4074
      %v4077 = vshrl.u32 %v3684, 16
      %v4079 = vrot.slane %v4077, 2
      %v4080 = vshll.u32 %v3684, 16
      %v4082 = vrot.slane %v4080, 3
      %v4083 = vor.u32 %v4079, %v4082
      %v4084 = vsel %vm4022, %v4074, %v4083
      %v4086 = vshrl.u32 %v3685, 16
      %v4088 = vrot.slane %v4086, 2
      %v4089 = vshll.u32 %v3685, 16
      %v4091 = vrot.slane %v4089, 3
      %v4092 = vor.u32 %v4088, %v4091
      %v4093 = vsel %vm4022, %v4083, %v4092
      %v4095 = vshrl.u32 %v3686, 16
      %v4097 = vrot.slane %v4095, 2
      %v4098 = vshll.u32 %v3686, 16
      %v4100 = vrot.slane %v4098, 3
      %v4101 = vor.u32 %v4097, %v4100
      %v4102 = vsel %vm4022, %v4092, %v4101
      %v4104 = vshrl.u32 %v3687, 16
      %v4106 = vrot.slane %v4104, 2
      %v4107 = vshll.u32 %v3687, 16
      %v4109 = vrot.slane %v4107, 3
      %v4110 = vor.u32 %v4106, %v4109
      %v4111 = vsel %vm4022, %v4101, %v4110
      %v4113 = vshrl.u32 %v3688, 16
      %v4115 = vrot.slane %v4113, 2
      %v4116 = vshll.u32 %v3688, 16
      %v4118 = vrot.slane %v4116, 3
      %v4119 = vor.u32 %v4115, %v4118
      %v4120 = vsel %vm4022, %v4110, %v4119
      %v4122 = vshrl.u32 %v3689, 16
      %v4124 = vrot.slane %v4122, 2
      %v4125 = vshll.u32 %v3689, 16
      %v4127 = vrot.slane %v4125, 3
      %v4128 = vor.u32 %v4124, %v4127
      %v4129 = vsel %vm4022, %v4119, %v4128
      %v4131 = vshrl.u32 %v3690, 16
      %v4133 = vrot.slane %v4131, 2
      %v4134 = vshll.u32 %v3690, 16
      %v4136 = vrot.slane %v4134, 3
      %v4137 = vor.u32 %v4133, %v4136
      %v4138 = vsel %vm4022, %v4128, %v4137
      %v4140 = vshrl.u32 %v3691, 16
      %v4142 = vrot.slane %v4140, 2
      %v4143 = vshll.u32 %v3691, 16
      %v4145 = vrot.slane %v4143, 3
      %v4146 = vor.u32 %v4142, %v4145
      %v4147 = vsel %vm4022, %v4137, %v4146
      %v4149 = vshrl.u32 %v3692, 16
      %v4151 = vrot.slane %v4149, 2
      %v4152 = vshll.u32 %v3692, 16
      %v4154 = vrot.slane %v4152, 3
      %v4155 = vor.u32 %v4151, %v4154
      %v4156 = vsel %vm4022, %v4146, %v4155
      %v4158 = vshrl.u32 %v3693, 16
      %v4160 = vrot.slane %v4158, 2
      %v4161 = vshll.u32 %v3693, 16
      %v4163 = vrot.slane %v4161, 3
      %v4164 = vor.u32 %v4160, %v4163
      %v4165 = vsel %vm4022, %v4155, %v4164
      %v4167 = vshrl.u32 %v3694, 16
      %v4169 = vrot.slane %v4167, 2
      %v4170 = vshll.u32 %v3694, 16
      %v4172 = vrot.slane %v4170, 3
      %v4173 = vor.u32 %v4169, %v4172
      %v4174 = vsel %vm4022, %v4164, %v4173
      %v4176 = vshrl.u32 %v3695, 16
      %v4178 = vrot.slane %v4176, 2
      %v4179 = vshll.u32 %v3695, 16
      %v4181 = vrot.slane %v4179, 3
      %v4182 = vor.u32 %v4178, %v4181
      %v4183 = vsel %vm4022, %v4173, %v4182
      %v4185 = vshrl.u32 %v4021, 16
      %v4187 = vrot.slane %v4185, 2
      %v4188 = vshll.u32 %v4021, 16
      %v4190 = vrot.slane %v4188, 3
      %v4191 = vor.u32 %v4187, %v4190
      %v4192 = vsel %vm4022, %v4182, %v4191
      %v4197 = vunpack.c.l.b16 %v4015
      %v4198 = vunpack.c.l.b16 %v4016
      %v4199 = vunpack.c.l.b16 %v4017
      %v4200 = vunpack.c.l.b16 %v4018
      %v4201 = vpack.c.b16 %v4198, %v4197
      %v4202 = vpack.c.b16 %v4200, %v4199
      %v4206 = vsel %vm1543, %v4039, 0
      %v4209 = vsel %vm1543, %v4048, 0
      %v4212 = vsel %vm1543, %v4057, 0
      %v4215 = vsel %vm1543, %v4066, 0
      %v4218 = vsel %vm1543, %v4075, 0
      %v4221 = vsel %vm1543, %v4084, 0
      %v4224 = vsel %vm1543, %v4093, 0
      %v4227 = vsel %vm1543, %v4102, 0
      %v4230 = vsel %vm1543, %v4111, 0
      %v4233 = vsel %vm1543, %v4120, 0
      %v4236 = vsel %vm1543, %v4129, 0
      %v4239 = vsel %vm1543, %v4138, 0
      %v4242 = vsel %vm1543, %v4147, 0
      %v4245 = vsel %vm1543, %v4156, 0
      %v4248 = vsel %vm1543, %v4165, 0
      %v4251 = vsel %vm1543, %v4174, 0
      %v4254 = vsel %vm1543, %v4183, 0
      %v4257 = vsel %vm1543, %v4192, 0
      %4259 = vmatprep.subr.bf16.mxu0 0
      %4260 = vmatpush1.bf16.msra.mxu0 0
      %4261 = vmatprep.subr.bf16.mxu0 0
      %4262 = vmatpush1.bf16.msra.mxu0 0
      %4263 = vmatprep.subr.bf16.mxu0 0
      %4264 = vmatpush1.bf16.msra.mxu0 0
      %4265 = vmatprep.subr.bf16.mxu0 0
      %4266 = vmatpush1.bf16.msra.mxu0 0
      %4267 = vmatprep.subr.bf16.mxu0 0
      %4268 = vmatpush1.bf16.msra.mxu0 0
      %4269 = vmatprep.subr.bf16.mxu0 0
      %4270 = vmatpush1.bf16.msra.mxu0 0
      %4271 = vmatprep.subr.bf16.mxu0 0
      %4272 = vmatpush1.bf16.msra.mxu0 %v4202
      %4273 = vmatprep.subr.bf16.mxu0 0
      %4274 = vmatpush1.bf16.msra.mxu0 %v4201
      %4275 = vmatprep.subr.bf16.mxu0 0
      %4276 = vmatpush2.bf16.msra.mxu0 0
      %4277 = vmatprep.subr.bf16.mxu0 0
      %4278 = vmatpush2.bf16.msra.mxu0 0
      %4279 = vmatprep.subr.bf16.mxu0 0
      %4280 = vmatpush2.bf16.msra.mxu0 0
      %4281 = vmatprep.subr.bf16.mxu0 0
      %4282 = vmatpush2.bf16.msra.mxu0 0
      %4283 = vmatprep.subr.bf16.mxu0 0
      %4284 = vmatpush2.bf16.msra.mxu0 0
      %4285 = vmatprep.subr.bf16.mxu0 0
      %4286 = vmatpush2.bf16.msra.mxu0 0
      %4287 = vmatprep.subr.bf16.mxu0 0
      %4288 = vmatpush2.bf16.msra.mxu0 0
      %4289 = vmatprep.subr.bf16.mxu0 0
      %4290 = vmatpush2.bf16.msra.mxu0 0
      %4291 = vmatprep.mubr.bf16.mxu0 0
      %4292 = vmatmul.mubr.bf16.gmra.mxu0 %v4206
      %v4293 = vpop.f32.mrf.mxu0
      %v4294 = vadd.f32 0.0, %v4293
      %v4295 = vpop.f32.mrf.mxu0
      %v4296 = vpop.f32.mrf.mxu0
      %v4297 = vadd.f32 0.0, %v4296
      %v4298 = vpop.f32.mrf.mxu0
      %4299 = vmatprep.mubr.bf16.mxu0 0
      %4300 = vmatmul.mubr.bf16.gmra.mxu0 %v4209
      %v4301 = vpop.f32.mrf.mxu0
      %v4302 = vadd.f32 0.0, %v4301
      %v4303 = vpop.f32.mrf.mxu0
      %v4304 = vpop.f32.mrf.mxu0
      %v4305 = vadd.f32 0.0, %v4304
      %v4306 = vpop.f32.mrf.mxu0
      %4307 = vmatprep.mubr.bf16.mxu0 0
      %4308 = vmatmul.mubr.bf16.gmra.mxu0 %v4212
      %v4309 = vpop.f32.mrf.mxu0
      %v4310 = vadd.f32 0.0, %v4309
      %v4311 = vpop.f32.mrf.mxu0
      %v4312 = vpop.f32.mrf.mxu0
      %v4313 = vadd.f32 0.0, %v4312
      %v4314 = vpop.f32.mrf.mxu0
      %4315 = vmatprep.mubr.bf16.mxu0 0
      %4316 = vmatmul.mubr.bf16.gmra.mxu0 %v4215
      %v4317 = vpop.f32.mrf.mxu0
      %v4318 = vadd.f32 0.0, %v4317
      %v4319 = vpop.f32.mrf.mxu0
      %v4320 = vpop.f32.mrf.mxu0
      %v4321 = vadd.f32 0.0, %v4320
      %v4322 = vpop.f32.mrf.mxu0
      %4323 = vmatprep.mubr.bf16.mxu0 0
      %4324 = vmatmul.mubr.bf16.gmra.mxu0 %v4218
      %v4325 = vpop.f32.mrf.mxu0
      %v4326 = vadd.f32 0.0, %v4325
      %v4327 = vpop.f32.mrf.mxu0
      %v4328 = vpop.f32.mrf.mxu0
      %v4329 = vadd.f32 0.0, %v4328
      %v4330 = vpop.f32.mrf.mxu0
      %4331 = vmatprep.mubr.bf16.mxu0 0
      %4332 = vmatmul.mubr.bf16.gmra.mxu0 %v4221
      %v4333 = vpop.f32.mrf.mxu0
      %v4334 = vadd.f32 0.0, %v4333
      %v4335 = vpop.f32.mrf.mxu0
      %v4336 = vpop.f32.mrf.mxu0
      %v4337 = vadd.f32 0.0, %v4336
      %v4338 = vpop.f32.mrf.mxu0
      %4339 = vmatprep.mubr.bf16.mxu0 0
      %4340 = vmatmul.mubr.bf16.gmra.mxu0 %v4224
      %v4341 = vpop.f32.mrf.mxu0
      %v4342 = vadd.f32 0.0, %v4341
      %v4343 = vpop.f32.mrf.mxu0
      %v4344 = vpop.f32.mrf.mxu0
      %v4345 = vadd.f32 0.0, %v4344
      %v4346 = vpop.f32.mrf.mxu0
      %4347 = vmatprep.mubr.bf16.mxu0 0
      %4348 = vmatmul.mubr.bf16.gmra.mxu0 %v4227
      %v4349 = vpop.f32.mrf.mxu0
      %v4350 = vadd.f32 0.0, %v4349
      %v4351 = vpop.f32.mrf.mxu0
      %v4352 = vpop.f32.mrf.mxu0
      %v4353 = vadd.f32 0.0, %v4352
      %v4354 = vpop.f32.mrf.mxu0
      %4355 = vmatprep.mubr.bf16.mxu0 0
      %4356 = vmatmul.mubr.bf16.gmra.mxu0 %v4230
      %v4357 = vpop.f32.mrf.mxu0
      %v4358 = vadd.f32 0.0, %v4357
      %v4359 = vpop.f32.mrf.mxu0
      %v4360 = vpop.f32.mrf.mxu0
      %v4361 = vadd.f32 0.0, %v4360
      %v4362 = vpop.f32.mrf.mxu0
      %4363 = vmatprep.mubr.bf16.mxu0 0
      %4364 = vmatmul.mubr.bf16.gmra.mxu0 %v4233
      %v4365 = vpop.f32.mrf.mxu0
      %v4366 = vadd.f32 0.0, %v4365
      %v4367 = vpop.f32.mrf.mxu0
      %v4368 = vpop.f32.mrf.mxu0
      %v4369 = vadd.f32 0.0, %v4368
      %v4370 = vpop.f32.mrf.mxu0
      %4371 = vmatprep.mubr.bf16.mxu0 0
      %4372 = vmatmul.mubr.bf16.gmra.mxu0 %v4236
      %v4373 = vpop.f32.mrf.mxu0
      %v4374 = vadd.f32 0.0, %v4373
      %v4375 = vpop.f32.mrf.mxu0
      %v4376 = vpop.f32.mrf.mxu0
      %v4377 = vadd.f32 0.0, %v4376
      %v4378 = vpop.f32.mrf.mxu0
      %4379 = vmatprep.mubr.bf16.mxu0 0
      %4380 = vmatmul.mubr.bf16.gmra.mxu0 %v4239
      %v4381 = vpop.f32.mrf.mxu0
      %v4382 = vadd.f32 0.0, %v4381
      %v4383 = vpop.f32.mrf.mxu0
      %v4384 = vpop.f32.mrf.mxu0
      %v4385 = vadd.f32 0.0, %v4384
      %v4386 = vpop.f32.mrf.mxu0
      %4387 = vmatprep.mubr.bf16.mxu0 0
      %4388 = vmatmul.mubr.bf16.gmra.mxu0 %v4242
      %v4389 = vpop.f32.mrf.mxu0
      %v4390 = vadd.f32 0.0, %v4389
      %v4391 = vpop.f32.mrf.mxu0
      %v4392 = vpop.f32.mrf.mxu0
      %v4393 = vadd.f32 0.0, %v4392
      %v4394 = vpop.f32.mrf.mxu0
      %4395 = vmatprep.mubr.bf16.mxu0 0
      %4396 = vmatmul.mubr.bf16.gmra.mxu0 %v4245
      %v4397 = vpop.f32.mrf.mxu0
      %v4398 = vadd.f32 0.0, %v4397
      %v4399 = vpop.f32.mrf.mxu0
      %v4400 = vpop.f32.mrf.mxu0
      %v4401 = vadd.f32 0.0, %v4400
      %v4402 = vpop.f32.mrf.mxu0
      %4403 = vmatprep.mubr.bf16.mxu0 0
      %4404 = vmatmul.mubr.bf16.gmra.mxu0 %v4248
      %v4405 = vpop.f32.mrf.mxu0
      %v4406 = vadd.f32 0.0, %v4405
      %v4407 = vpop.f32.mrf.mxu0
      %v4408 = vpop.f32.mrf.mxu0
      %v4409 = vadd.f32 0.0, %v4408
      %v4410 = vpop.f32.mrf.mxu0
      %4411 = vmatprep.mubr.bf16.mxu0 0
      %4412 = vmatmul.mubr.bf16.gmra.mxu0 %v4251
      %v4413 = vpop.f32.mrf.mxu0
      %v4414 = vadd.f32 0.0, %v4413
      %v4415 = vpop.f32.mrf.mxu0
      %v4416 = vpop.f32.mrf.mxu0
      %v4417 = vadd.f32 0.0, %v4416
      %v4418 = vpop.f32.mrf.mxu0
      %4419 = vmatprep.mubr.bf16.mxu0 0
      %4420 = vmatmul.mubr.bf16.gmra.mxu0 %v4254
      %v4421 = vpop.f32.mrf.mxu0
      %v4422 = vadd.f32 0.0, %v4421
      %v4423 = vpop.f32.mrf.mxu0
      %v4424 = vpop.f32.mrf.mxu0
      %v4425 = vadd.f32 0.0, %v4424
      %v4426 = vpop.f32.mrf.mxu0
      %4427 = vmatprep.mubr.bf16.mxu0 0
      %4428 = vmatmul.mubr.bf16.gmra.mxu0 %v4257
      %v4429 = vpop.f32.mrf.mxu0
      %v4430 = vadd.f32 0.0, %v4429
      %v4431 = vpop.f32.mrf.mxu0
      %v4432 = vpop.f32.mrf.mxu0
      %v4433 = vadd.f32 0.0, %v4432
      %v4434 = vpop.f32.mrf.mxu0
      %4435 = vdwg.mxu0
      %v4436 = vadd.f32 %v3977, %v4294
      %v4437 = vadd.f32 %v3978, %v4297
      %v4438 = vadd.f32 %v3979, %v4302
      %v4439 = vadd.f32 %v3980, %v4305
      %v4440 = vadd.f32 %v3981, %v4310
      %v4441 = vadd.f32 %v3982, %v4313
      %v4442 = vadd.f32 %v3983, %v4318
      %v4443 = vadd.f32 %v3984, %v4321
      %v4444 = vadd.f32 %v3985, %v4326
      %v4445 = vadd.f32 %v3986, %v4329
      %v4446 = vadd.f32 %v3987, %v4334
      %v4447 = vadd.f32 %v3988, %v4337
      %v4448 = vadd.f32 %v3989, %v4342
      %v4449 = vadd.f32 %v3990, %v4345
      %v4450 = vadd.f32 %v3991, %v4350
      %v4451 = vadd.f32 %v3992, %v4353
      %v4452 = vadd.f32 %v3993, %v4358
      %v4453 = vadd.f32 %v3994, %v4361
      %v4454 = vadd.f32 %v3995, %v4366
      %v4455 = vadd.f32 %v3996, %v4369
      %v4456 = vadd.f32 %v3997, %v4374
      %v4457 = vadd.f32 %v3998, %v4377
      %v4458 = vadd.f32 %v3999, %v4382
      %v4459 = vadd.f32 %v4000, %v4385
      %v4460 = vadd.f32 %v4001, %v4390
      %v4461 = vadd.f32 %v4002, %v4393
      %v4462 = vadd.f32 %v4003, %v4398
      %v4463 = vadd.f32 %v4004, %v4401
      %v4464 = vadd.f32 %v4005, %v4406
      %v4465 = vadd.f32 %v4006, %v4409
      %v4466 = vadd.f32 %v4007, %v4414
      %v4467 = vadd.f32 %v4008, %v4417
      %v4468 = vadd.f32 %v4009, %v4422
      %v4469 = vadd.f32 %v4010, %v4425
      %v4470 = vadd.f32 %v4011, %v4430
      %v4471 = vadd.f32 %v4012, %v4433
      %v4472 = vld [vmem:[#allocation2 + $0x10] sm:$0x8]
      %s4473 = scalar_lea.vmem %s2, 128
      %v4474 = vld [vmem:[%s4473] sm:$0xf]
      %v4475 = vld [vmem:[%s4473 + $0x4] sm:$0xf]
      %v4476 = vld [vmem:[%s4473 + $0x8] sm:$0xf]
      %v4477 = vld [vmem:[%s4473 + $0xc] sm:$0xf]
      %v4479 = vunpack.c.l.b16 %v4472
      %v4480 = vpack.c.b16 %v3642, %v4479
      %vm4481 = vcmask 1044480
      %v4482 = vrot.slane %v4480, 3
      %v4483 = vrot.slane %v3679, 3
      %v4484 = vsel %vm4481, %v4482, %v4483
      %v4485 = vrot.slane %v3680, 3
      %v4486 = vsel %vm4481, %v4483, %v4485
      %v4487 = vrot.slane %v3681, 3
      %v4488 = vsel %vm4481, %v4485, %v4487
      %v4489 = vrot.slane %v3682, 3
      %v4490 = vsel %vm4481, %v4487, %v4489
      %v4491 = vrot.slane %v3683, 3
      %v4492 = vsel %vm4481, %v4489, %v4491
      %v4493 = vrot.slane %v3684, 3
      %v4494 = vsel %vm4481, %v4491, %v4493
      %v4495 = vrot.slane %v3685, 3
      %v4496 = vsel %vm4481, %v4493, %v4495
      %v4497 = vrot.slane %v3686, 3
      %v4498 = vsel %vm4481, %v4495, %v4497
      %v4499 = vrot.slane %v3687, 3
      %v4500 = vsel %vm4481, %v4497, %v4499
      %v4501 = vrot.slane %v3688, 3
      %v4502 = vsel %vm4481, %v4499, %v4501
      %v4503 = vrot.slane %v3689, 3
      %v4504 = vsel %vm4481, %v4501, %v4503
      %v4505 = vrot.slane %v3690, 3
      %v4506 = vsel %vm4481, %v4503, %v4505
      %v4507 = vrot.slane %v3691, 3
      %v4508 = vsel %vm4481, %v4505, %v4507
      %v4509 = vrot.slane %v3692, 3
      %v4510 = vsel %vm4481, %v4507, %v4509
      %v4511 = vrot.slane %v3693, 3
      %v4512 = vsel %vm4481, %v4509, %v4511
      %v4513 = vrot.slane %v3694, 3
      %v4514 = vsel %vm4481, %v4511, %v4513
      %v4515 = vrot.slane %v3695, 3
      %v4516 = vsel %vm4481, %v4513, %v4515
      %v4517 = vrot.slane %v4021, 3
      %v4518 = vsel %vm4481, %v4515, %v4517
      %v4523 = vunpack.c.l.b16 %v4474
      %v4524 = vunpack.c.l.b16 %v4475
      %v4525 = vunpack.c.l.b16 %v4476
      %v4526 = vunpack.c.l.b16 %v4477
      %v4527 = vpack.c.b16 %v4524, %v4523
      %v4528 = vpack.c.b16 %v4526, %v4525
      %v4532 = vsel %vm1543, %v4484, 0
      %v4535 = vsel %vm1543, %v4486, 0
      %v4538 = vsel %vm1543, %v4488, 0
      %v4541 = vsel %vm1543, %v4490, 0
      %v4544 = vsel %vm1543, %v4492, 0
      %v4547 = vsel %vm1543, %v4494, 0
      %v4550 = vsel %vm1543, %v4496, 0
      %v4553 = vsel %vm1543, %v4498, 0
      %v4556 = vsel %vm1543, %v4500, 0
      %v4559 = vsel %vm1543, %v4502, 0
      %v4562 = vsel %vm1543, %v4504, 0
      %v4565 = vsel %vm1543, %v4506, 0
      %v4568 = vsel %vm1543, %v4508, 0
      %v4571 = vsel %vm1543, %v4510, 0
      %v4574 = vsel %vm1543, %v4512, 0
      %v4577 = vsel %vm1543, %v4514, 0
      %v4580 = vsel %vm1543, %v4516, 0
      %v4583 = vsel %vm1543, %v4518, 0
      %4585 = vmatprep.subr.bf16.mxu0 0
      %4586 = vmatpush1.bf16.msra.mxu0 0
      %4587 = vmatprep.subr.bf16.mxu0 0
      %4588 = vmatpush1.bf16.msra.mxu0 0
      %4589 = vmatprep.subr.bf16.mxu0 0
      %4590 = vmatpush1.bf16.msra.mxu0 0
      %4591 = vmatprep.subr.bf16.mxu0 0
      %4592 = vmatpush1.bf16.msra.mxu0 0
      %4593 = vmatprep.subr.bf16.mxu0 0
      %4594 = vmatpush1.bf16.msra.mxu0 0
      %4595 = vmatprep.subr.bf16.mxu0 0
      %4596 = vmatpush1.bf16.msra.mxu0 0
      %4597 = vmatprep.subr.bf16.mxu0 0
      %4598 = vmatpush1.bf16.msra.mxu0 %v4528
      %4599 = vmatprep.subr.bf16.mxu0 0
      %4600 = vmatpush1.bf16.msra.mxu0 %v4527
      %4601 = vmatprep.subr.bf16.mxu0 0
      %4602 = vmatpush2.bf16.msra.mxu0 0
      %4603 = vmatprep.subr.bf16.mxu0 0
      %4604 = vmatpush2.bf16.msra.mxu0 0
      %4605 = vmatprep.subr.bf16.mxu0 0
      %4606 = vmatpush2.bf16.msra.mxu0 0
      %4607 = vmatprep.subr.bf16.mxu0 0
      %4608 = vmatpush2.bf16.msra.mxu0 0
      %4609 = vmatprep.subr.bf16.mxu0 0
      %4610 = vmatpush2.bf16.msra.mxu0 0
      %4611 = vmatprep.subr.bf16.mxu0 0
      %4612 = vmatpush2.bf16.msra.mxu0 0
      %4613 = vmatprep.subr.bf16.mxu0 0
      %4614 = vmatpush2.bf16.msra.mxu0 0
      %4615 = vmatprep.subr.bf16.mxu0 0
      %4616 = vmatpush2.bf16.msra.mxu0 0
      %4617 = vmatprep.mubr.bf16.mxu0 0
      %4618 = vmatmul.mubr.bf16.gmra.mxu0 %v4532
      %v4619 = vpop.f32.mrf.mxu0
      %v4620 = vadd.f32 0.0, %v4619
      %v4621 = vpop.f32.mrf.mxu0
      %v4622 = vpop.f32.mrf.mxu0
      %v4623 = vadd.f32 0.0, %v4622
      %v4624 = vpop.f32.mrf.mxu0
      %4625 = vmatprep.mubr.bf16.mxu0 0
      %4626 = vmatmul.mubr.bf16.gmra.mxu0 %v4535
      %v4627 = vpop.f32.mrf.mxu0
      %v4628 = vadd.f32 0.0, %v4627
      %v4629 = vpop.f32.mrf.mxu0
      %v4630 = vpop.f32.mrf.mxu0
      %v4631 = vadd.f32 0.0, %v4630
      %v4632 = vpop.f32.mrf.mxu0
      %4633 = vmatprep.mubr.bf16.mxu0 0
      %4634 = vmatmul.mubr.bf16.gmra.mxu0 %v4538
      %v4635 = vpop.f32.mrf.mxu0
      %v4636 = vadd.f32 0.0, %v4635
      %v4637 = vpop.f32.mrf.mxu0
      %v4638 = vpop.f32.mrf.mxu0
      %v4639 = vadd.f32 0.0, %v4638
      %v4640 = vpop.f32.mrf.mxu0
      %4641 = vmatprep.mubr.bf16.mxu0 0
      %4642 = vmatmul.mubr.bf16.gmra.mxu0 %v4541
      %v4643 = vpop.f32.mrf.mxu0
      %v4644 = vadd.f32 0.0, %v4643
      %v4645 = vpop.f32.mrf.mxu0
      %v4646 = vpop.f32.mrf.mxu0
      %v4647 = vadd.f32 0.0, %v4646
      %v4648 = vpop.f32.mrf.mxu0
      %4649 = vmatprep.mubr.bf16.mxu0 0
      %4650 = vmatmul.mubr.bf16.gmra.mxu0 %v4544
      %v4651 = vpop.f32.mrf.mxu0
      %v4652 = vadd.f32 0.0, %v4651
      %v4653 = vpop.f32.mrf.mxu0
      %v4654 = vpop.f32.mrf.mxu0
      %v4655 = vadd.f32 0.0, %v4654
      %v4656 = vpop.f32.mrf.mxu0
      %4657 = vmatprep.mubr.bf16.mxu0 0
      %4658 = vmatmul.mubr.bf16.gmra.mxu0 %v4547
      %v4659 = vpop.f32.mrf.mxu0
      %v4660 = vadd.f32 0.0, %v4659
      %v4661 = vpop.f32.mrf.mxu0
      %v4662 = vpop.f32.mrf.mxu0
      %v4663 = vadd.f32 0.0, %v4662
      %v4664 = vpop.f32.mrf.mxu0
      %4665 = vmatprep.mubr.bf16.mxu0 0
      %4666 = vmatmul.mubr.bf16.gmra.mxu0 %v4550
      %v4667 = vpop.f32.mrf.mxu0
      %v4668 = vadd.f32 0.0, %v4667
      %v4669 = vpop.f32.mrf.mxu0
      %v4670 = vpop.f32.mrf.mxu0
      %v4671 = vadd.f32 0.0, %v4670
      %v4672 = vpop.f32.mrf.mxu0
      %4673 = vmatprep.mubr.bf16.mxu0 0
      %4674 = vmatmul.mubr.bf16.gmra.mxu0 %v4553
      %v4675 = vpop.f32.mrf.mxu0
      %v4676 = vadd.f32 0.0, %v4675
      %v4677 = vpop.f32.mrf.mxu0
      %v4678 = vpop.f32.mrf.mxu0
      %v4679 = vadd.f32 0.0, %v4678
      %v4680 = vpop.f32.mrf.mxu0
      %4681 = vmatprep.mubr.bf16.mxu0 0
      %4682 = vmatmul.mubr.bf16.gmra.mxu0 %v4556
      %v4683 = vpop.f32.mrf.mxu0
      %v4684 = vadd.f32 0.0, %v4683
      %v4685 = vpop.f32.mrf.mxu0
      %v4686 = vpop.f32.mrf.mxu0
      %v4687 = vadd.f32 0.0, %v4686
      %v4688 = vpop.f32.mrf.mxu0
      %4689 = vmatprep.mubr.bf16.mxu0 0
      %4690 = vmatmul.mubr.bf16.gmra.mxu0 %v4559
      %v4691 = vpop.f32.mrf.mxu0
      %v4692 = vadd.f32 0.0, %v4691
      %v4693 = vpop.f32.mrf.mxu0
      %v4694 = vpop.f32.mrf.mxu0
      %v4695 = vadd.f32 0.0, %v4694
      %v4696 = vpop.f32.mrf.mxu0
      %4697 = vmatprep.mubr.bf16.mxu0 0
      %4698 = vmatmul.mubr.bf16.gmra.mxu0 %v4562
      %v4699 = vpop.f32.mrf.mxu0
      %v4700 = vadd.f32 0.0, %v4699
      %v4701 = vpop.f32.mrf.mxu0
      %v4702 = vpop.f32.mrf.mxu0
      %v4703 = vadd.f32 0.0, %v4702
      %v4704 = vpop.f32.mrf.mxu0
      %4705 = vmatprep.mubr.bf16.mxu0 0
      %4706 = vmatmul.mubr.bf16.gmra.mxu0 %v4565
      %v4707 = vpop.f32.mrf.mxu0
      %v4708 = vadd.f32 0.0, %v4707
      %v4709 = vpop.f32.mrf.mxu0
      %v4710 = vpop.f32.mrf.mxu0
      %v4711 = vadd.f32 0.0, %v4710
      %v4712 = vpop.f32.mrf.mxu0
      %4713 = vmatprep.mubr.bf16.mxu0 0
      %4714 = vmatmul.mubr.bf16.gmra.mxu0 %v4568
      %v4715 = vpop.f32.mrf.mxu0
      %v4716 = vadd.f32 0.0, %v4715
      %v4717 = vpop.f32.mrf.mxu0
      %v4718 = vpop.f32.mrf.mxu0
      %v4719 = vadd.f32 0.0, %v4718
      %v4720 = vpop.f32.mrf.mxu0
      %4721 = vmatprep.mubr.bf16.mxu0 0
      %4722 = vmatmul.mubr.bf16.gmra.mxu0 %v4571
      %v4723 = vpop.f32.mrf.mxu0
      %v4724 = vadd.f32 0.0, %v4723
      %v4725 = vpop.f32.mrf.mxu0
      %v4726 = vpop.f32.mrf.mxu0
      %v4727 = vadd.f32 0.0, %v4726
      %v4728 = vpop.f32.mrf.mxu0
      %4729 = vmatprep.mubr.bf16.mxu0 0
      %4730 = vmatmul.mubr.bf16.gmra.mxu0 %v4574
      %v4731 = vpop.f32.mrf.mxu0
      %v4732 = vadd.f32 0.0, %v4731
      %v4733 = vpop.f32.mrf.mxu0
      %v4734 = vpop.f32.mrf.mxu0
      %v4735 = vadd.f32 0.0, %v4734
      %v4736 = vpop.f32.mrf.mxu0
      %4737 = vmatprep.mubr.bf16.mxu0 0
      %4738 = vmatmul.mubr.bf16.gmra.mxu0 %v4577
      %v4739 = vpop.f32.mrf.mxu0
      %v4740 = vadd.f32 0.0, %v4739
      %v4741 = vpop.f32.mrf.mxu0
      %v4742 = vpop.f32.mrf.mxu0
      %v4743 = vadd.f32 0.0, %v4742
      %v4744 = vpop.f32.mrf.mxu0
      %4745 = vmatprep.mubr.bf16.mxu0 0
      %4746 = vmatmul.mubr.bf16.gmra.mxu0 %v4580
      %v4747 = vpop.f32.mrf.mxu0
      %v4748 = vadd.f32 0.0, %v4747
      %v4749 = vpop.f32.mrf.mxu0
      %v4750 = vpop.f32.mrf.mxu0
      %v4751 = vadd.f32 0.0, %v4750
      %v4752 = vpop.f32.mrf.mxu0
      %4753 = vmatprep.mubr.bf16.mxu0 0
      %4754 = vmatmul.mubr.bf16.gmra.mxu0 %v4583
      %v4755 = vpop.f32.mrf.mxu0
      %v4756 = vadd.f32 0.0, %v4755
      %v4757 = vpop.f32.mrf.mxu0
      %v4758 = vpop.f32.mrf.mxu0
      %v4759 = vadd.f32 0.0, %v4758
      %v4760 = vpop.f32.mrf.mxu0
      %4761 = vdwg.mxu0
      %v4762 = vadd.f32 %v4436, %v4620
      %v4763 = vadd.f32 %v4437, %v4623
      %v4764 = vadd.f32 %v4438, %v4628
      %v4765 = vadd.f32 %v4439, %v4631
      %v4766 = vadd.f32 %v4440, %v4636
      %v4767 = vadd.f32 %v4441, %v4639
      %v4768 = vadd.f32 %v4442, %v4644
      %v4769 = vadd.f32 %v4443, %v4647
      %v4770 = vadd.f32 %v4444, %v4652
      %v4771 = vadd.f32 %v4445, %v4655
      %v4772 = vadd.f32 %v4446, %v4660
      %v4773 = vadd.f32 %v4447, %v4663
      %v4774 = vadd.f32 %v4448, %v4668
      %v4775 = vadd.f32 %v4449, %v4671
      %v4776 = vadd.f32 %v4450, %v4676
      %v4777 = vadd.f32 %v4451, %v4679
      %v4778 = vadd.f32 %v4452, %v4684
      %v4779 = vadd.f32 %v4453, %v4687
      %v4780 = vadd.f32 %v4454, %v4692
      %v4781 = vadd.f32 %v4455, %v4695
      %v4782 = vadd.f32 %v4456, %v4700
      %v4783 = vadd.f32 %v4457, %v4703
      %v4784 = vadd.f32 %v4458, %v4708
      %v4785 = vadd.f32 %v4459, %v4711
      %v4786 = vadd.f32 %v4460, %v4716
      %v4787 = vadd.f32 %v4461, %v4719
      %v4788 = vadd.f32 %v4462, %v4724
      %v4789 = vadd.f32 %v4463, %v4727
      %v4790 = vadd.f32 %v4464, %v4732
      %v4791 = vadd.f32 %v4465, %v4735
      %v4792 = vadd.f32 %v4466, %v4740
      %v4793 = vadd.f32 %v4467, %v4743
      %v4794 = vadd.f32 %v4468, %v4748
      %v4795 = vadd.f32 %v4469, %v4751
      %v4796 = vadd.f32 %v4470, %v4756
      %v4797 = vadd.f32 %v4471, %v4759
      %v4798 = vld [vmem:[%s3] sm:$0xff]
      %v4799 = vld [vmem:[%s3 + $0x8] sm:$0xff]
      %v4800 = vld [vmem:[%s3 + $0x10] sm:$0xff]
      %v4801 = vld [vmem:[%s3 + $0x18] sm:$0xff]
      %v4802 = vld [vmem:[%s3 + $0x20] sm:$0xff]
      %v4803 = vld [vmem:[%s3 + $0x28] sm:$0xff]
      %v4804 = vld [vmem:[%s3 + $0x30] sm:$0xff]
      %v4805 = vld [vmem:[%s3 + $0x38] sm:$0xff]
      %v4806 = vld [vmem:[%s3 + $0x40] sm:$0xff]
      %v4807 = vld [vmem:[%s3 + $0x48] sm:$0xff]
      %v4808 = vld [vmem:[%s3 + $0x50] sm:$0xff]
      %v4809 = vld [vmem:[%s3 + $0x58] sm:$0xff]
      %v4810 = vld [vmem:[%s3 + $0x60] sm:$0xff]
      %v4811 = vld [vmem:[%s3 + $0x68] sm:$0xff]
      %v4812 = vld [vmem:[%s3 + $0x70] sm:$0xff]
      %v4813 = vld [vmem:[%s3 + $0x78] sm:$0xff]
      %v4814 = vld [vmem:[%s3 + $0x80] sm:$0xff]
      %v4815 = vld [vmem:[%s3 + $0x88] sm:$0xff]
      %v4816 = vld [vmem:[%s3 + $0x90] sm:$0xff]
      %v4817 = vld [vmem:[%s3 + $0x98] sm:$0xff]
      %v4818 = vld [vmem:[%s3 + $0xa0] sm:$0xff]
      %v4819 = vld [vmem:[%s3 + $0xa8] sm:$0xff]
      %v4820 = vld [vmem:[%s3 + $0xb0] sm:$0xff]
      %v4821 = vld [vmem:[%s3 + $0xb8] sm:$0xff]
      %v4822 = vld [vmem:[%s3 + $0xc0] sm:$0xff]
      %v4823 = vld [vmem:[%s3 + $0xc8] sm:$0xff]
      %v4824 = vld [vmem:[%s3 + $0xd0] sm:$0xff]
      %v4825 = vld [vmem:[%s3 + $0xd8] sm:$0xff]
      %v4826 = vld [vmem:[%s3 + $0xe0] sm:$0xff]
      %v4827 = vld [vmem:[%s3 + $0xe8] sm:$0xff]
      %v4828 = vld [vmem:[%s3 + $0xf0] sm:$0xff]
      %v4829 = vld [vmem:[%s3 + $0xf8] sm:$0xff]
      %v4830 = vld [vmem:[%s3 + $0x100] sm:$0xff]
      %v4831 = vld [vmem:[%s3 + $0x108] sm:$0xff]
      %v4832 = vld [vmem:[%s3 + $0x110] sm:$0xff]
      %v4833 = vld [vmem:[%s3 + $0x118] sm:$0xff]
      %4835 = vset.pattern.permute.xlu0 0
      %4836 = vperm.xlu0 %4835, %v4798
      %v4837 = vpop.permute.xlu0 %4836
      %4840 = vset.pattern.permute.xlu0 0
      %4841 = vperm.xlu0 %4840, %v4799
      %v4842 = vpop.permute.xlu0 %4841
      %4845 = vset.pattern.permute.xlu0 0
      %4846 = vperm.xlu0 %4845, %v4800
      %v4847 = vpop.permute.xlu0 %4846
      %4850 = vset.pattern.permute.xlu0 0
      %4851 = vperm.xlu0 %4850, %v4801
      %v4852 = vpop.permute.xlu0 %4851
      %4855 = vset.pattern.permute.xlu0 0
      %4856 = vperm.xlu0 %4855, %v4802
      %v4857 = vpop.permute.xlu0 %4856
      %4860 = vset.pattern.permute.xlu0 0
      %4861 = vperm.xlu0 %4860, %v4803
      %v4862 = vpop.permute.xlu0 %4861
      %4865 = vset.pattern.permute.xlu0 0
      %4866 = vperm.xlu0 %4865, %v4804
      %v4867 = vpop.permute.xlu0 %4866
      %4870 = vset.pattern.permute.xlu0 0
      %4871 = vperm.xlu0 %4870, %v4805
      %v4872 = vpop.permute.xlu0 %4871
      %4875 = vset.pattern.permute.xlu0 0
      %4876 = vperm.xlu0 %4875, %v4806
      %v4877 = vpop.permute.xlu0 %4876
      %4880 = vset.pattern.permute.xlu0 0
      %4881 = vperm.xlu0 %4880, %v4807
      %v4882 = vpop.permute.xlu0 %4881
      %4885 = vset.pattern.permute.xlu0 0
      %4886 = vperm.xlu0 %4885, %v4808
      %v4887 = vpop.permute.xlu0 %4886
      %4890 = vset.pattern.permute.xlu0 0
      %4891 = vperm.xlu0 %4890, %v4809
      %v4892 = vpop.permute.xlu0 %4891
      %4895 = vset.pattern.permute.xlu0 0
      %4896 = vperm.xlu0 %4895, %v4810
      %v4897 = vpop.permute.xlu0 %4896
      %4900 = vset.pattern.permute.xlu0 0
      %4901 = vperm.xlu0 %4900, %v4811
      %v4902 = vpop.permute.xlu0 %4901
      %4905 = vset.pattern.permute.xlu0 0
      %4906 = vperm.xlu0 %4905, %v4812
      %v4907 = vpop.permute.xlu0 %4906
      %4910 = vset.pattern.permute.xlu0 0
      %4911 = vperm.xlu0 %4910, %v4813
      %v4912 = vpop.permute.xlu0 %4911
      %4915 = vset.pattern.permute.xlu0 0
      %4916 = vperm.xlu0 %4915, %v4814
      %v4917 = vpop.permute.xlu0 %4916
      %4920 = vset.pattern.permute.xlu0 0
      %4921 = vperm.xlu0 %4920, %v4815
      %v4922 = vpop.permute.xlu0 %4921
      %4925 = vset.pattern.permute.xlu0 0
      %4926 = vperm.xlu0 %4925, %v4816
      %v4927 = vpop.permute.xlu0 %4926
      %4930 = vset.pattern.permute.xlu0 0
      %4931 = vperm.xlu0 %4930, %v4817
      %v4932 = vpop.permute.xlu0 %4931
      %4935 = vset.pattern.permute.xlu0 0
      %4936 = vperm.xlu0 %4935, %v4818
      %v4937 = vpop.permute.xlu0 %4936
      %4940 = vset.pattern.permute.xlu0 0
      %4941 = vperm.xlu0 %4940, %v4819
      %v4942 = vpop.permute.xlu0 %4941
      %4945 = vset.pattern.permute.xlu0 0
      %4946 = vperm.xlu0 %4945, %v4820
      %v4947 = vpop.permute.xlu0 %4946
      %4950 = vset.pattern.permute.xlu0 0
      %4951 = vperm.xlu0 %4950, %v4821
      %v4952 = vpop.permute.xlu0 %4951
      %4955 = vset.pattern.permute.xlu0 0
      %4956 = vperm.xlu0 %4955, %v4822
      %v4957 = vpop.permute.xlu0 %4956
      %4960 = vset.pattern.permute.xlu0 0
      %4961 = vperm.xlu0 %4960, %v4823
      %v4962 = vpop.permute.xlu0 %4961
      %4965 = vset.pattern.permute.xlu0 0
      %4966 = vperm.xlu0 %4965, %v4824
      %v4967 = vpop.permute.xlu0 %4966
      %4970 = vset.pattern.permute.xlu0 0
      %4971 = vperm.xlu0 %4970, %v4825
      %v4972 = vpop.permute.xlu0 %4971
      %4975 = vset.pattern.permute.xlu0 0
      %4976 = vperm.xlu0 %4975, %v4826
      %v4977 = vpop.permute.xlu0 %4976
      %4980 = vset.pattern.permute.xlu0 0
      %4981 = vperm.xlu0 %4980, %v4827
      %v4982 = vpop.permute.xlu0 %4981
      %4985 = vset.pattern.permute.xlu0 0
      %4986 = vperm.xlu0 %4985, %v4828
      %v4987 = vpop.permute.xlu0 %4986
      %4990 = vset.pattern.permute.xlu0 0
      %4991 = vperm.xlu0 %4990, %v4829
      %v4992 = vpop.permute.xlu0 %4991
      %4995 = vset.pattern.permute.xlu0 0
      %4996 = vperm.xlu0 %4995, %v4830
      %v4997 = vpop.permute.xlu0 %4996
      %5000 = vset.pattern.permute.xlu0 0
      %5001 = vperm.xlu0 %5000, %v4831
      %v5002 = vpop.permute.xlu0 %5001
      %5005 = vset.pattern.permute.xlu0 0
      %5006 = vperm.xlu0 %5005, %v4832
      %v5007 = vpop.permute.xlu0 %5006
      %5010 = vset.pattern.permute.xlu0 0
      %5011 = vperm.xlu0 %5010, %v4833
      %v5012 = vpop.permute.xlu0 %5011
      %v5014 = vmul.f32 %v4762, %v4837
      %v5015 = vmul.f32 %v4763, %v4842
      %v5016 = vmul.f32 %v4764, %v4847
      %v5017 = vmul.f32 %v4765, %v4852
      %v5018 = vmul.f32 %v4766, %v4857
      %v5019 = vmul.f32 %v4767, %v4862
      %v5020 = vmul.f32 %v4768, %v4867
      %v5021 = vmul.f32 %v4769, %v4872
      %v5022 = vmul.f32 %v4770, %v4877
      %v5023 = vmul.f32 %v4771, %v4882
      %v5024 = vmul.f32 %v4772, %v4887
      %v5025 = vmul.f32 %v4773, %v4892
      %v5026 = vmul.f32 %v4774, %v4897
      %v5027 = vmul.f32 %v4775, %v4902
      %v5028 = vmul.f32 %v4776, %v4907
      %v5029 = vmul.f32 %v4777, %v4912
      %v5030 = vmul.f32 %v4778, %v4917
      %v5031 = vmul.f32 %v4779, %v4922
      %v5032 = vmul.f32 %v4780, %v4927
      %v5033 = vmul.f32 %v4781, %v4932
      %v5034 = vmul.f32 %v4782, %v4937
      %v5035 = vmul.f32 %v4783, %v4942
      %v5036 = vmul.f32 %v4784, %v4947
      %v5037 = vmul.f32 %v4785, %v4952
      %v5038 = vmul.f32 %v4786, %v4957
      %v5039 = vmul.f32 %v4787, %v4962
      %v5040 = vmul.f32 %v4788, %v4967
      %v5041 = vmul.f32 %v4789, %v4972
      %v5042 = vmul.f32 %v4790, %v4977
      %v5043 = vmul.f32 %v4791, %v4982
      %v5044 = vmul.f32 %v4792, %v4987
      %v5045 = vmul.f32 %v4793, %v4992
      %v5046 = vmul.f32 %v4794, %v4997
      %v5047 = vmul.f32 %v4795, %v5002
      %v5048 = vmul.f32 %v4796, %v5007
      %v5049 = vmul.f32 %v4797, %v5012
      %v5050 = vpack.c.bf16 %v5015, %v5014
      %v5051 = vpack.c.bf16 %v5017, %v5016
      %v5052 = vpack.c.bf16 %v5019, %v5018
      %v5053 = vpack.c.bf16 %v5021, %v5020
      %v5054 = vpack.c.bf16 %v5023, %v5022
      %v5055 = vpack.c.bf16 %v5025, %v5024
      %v5056 = vpack.c.bf16 %v5027, %v5026
      %v5057 = vpack.c.bf16 %v5029, %v5028
      %v5058 = vpack.c.bf16 %v5031, %v5030
      %v5059 = vpack.c.bf16 %v5033, %v5032
      %v5060 = vpack.c.bf16 %v5035, %v5034
      %v5061 = vpack.c.bf16 %v5037, %v5036
      %v5062 = vpack.c.bf16 %v5039, %v5038
      %v5063 = vpack.c.bf16 %v5041, %v5040
      %v5064 = vpack.c.bf16 %v5043, %v5042
      %v5065 = vpack.c.bf16 %v5045, %v5044
      %v5066 = vpack.c.bf16 %v5047, %v5046
      %v5067 = vpack.c.bf16 %v5049, %v5048
      %v5086 = vunpack.c.l.b16 %v5050
      %v5087 = vunpack.c.h.b16 %v5050
      %v5088 = vunpack.c.l.b16 %v5051
      %v5089 = vunpack.c.h.b16 %v5051
      %v5090 = vunpack.c.l.b16 %v5052
      %v5091 = vunpack.c.h.b16 %v5052
      %v5092 = vunpack.c.l.b16 %v5053
      %v5093 = vunpack.c.h.b16 %v5053
      %v5094 = vunpack.c.l.b16 %v5054
      %v5095 = vunpack.c.h.b16 %v5054
      %v5096 = vunpack.c.l.b16 %v5055
      %v5097 = vunpack.c.h.b16 %v5055
      %v5098 = vunpack.c.l.b16 %v5056
      %v5099 = vunpack.c.h.b16 %v5056
      %v5100 = vunpack.c.l.b16 %v5057
      %v5101 = vunpack.c.h.b16 %v5057
      %v5102 = vunpack.c.l.b16 %v5058
      %v5103 = vunpack.c.h.b16 %v5058
      %v5104 = vunpack.c.l.b16 %v5059
      %v5105 = vunpack.c.h.b16 %v5059
      %v5106 = vunpack.c.l.b16 %v5060
      %v5107 = vunpack.c.h.b16 %v5060
      %v5108 = vunpack.c.l.b16 %v5061
      %v5109 = vunpack.c.h.b16 %v5061
      %v5110 = vunpack.c.l.b16 %v5062
      %v5111 = vunpack.c.h.b16 %v5062
      %v5112 = vunpack.c.l.b16 %v5063
      %v5113 = vunpack.c.h.b16 %v5063
      %v5114 = vunpack.c.l.b16 %v5064
      %v5115 = vunpack.c.h.b16 %v5064
      %v5116 = vunpack.c.l.b16 %v5065
      %v5117 = vunpack.c.h.b16 %v5065
      %v5118 = vunpack.c.l.b16 %v5066
      %v5119 = vunpack.c.h.b16 %v5066
      %v5120 = vunpack.c.l.b16 %v5067
      %v5121 = vunpack.c.h.b16 %v5067
      %v5122 = vpack.c.b16 %v5086, %v5086
      %v5123 = vpack.c.b16 %v5087, %v5087
      %v5124 = vpack.c.b16 %v5088, %v5088
      %v5125 = vpack.c.b16 %v5089, %v5089
      %v5126 = vpack.c.b16 %v5090, %v5090
      %v5127 = vpack.c.b16 %v5091, %v5091
      %v5128 = vpack.c.b16 %v5092, %v5092
      %v5129 = vpack.c.b16 %v5093, %v5093
      %v5130 = vpack.c.b16 %v5094, %v5094
      %v5131 = vpack.c.b16 %v5095, %v5095
      %v5132 = vpack.c.b16 %v5096, %v5096
      %v5133 = vpack.c.b16 %v5097, %v5097
      %v5134 = vpack.c.b16 %v5098, %v5098
      %v5135 = vpack.c.b16 %v5099, %v5099
      %v5136 = vpack.c.b16 %v5100, %v5100
      %v5137 = vpack.c.b16 %v5101, %v5101
      %v5138 = vpack.c.b16 %v5102, %v5102
      %v5139 = vpack.c.b16 %v5103, %v5103
      %v5140 = vpack.c.b16 %v5104, %v5104
      %v5141 = vpack.c.b16 %v5105, %v5105
      %v5142 = vpack.c.b16 %v5106, %v5106
      %v5143 = vpack.c.b16 %v5107, %v5107
      %v5144 = vpack.c.b16 %v5108, %v5108
      %v5145 = vpack.c.b16 %v5109, %v5109
      %v5146 = vpack.c.b16 %v5110, %v5110
      %v5147 = vpack.c.b16 %v5111, %v5111
      %v5148 = vpack.c.b16 %v5112, %v5112
      %v5149 = vpack.c.b16 %v5113, %v5113
      %v5150 = vpack.c.b16 %v5114, %v5114
      %v5151 = vpack.c.b16 %v5115, %v5115
      %v5152 = vpack.c.b16 %v5116, %v5116
      %v5153 = vpack.c.b16 %v5117, %v5117
      %v5154 = vpack.c.b16 %v5118, %v5118
      %v5155 = vpack.c.b16 %v5119, %v5119
      %v5156 = vpack.c.b16 %v5120, %v5120
      %v5157 = vpack.c.b16 %v5121, %v5121
      %vm5194 = vcmask 60416
      %5195 = vst.msk [vmem:[%s197] sm:$0xf] %vm5194, %v5122
      %5196 = vst.msk [vmem:[%s197 + $0x4] sm:$0xf] %vm5194, %v5123
      %5197 = vst.msk [vmem:[%s197 + $0x8] sm:$0xf] %vm5194, %v5124
      %5198 = vst.msk [vmem:[%s197 + $0xc] sm:$0xf] %vm5194, %v5125
      %5199 = vst.msk [vmem:[%s197 + $0x10] sm:$0xf] %vm5194, %v5126
      %5200 = vst.msk [vmem:[%s197 + $0x14] sm:$0xf] %vm5194, %v5127
      %5201 = vst.msk [vmem:[%s197 + $0x18] sm:$0xf] %vm5194, %v5128
      %5202 = vst.msk [vmem:[%s197 + $0x1c] sm:$0xf] %vm5194, %v5129
      %5203 = vst.msk [vmem:[%s197 + $0x20] sm:$0xf] %vm5194, %v5130
      %5204 = vst.msk [vmem:[%s197 + $0x24] sm:$0xf] %vm5194, %v5131
      %5205 = vst.msk [vmem:[%s197 + $0x28] sm:$0xf] %vm5194, %v5132
      %5206 = vst.msk [vmem:[%s197 + $0x2c] sm:$0xf] %vm5194, %v5133
      %5207 = vst.msk [vmem:[%s197 + $0x30] sm:$0xf] %vm5194, %v5134
      %5208 = vst.msk [vmem:[%s197 + $0x34] sm:$0xf] %vm5194, %v5135
      %5209 = vst.msk [vmem:[%s197 + $0x38] sm:$0xf] %vm5194, %v5136
      %5210 = vst.msk [vmem:[%s197 + $0x3c] sm:$0xf] %vm5194, %v5137
      %5211 = vst.msk [vmem:[%s197 + $0x40] sm:$0xf] %vm5194, %v5138
      %5212 = vst.msk [vmem:[%s197 + $0x44] sm:$0xf] %vm5194, %v5139
      %5213 = vst.msk [vmem:[%s197 + $0x48] sm:$0xf] %vm5194, %v5140
      %5214 = vst.msk [vmem:[%s197 + $0x4c] sm:$0xf] %vm5194, %v5141
      %5215 = vst.msk [vmem:[%s197 + $0x50] sm:$0xf] %vm5194, %v5142
      %5216 = vst.msk [vmem:[%s197 + $0x54] sm:$0xf] %vm5194, %v5143
      %5217 = vst.msk [vmem:[%s197 + $0x58] sm:$0xf] %vm5194, %v5144
      %5218 = vst.msk [vmem:[%s197 + $0x5c] sm:$0xf] %vm5194, %v5145
      %5219 = vst.msk [vmem:[%s197 + $0x60] sm:$0xf] %vm5194, %v5146
      %5220 = vst.msk [vmem:[%s197 + $0x64] sm:$0xf] %vm5194, %v5147
      %5221 = vst.msk [vmem:[%s197 + $0x68] sm:$0xf] %vm5194, %v5148
      %5222 = vst.msk [vmem:[%s197 + $0x6c] sm:$0xf] %vm5194, %v5149
      %5223 = vst.msk [vmem:[%s197 + $0x70] sm:$0xf] %vm5194, %v5150
      %5224 = vst.msk [vmem:[%s197 + $0x74] sm:$0xf] %vm5194, %v5151
      %5225 = vst.msk [vmem:[%s197 + $0x78] sm:$0xf] %vm5194, %v5152
      %5226 = vst.msk [vmem:[%s197 + $0x7c] sm:$0xf] %vm5194, %v5153
      %5227 = vst.msk [vmem:[%s197 + $0x80] sm:$0xf] %vm5194, %v5154
      %5228 = vst.msk [vmem:[%s197 + $0x84] sm:$0xf] %vm5194, %v5155
      %5229 = vst.msk [vmem:[%s197 + $0x88] sm:$0xf] %vm5194, %v5156
      %5230 = vst.msk [vmem:[%s197 + $0x8c] sm:$0xf] %vm5194, %v5157
      %p5231 = scmp.lt.s32.totalorder %s15, 1
      %s5232 = scalar_select %p5231, %s15, 1
      %s5233 = smul.addr %s5232, 36
      %s5234 = smul.addr %s5233, 4
      %s5235 = scalar_lea.vmem %s4, %s5234
      // Predicated region
      $region37: #{dense_block_forward.3} parent=35 // pred_check
        %p5236 = pneg %p122
      $region38: #{dense_block_forward.3} parent=35 // pred_check_branch
        %5238 = sbr.rel (%p5236) target = $region40
      $region39: #{dense_block_forward.3} parent=35 // pred_region
        _
      $region40: #{dense_block_forward.3} parent=35 // pred_fallthru
        _
    $region36: #{dense_block_forward.3} parent=5 // pred_fallthru
      _
    %p5239 = scmp.le.s32.totalorder 2, %s10
    // Predicated region
    $region41: #{dense_block_forward.3} parent=5 // pred_check
      %p5240 = pneg %p5239
    $region42: #{dense_block_forward.3} parent=5 // pred_check_branch
      %5242 = sbr.rel (%p5240) target = $region44
    $region43: #{dense_block_forward.3} parent=5 // pred_region
      %s5243 = ssub.s32 %s10, 2
      // Predicated region
      $region45: #{dense_block_forward.3} parent=43 // pred_check
        %p5244 = pneg %p128
      $region46: #{dense_block_forward.3} parent=43 // pred_check_branch
        %5246 = sbr.rel (%p5244) target = $region48
      $region47: #{dense_block_forward.3} parent=43 // pred_region
        %p5247 = scmp.lt.s32.totalorder %s16, 1
        %s5248 = scalar_select %p5247, %s16, 1
        %s5249 = smul.addr %s5248, 36
        %s5250 = smul.addr %s5249, 4
        %s5251 = scalar_lea.vmem %s4, %s5250
      $region48: #{dense_block_forward.3} parent=43 // pred_fallthru
        _
    $region44: #{dense_block_forward.3} parent=5 // pred_fallthru
      _
  $region6: #{dense_block_forward.3} parent=0 // loop_footer
    %s14 = sadd.s32 1, %s10
  $region7: #{dense_block_forward.3} parent=0 // loop_footer_branch
    %9 = sbr.rel target = $region3
  $region8: #{dense_block_forward.3} parent=0 // loop_exit
    _

</llo_original>
